<compile_context>
chip_gen: v5e
topology: v5e:2x2
jax: 0.10.0
libtpu: 0.0.40
codegen_flags: <defaults>
</compile_context>

<pallas_src>
import jax
import jax.numpy as jnp
from jax.experimental import pallas as pl
from jax.experimental.pallas import tpu as pltpu

# ----------------------------- small config ---------------------------------
B = 2            # batch
SEQ = 8          # sequence length (plays the role of 100 in the original)
EMB = 16         # params['nuc_embedding_outputdim']  (orig 128)
C = 32           # params['conv1d_filters_num'] == ResidualBlock channels (orig 512)
K1 = 7           # params['conv1d_filters_size']
PAD1 = (K1 - 1) // 2
RES_K = 27       # ResidualBlock kernel size
RES_PAD = 13     # ResidualBlock padding
N_RES = 20       # residual blocks per branch
MLP_LAYERS = 40  # MLP hidden_layer_num
N_HIDDEN = MLP_LAYERS - 1
MLP_H = 64       # MLP hidden_layer_units_num (orig 512)
MLP_OUT = 512    # MLP output_dim (kept as in the original)
L_VALID = EMB - K1 + 1          # length after conv2/conv3 (valid conv)
MLP_IN = C * L_VALID            # flattened feature size (orig 62464)


# ============ Kernel A: one branch = frontend + conv2/3 + 20 res blocks ======

def _branch_kernel(emb_ref, w1_ref, b1_ref, w23_ref, b23_ref,
                   rw1_ref, rb1_ref, rw2_ref, rb2_ref, rs_ref, rt_ref, o_ref):
    """grid=(2,): one grid step == one full branch.

    Activations are (length, channels); batch is folded into matmul rows so
    every conv is a single (B*L, K*Cin) @ (K*Cin, Cout) MXU dot.  The per-branch
    residual-weight stack (w1/w2 for all 20 blocks) is VMEM-resident and
    indexed dynamically inside a lax.fori_loop over blocks.
    """
    zpad_f = jnp.zeros((PAD1, SEQ), jnp.float32)

    def im2col_same_front(x):                 # x: (EMB, SEQ) -> (EMB, K1*SEQ)
        xp = jnp.concatenate([zpad_f, x, zpad_f], axis=0)
        return jnp.concatenate([xp[k:k + EMB, :] for k in range(K1)], axis=1)

    # ---- front-end: 3x Conv1d('same') + ReLU, summed (pool/dropout = id) ----
    acc = jnp.zeros((B * EMB, C), jnp.float32)
    for t in range(3):                         # ori / dim / pos
        cols = jnp.concatenate(
            [im2col_same_front(emb_ref[t, bi]) for bi in range(B)], axis=0)   # (B*EMB, K1*SEQ)
        y = jnp.dot(cols, w1_ref[t], preferred_element_type=jnp.float32) + b1_ref[t]
        acc = acc + jnp.maximum(y, 0.0)

    # ---- conv2 / conv3 (valid, branch-selected weights via BlockSpec) ----
    def im2col_valid(x):                       # x: (EMB, C) -> (L_VALID, K1*C)
        return jnp.concatenate([x[k:k + L_VALID, :] for k in range(K1)], axis=1)

    cols2 = jnp.concatenate(
        [im2col_valid(acc[bi * EMB:(bi + 1) * EMB, :]) for bi in range(B)], axis=0)
    act = jnp.dot(cols2, w23_ref[0], preferred_element_type=jnp.float32) + b23_ref[0]  # (B*L, C)

    # ---- 20 ResidualBlocks: weights VMEM-resident, single fori_loop ----
    zpad_r = jnp.zeros((RES_PAD, C), jnp.float32)

    def im2col_same_res(x):                    # x: (L_VALID, C) -> (L_VALID, RES_K*C)
        xp = jnp.concatenate([zpad_r, x, zpad_r], axis=0)
        return jnp.concatenate([xp[k:k + L_VALID, :] for k in range(RES_K)], axis=1)

    def conv_same(a, w, b):                    # a: (B*L, C); batch folded into M
        cols = jnp.concatenate(
            [im2col_same_res(a[bi * L_VALID:(bi + 1) * L_VALID, :]) for bi in range(B)],
            axis=0)                            # (B*L, RES_K*C)
        return jnp.dot(cols, w, preferred_element_type=jnp.float32) + b

    def block(i, x):
        w1, b1 = rw1_ref[0, i], rb1_ref[0, i]
        w2, b2 = rw2_ref[0, i], rb2_ref[0, i]
        s, t = rs_ref[0, i], rt_ref[0, i]      # shared eval-mode BatchNorm
        res = x
        for _ in range(2):                     # same structure as the PyTorch block
            res = conv_same(jnp.maximum(res * s + t, 0.0), w1, b1)
            res = conv_same(jnp.maximum(res * s + t, 0.0), w2, b2)
        return x + 0.3 * res

    act = jax.lax.fori_loop(0, N_RES, block, act)

    # ---- lane-dense flatten: flat[b, l*C + c] = act[b*L + l, c] ----
    flat = jnp.concatenate(
        [jnp.concatenate([act[bi * L_VALID + l:bi * L_VALID + l + 1, :]
                          for l in range(L_VALID)], axis=1)
         for bi in range(B)], axis=0)          # (B, L_VALID*C)
    o_ref[0] = flat


def conv_branches(emb, pp):
    def const_spec(shape):
        zeros = (0,) * len(shape)
        return pl.BlockSpec(shape, lambda br: zeros)

    def branch_spec(shape):
        tail = (0,) * (len(shape) - 1)
        return pl.BlockSpec(shape, lambda br: (br,) + tail)

    return pl.pallas_call(
        _branch_kernel,
        grid=(2,),
        in_specs=[
            const_spec((3, B, EMB, SEQ)),                  # embeddings (shared)
            const_spec((3, K1 * SEQ, C)),                  # conv1 weights (shared)
            const_spec((3, 1, C)),                         # conv1 biases
            branch_spec((1, K1 * C, C)),                   # conv2 / conv3 weight
            branch_spec((1, 1, C)),                        # conv2 / conv3 bias
            branch_spec((1, N_RES, RES_K * C, C)),         # res conv1 weights (whole stack)
            branch_spec((1, N_RES, 1, C)),                 # res conv1 biases
            branch_spec((1, N_RES, RES_K * C, C)),         # res conv2 weights
            branch_spec((1, N_RES, 1, C)),                 # res conv2 biases
            branch_spec((1, N_RES, 1, C)),                 # res BN scale
            branch_spec((1, N_RES, 1, C)),                 # res BN shift
        ],
        out_specs=pl.BlockSpec((1, B, MLP_IN), lambda br: (br, 0, 0)),
        out_shape=jax.ShapeDtypeStruct((2, B, MLP_IN), jnp.float32),
        compiler_params=pltpu.CompilerParams(
            dimension_semantics=("parallel",),
            vmem_limit_bytes=32 * 1024 * 1024),
    )(emb, pp["conv1_w"], pp["conv1_b"], pp["w23"], pp["b23"],
      pp["res_w1"], pp["res_b1"], pp["res_w2"], pp["res_b2"],
      pp["res_s"], pp["res_t"])


# ============ Kernel B: branch add + 40-layer MLP + final FC head ============

def _mlp_head_kernel(conv_ref, fw_ref, fb_ref, hw_ref, hb_ref, hs_ref, ht_ref,
                     lw_ref, lb_ref,
                     f1w_ref, f1b_ref, s1_ref, t1_ref,
                     f2w_ref, f2b_ref, s2_ref, t2_ref,
                     f3w_ref, f3b_ref, s3_ref, t3_ref,
                     f4w_ref, f4b_ref, o_ref):
    # branch add fused in (conv = conv2_chain + conv3_chain, already flattened)
    flat = conv_ref[0] + conv_ref[1]                       # (B, MLP_IN)

    # first MLP layer: Linear + ReLU (+ Dropout id)
    h = jnp.maximum(
        jnp.dot(flat, fw_ref[...], preferred_element_type=jnp.float32) + fb_ref[...], 0.0)

    # 39 hidden layers: Linear + BatchNorm(eval) + ReLU, weights VMEM-resident
    def layer(i, h):
        y = jnp.dot(h, hw_ref[i], preferred_element_type=jnp.float32) + hb_ref[i]
        return jnp.maximum(y * hs_ref[i] + ht_ref[i], 0.0)

    h = jax.lax.fori_loop(0, N_HIDDEN, layer, h)

    # last MLP layer + final FC/BN/ReLU/Sigmoid stack
    y = jnp.dot(h, lw_ref[...], preferred_element_type=jnp.float32) + lb_ref[...]
    y = jnp.dot(y, f1w_ref[...], preferred_element_type=jnp.float32) + f1b_ref[...]
    y = jnp.maximum(y * s1_ref[...] + t1_ref[...], 0.0)
    y = jnp.dot(y, f2w_ref[...], preferred_element_type=jnp.float32) + f2b_ref[...]
    y = jnp.maximum(y * s2_ref[...] + t2_ref[...], 0.0)
    y = jnp.dot(y, f3w_ref[...], preferred_element_type=jnp.float32) + f3b_ref[...]
    y = jnp.maximum(y * s3_ref[...] + t3_ref[...], 0.0)
    y = jnp.dot(y, f4w_ref[...], preferred_element_type=jnp.float32) + f4b_ref[...]
    o_ref[...] = 1.0 / (1.0 + jnp.exp(-y))                 # sigmoid (exact, safe)


def mlp_head(conv_out, pp):
    # no grid: everything (incl. the (39,64,64) hidden stack ~640 KB) is VMEM-resident
    return pl.pallas_call(
        _mlp_head_kernel,
        out_shape=jax.ShapeDtypeStruct((B, 1), jnp.float32),
    )(conv_out, pp["mlp_first_w"], pp["mlp_first_b"],
      pp["mlp_hidden_w"], pp["mlp_hidden_b"], pp["mlp_hidden_s"], pp["mlp_hidden_t"],
      pp["mlp_last_w"], pp["mlp_last_b"],
      pp["fc1_w"], pp["fc1_b"], pp["bn1_s"], pp["bn1_t"],
      pp["fc2_w"], pp["fc2_b"], pp["bn2_s"], pp["bn2_t"],
      pp["fc3_w"], pp["fc3_b"], pp["bn3_s"], pp["bn3_t"],
      pp["fc4_w"], pp["fc4_b"])


# ============================ forward pass ===================================

def predict_forward(pp, X):
    x = X.astype(jnp.int32)
    # embedding lookups: index-gather glue kept in plain JAX
    emb = jnp.stack([pp["emb_ori"][x[:, 0, :]],
                     pp["emb_dim"][x[:, 1, :]],
                     pp["emb_pos"][x[:, 2, :]]], axis=0)    # (3, B, SEQ, EMB)
    emb = jnp.transpose(emb, (0, 1, 3, 2))                   # (3, B, EMB, SEQ) = (length, channels)

    conv_out = conv_branches(emb, pp)                        # (2, B, MLP_IN), flattened per branch
    return mlp_head(conv_out, pp)                            # (B, 1)


# ============================ parameter init =================================

def make_params(key):
    keys = iter(jax.random.split(key, 128))

    def nk():
        return next(keys)

    def unif(shape, fan_in):
        bound = 1.0 / (fan_in ** 0.5)
        return jax.random.uniform(nk(), shape, jnp.float32, -bound, bound)

    def bn_eval(shape, eps=1e-5):
        gamma = 1.0 + 0.1 * jax.random.normal(nk(), shape, jnp.float32)
        beta = 0.05 * jax.random.normal(nk(), shape, jnp.float32)
        rmean = 0.05 * jax.random.normal(nk(), shape, jnp.float32)
        rvar = 1.0 + 0.1 * jax.random.uniform(nk(), shape, jnp.float32)
        scale = gamma / jnp.sqrt(rvar + eps)
        shift = beta - rmean * scale
        return scale, shift

    def resblock_stack(n):
        fan = C * RES_K
        scale, shift = bn_eval((n, C))
        return {"w1": unif((n, C, C, RES_K), fan), "b1": unif((n, C), fan),
                "w2": unif((n, C, C, RES_K), fan), "b2": unif((n, C), fan),
                "bn_scale": scale, "bn_shift": shift}

    p = {}
    p["emb_ori"] = jax.random.normal(nk(), (128, EMB), jnp.float32)
    p["emb_dim"] = jax.random.normal(nk(), (128, EMB), jnp.float32)
    p["emb_pos"] = jax.random.normal(nk(), (128, EMB), jnp.float32)
    for name in ("ori", "dim", "pos"):
        p[f"conv1_{name}_w"] = unif((C, SEQ, K1), SEQ * K1)
        p[f"conv1_{name}_b"] = unif((C,), SEQ * K1)
    p["conv2_w"] = unif((C, C, K1), C * K1)
    p["conv2_b"] = unif((C,), C * K1)
    p["conv3_w"] = unif((C, C, K1), C * K1)
    p["conv3_b"] = unif((C,), C * K1)
    p["conv2_res"] = resblock_stack(N_RES)
    p["conv3_res"] = resblock_stack(N_RES)
    p["mlp_first_w"] = unif((MLP_IN, MLP_H), MLP_IN)
    p["mlp_first_b"] = unif((MLP_H,), MLP_IN)
    hscale, hshift = bn_eval((N_HIDDEN, MLP_H))
    p["mlp_hidden"] = {"w": unif((N_HIDDEN, MLP_H, MLP_H), MLP_H),
                       "b": unif((N_HIDDEN, MLP_H), MLP_H),
                       "bn_scale": hscale, "bn_shift": hshift}
    p["mlp_last_w"] = unif((MLP_H, MLP_OUT), MLP_H)
    p["mlp_last_b"] = unif((MLP_OUT,), MLP_H)
    dims = [(MLP_OUT, 128), (128, 32), (32, 8), (8, 1)]
    for i, (din, dout) in enumerate(dims, start=1):
        p[f"fc{i}_w"] = unif((din, dout), din)
        p[f"fc{i}_b"] = unif((dout,), din)
    for i, dout in enumerate((128, 32, 8), start=1):
        s, t = bn_eval((dout,))
        p[f"bn{i}_scale"], p[f"bn{i}_shift"] = s, t
    return p


def pack_params(p):
    """Rearrange PyTorch-layout params into the kernel layouts (once, outside jit)."""

    def conv_flat(w):                     # (Cout, Cin, K) -> (K*Cin, Cout), row = k*Cin + cin
        cout, cin, k = w.shape
        return jnp.transpose(w, (2, 1, 0)).reshape(k * cin, cout)

    def res_flat(w):                      # (N, Cout, Cin, K) -> (N, K*Cin, Cout)
        n, cout, cin, k = w.shape
        return jnp.transpose(w, (0, 3, 2, 1)).reshape(n, k * cin, cout)

    pk = {"emb_ori": p["emb_ori"], "emb_dim": p["emb_dim"], "emb_pos": p["emb_pos"]}
    pk["conv1_w"] = jnp.stack([conv_flat(p[f"conv1_{n}_w"]) for n in ("ori", "dim", "pos")], 0)
    pk["conv1_b"] = jnp.stack([p[f"conv1_{n}_b"].reshape(1, C) for n in ("ori", "dim", "pos")], 0)
    # conv2 / conv3 stacked on a leading branch axis
    pk["w23"] = jnp.stack([conv_flat(p["conv2_w"]), conv_flat(p["conv3_w"])], 0)
    pk["b23"] = jnp.stack([p["conv2_b"].reshape(1, C), p["conv3_b"].reshape(1, C)], 0)

    r2, r3 = p["conv2_res"], p["conv3_res"]
    pk["res_w1"] = jnp.stack([res_flat(r2["w1"]), res_flat(r3["w1"])], 0)     # (2, N, K*C, C)
    pk["res_w2"] = jnp.stack([res_flat(r2["w2"]), res_flat(r3["w2"])], 0)
    pk["res_b1"] = jnp.stack([r2["b1"], r3["b1"]], 0).reshape(2, N_RES, 1, C)
    pk["res_b2"] = jnp.stack([r2["b2"], r3["b2"]], 0).reshape(2, N_RES, 1, C)
    pk["res_s"] = jnp.stack([r2["bn_scale"], r3["bn_scale"]], 0).reshape(2, N_RES, 1, C)
    pk["res_t"] = jnp.stack([r2["bn_shift"], r3["bn_shift"]], 0).reshape(2, N_RES, 1, C)

    # first MLP layer: permute rows from PyTorch's channel-major flatten order
    # (c*L + l) to the kernel's length-major flatten order (l*C + c)
    w0 = p["mlp_first_w"]                                            # (MLP_IN, MLP_H)
    pk["mlp_first_w"] = jnp.transpose(
        w0.reshape(C, L_VALID, MLP_H), (1, 0, 2)).reshape(MLP_IN, MLP_H)
    pk["mlp_first_b"] = p["mlp_first_b"].reshape(1, MLP_H)
    pk["mlp_hidden_w"] = p["mlp_hidden"]["w"]
    pk["mlp_hidden_b"] = p["mlp_hidden"]["b"].reshape(-1, 1, MLP_H)
    pk["mlp_hidden_s"] = p["mlp_hidden"]["bn_scale"].reshape(-1, 1, MLP_H)
    pk["mlp_hidden_t"] = p["mlp_hidden"]["bn_shift"].reshape(-1, 1, MLP_H)
    pk["mlp_last_w"] = p["mlp_last_w"]
    pk["mlp_last_b"] = p["mlp_last_b"].reshape(1, MLP_OUT)

    for i, dout in ((1, 128), (2, 32), (3, 8), (4, 1)):
        pk[f"fc{i}_w"] = p[f"fc{i}_w"]
        pk[f"fc{i}_b"] = p[f"fc{i}_b"].reshape(1, dout)
    for i, dout in ((1, 128), (2, 32), (3, 8)):
        pk[f"bn{i}_s"] = p[f"bn{i}_scale"].reshape(1, dout)
        pk[f"bn{i}_t"] = p[f"bn{i}_shift"].reshape(1, dout)
    return pk


# ================================= main ======================================

if __name__ == "__main__":
    key = jax.random.PRNGKey(0)
    params = make_params(key)
    packed = pack_params(params)

    # input: integer nucleotide codes stored as floats, shape (B, 3, SEQ)
    X = jax.random.randint(jax.random.fold_in(key, 999), (B, 3, SEQ), 0, 128).astype(jnp.float32)

    fwd = jax.jit(predict_forward)
    out = fwd(packed, X)
    jax.block_until_ready(out)

    assert out.shape == (B, 1), out.shape
    assert bool(jnp.all(jnp.isfinite(out)))
    assert bool(jnp.all((out >= 0.0) & (out <= 1.0)))
    print("KERNEL_OK")
</pallas_src>

<mosaic_0001>
module attributes {stable_mosaic.version = 11 : i64} {
  func.func @_branch_kernel(%arg0: i32, %arg1: memref<3x2x16x8xf32, #tpu.memory_space<vmem>>, %arg2: memref<3x56x32xf32, #tpu.memory_space<vmem>>, %arg3: memref<3x1x32xf32, #tpu.memory_space<vmem>>, %arg4: memref<1x224x32xf32, #tpu.memory_space<vmem>>, %arg5: memref<1x1x32xf32, #tpu.memory_space<vmem>>, %arg6: memref<1x20x864x32xf32, #tpu.memory_space<vmem>>, %arg7: memref<1x20x1x32xf32, #tpu.memory_space<vmem>>, %arg8: memref<1x20x864x32xf32, #tpu.memory_space<vmem>>, %arg9: memref<1x20x1x32xf32, #tpu.memory_space<vmem>>, %arg10: memref<1x20x1x32xf32, #tpu.memory_space<vmem>>, %arg11: memref<1x20x1x32xf32, #tpu.memory_space<vmem>>, %arg12: memref<1x2x320xf32, #tpu.memory_space<vmem>>) attributes {dimension_semantics = [#tpu.dimension_semantics<parallel>], iteration_bounds = array<i64: 2>, scalar_prefetch = 0 : i64, scratch_operands = 0 : i64, tpu.core_type = #tpu.core_type<tc>, window_params = [{pipeline_mode = #tpu.pipeline_mode<synchronous>, transform_indices = @transform_0, window_bounds = array<i64: 3, 2, 16, 8>}, {pipeline_mode = #tpu.pipeline_mode<synchronous>, transform_indices = @transform_1, window_bounds = array<i64: 3, 56, 32>}, {pipeline_mode = #tpu.pipeline_mode<synchronous>, transform_indices = @transform_2, window_bounds = array<i64: 3, 1, 32>}, {transform_indices = @transform_3, window_bounds = array<i64: 1, 224, 32>}, {transform_indices = @transform_4, window_bounds = array<i64: 1, 1, 32>}, {transform_indices = @transform_5, window_bounds = array<i64: 1, 20, 864, 32>}, {transform_indices = @transform_6, window_bounds = array<i64: 1, 20, 1, 32>}, {transform_indices = @transform_7, window_bounds = array<i64: 1, 20, 864, 32>}, {transform_indices = @transform_8, window_bounds = array<i64: 1, 20, 1, 32>}, {transform_indices = @transform_9, window_bounds = array<i64: 1, 20, 1, 32>}, {transform_indices = @transform_10, window_bounds = array<i64: 1, 20, 1, 32>}, {transform_indices = @transform_11, window_bounds = array<i64: 1, 2, 320>}]} {
    %cst = arith.constant 0.000000e+00 : f32
    %0 = vector.broadcast %cst : f32 to vector<3x8xf32>
    %cst_0 = arith.constant 0.000000e+00 : f32
    %1 = vector.broadcast %cst_0 : f32 to vector<32x32xf32>
    %c0 = arith.constant 0 : index
    %c0_1 = arith.constant 0 : index
    %c0_2 = arith.constant 0 : index
    %c0_3 = arith.constant 0 : index
    %2 = vector.load %arg1[%c0, %c0_1, %c0_2, %c0_3] : memref<3x2x16x8xf32, #tpu.memory_space<vmem>>, vector<1x1x16x8xf32>
    %3 = vector.shape_cast %2 : vector<1x1x16x8xf32> to vector<16x8xf32>
    %4 = tpu.concatenate %0, %3, %0 in 0 : vector<3x8xf32>, vector<16x8xf32>, vector<3x8xf32> -> vector<22x8xf32>
    %5 = vector.extract_strided_slice %4 {offsets = [0, 0], sizes = [16, 8], strides = [1, 1]} : vector<22x8xf32> to vector<16x8xf32>
    %6 = vector.extract_strided_slice %4 {offsets = [1, 0], sizes = [16, 8], strides = [1, 1]} : vector<22x8xf32> to vector<16x8xf32>
    %7 = vector.extract_strided_slice %4 {offsets = [2, 0], sizes = [16, 8], strides = [1, 1]} : vector<22x8xf32> to vector<16x8xf32>
    %8 = vector.extract_strided_slice %4 {offsets = [3, 0], sizes = [16, 8], strides = [1, 1]} : vector<22x8xf32> to vector<16x8xf32>
    %9 = vector.extract_strided_slice %4 {offsets = [4, 0], sizes = [16, 8], strides = [1, 1]} : vector<22x8xf32> to vector<16x8xf32>
    %10 = vector.extract_strided_slice %4 {offsets = [5, 0], sizes = [16, 8], strides = [1, 1]} : vector<22x8xf32> to vector<16x8xf32>
    %11 = vector.extract_strided_slice %4 {offsets = [6, 0], sizes = [16, 8], strides = [1, 1]} : vector<22x8xf32> to vector<16x8xf32>
    %12 = tpu.concatenate %5, %6, %7, %8, %9, %10, %11 in 1 : vector<16x8xf32>, vector<16x8xf32>, vector<16x8xf32>, vector<16x8xf32>, vector<16x8xf32>, vector<16x8xf32>, vector<16x8xf32> -> vector<16x56xf32>
    %c0_4 = arith.constant 0 : index
    %c1 = arith.constant 1 : index
    %c0_5 = arith.constant 0 : index
    %c0_6 = arith.constant 0 : index
    %13 = vector.load %arg1[%c0_4, %c1, %c0_5, %c0_6] : memref<3x2x16x8xf32, #tpu.memory_space<vmem>>, vector<1x1x16x8xf32>
    %14 = vector.shape_cast %13 : vector<1x1x16x8xf32> to vector<16x8xf32>
    %15 = tpu.concatenate %0, %14, %0 in 0 : vector<3x8xf32>, vector<16x8xf32>, vector<3x8xf32> -> vector<22x8xf32>
    %16 = vector.extract_strided_slice %15 {offsets = [0, 0], sizes = [16, 8], strides = [1, 1]} : vector<22x8xf32> to vector<16x8xf32>
    %17 = vector.extract_strided_slice %15 {offsets = [1, 0], sizes = [16, 8], strides = [1, 1]} : vector<22x8xf32> to vector<16x8xf32>
    %18 = vector.extract_strided_slice %15 {offsets = [2, 0], sizes = [16, 8], strides = [1, 1]} : vector<22x8xf32> to vector<16x8xf32>
    %19 = vector.extract_strided_slice %15 {offsets = [3, 0], sizes = [16, 8], strides = [1, 1]} : vector<22x8xf32> to vector<16x8xf32>
    %20 = vector.extract_strided_slice %15 {offsets = [4, 0], sizes = [16, 8], strides = [1, 1]} : vector<22x8xf32> to vector<16x8xf32>
    %21 = vector.extract_strided_slice %15 {offsets = [5, 0], sizes = [16, 8], strides = [1, 1]} : vector<22x8xf32> to vector<16x8xf32>
    %22 = vector.extract_strided_slice %15 {offsets = [6, 0], sizes = [16, 8], strides = [1, 1]} : vector<22x8xf32> to vector<16x8xf32>
    %23 = tpu.concatenate %16, %17, %18, %19, %20, %21, %22 in 1 : vector<16x8xf32>, vector<16x8xf32>, vector<16x8xf32>, vector<16x8xf32>, vector<16x8xf32>, vector<16x8xf32>, vector<16x8xf32> -> vector<16x56xf32>
    %24 = tpu.concatenate %12, %23 in 0 : vector<16x56xf32>, vector<16x56xf32> -> vector<32x56xf32>
    %c0_7 = arith.constant 0 : index
    %c0_8 = arith.constant 0 : index
    %c0_9 = arith.constant 0 : index
    %25 = vector.load %arg2[%c0_7, %c0_8, %c0_9] : memref<3x56x32xf32, #tpu.memory_space<vmem>>, vector<1x56x32xf32>
    %26 = vector.shape_cast %25 : vector<1x56x32xf32> to vector<56x32xf32>
    %cst_10 = arith.constant dense<0.000000e+00> : vector<32x32xf32>
    %27 = tpu.matmul %24, %26, %cst_10 {dimension_numbers = #tpu.dot_dimension_numbers<[1], [0], [0], [1], [0, 0, 1, 1], [], []>} : vector<32x56xf32>, vector<56x32xf32>, vector<32x32xf32> -> vector<32x32xf32>
    %c0_11 = arith.constant 0 : index
    %c0_12 = arith.constant 0 : index
    %c0_13 = arith.constant 0 : index
    %28 = vector.load %arg3[%c0_11, %c0_12, %c0_13] : memref<3x1x32xf32, #tpu.memory_space<vmem>>, vector<1x1x32xf32>
    %29 = vector.shape_cast %28 : vector<1x1x32xf32> to vector<1x32xf32>
    %30 = vector.broadcast %29 : vector<1x32xf32> to vector<32x32xf32>
    %31 = arith.addf %27, %30 : vector<32x32xf32>
    %cst_14 = arith.constant 0.000000e+00 : f32
    %32 = vector.broadcast %cst_14 : f32 to vector<32x32xf32>
    %33 = arith.maximumf %31, %32 : vector<32x32xf32>
    %34 = arith.addf %1, %33 : vector<32x32xf32>
    %c1_15 = arith.constant 1 : index
    %c0_16 = arith.constant 0 : index
    %c0_17 = arith.constant 0 : index
    %c0_18 = arith.constant 0 : index
    %35 = vector.load %arg1[%c1_15, %c0_16, %c0_17, %c0_18] : memref<3x2x16x8xf32, #tpu.memory_space<vmem>>, vector<1x1x16x8xf32>
    %36 = vector.shape_cast %35 : vector<1x1x16x8xf32> to vector<16x8xf32>
    %37 = tpu.concatenate %0, %36, %0 in 0 : vector<3x8xf32>, vector<16x8xf32>, vector<3x8xf32> -> vector<22x8xf32>
    %38 = vector.extract_strided_slice %37 {offsets = [0, 0], sizes = [16, 8], strides = [1, 1]} : vector<22x8xf32> to vector<16x8xf32>
    %39 = vector.extract_strided_slice %37 {offsets = [1, 0], sizes = [16, 8], strides = [1, 1]} : vector<22x8xf32> to vector<16x8xf32>
    %40 = vector.extract_strided_slice %37 {offsets = [2, 0], sizes = [16, 8], strides = [1, 1]} : vector<22x8xf32> to vector<16x8xf32>
    %41 = vector.extract_strided_slice %37 {offsets = [3, 0], sizes = [16, 8], strides = [1, 1]} : vector<22x8xf32> to vector<16x8xf32>
    %42 = vector.extract_strided_slice %37 {offsets = [4, 0], sizes = [16, 8], strides = [1, 1]} : vector<22x8xf32> to vector<16x8xf32>
    %43 = vector.extract_strided_slice %37 {offsets = [5, 0], sizes = [16, 8], strides = [1, 1]} : vector<22x8xf32> to vector<16x8xf32>
    %44 = vector.extract_strided_slice %37 {offsets = [6, 0], sizes = [16, 8], strides = [1, 1]} : vector<22x8xf32> to vector<16x8xf32>
    %45 = tpu.concatenate %38, %39, %40, %41, %42, %43, %44 in 1 : vector<16x8xf32>, vector<16x8xf32>, vector<16x8xf32>, vector<16x8xf32>, vector<16x8xf32>, vector<16x8xf32>, vector<16x8xf32> -> vector<16x56xf32>
    %c1_19 = arith.constant 1 : index
    %c1_20 = arith.constant 1 : index
    %c0_21 = arith.constant 0 : index
    %c0_22 = arith.constant 0 : index
    %46 = vector.load %arg1[%c1_19, %c1_20, %c0_21, %c0_22] : memref<3x2x16x8xf32, #tpu.memory_space<vmem>>, vector<1x1x16x8xf32>
    %47 = vector.shape_cast %46 : vector<1x1x16x8xf32> to vector<16x8xf32>
    %48 = tpu.concatenate %0, %47, %0 in 0 : vector<3x8xf32>, vector<16x8xf32>, vector<3x8xf32> -> vector<22x8xf32>
    %49 = vector.extract_strided_slice %48 {offsets = [0, 0], sizes = [16, 8], strides = [1, 1]} : vector<22x8xf32> to vector<16x8xf32>
    %50 = vector.extract_strided_slice %48 {offsets = [1, 0], sizes = [16, 8], strides = [1, 1]} : vector<22x8xf32> to vector<16x8xf32>
    %51 = vector.extract_strided_slice %48 {offsets = [2, 0], sizes = [16, 8], strides = [1, 1]} : vector<22x8xf32> to vector<16x8xf32>
    %52 = vector.extract_strided_slice %48 {offsets = [3, 0], sizes = [16, 8], strides = [1, 1]} : vector<22x8xf32> to vector<16x8xf32>
    %53 = vector.extract_strided_slice %48 {offsets = [4, 0], sizes = [16, 8], strides = [1, 1]} : vector<22x8xf32> to vector<16x8xf32>
    %54 = vector.extract_strided_slice %48 {offsets = [5, 0], sizes = [16, 8], strides = [1, 1]} : vector<22x8xf32> to vector<16x8xf32>
    %55 = vector.extract_strided_slice %48 {offsets = [6, 0], sizes = [16, 8], strides = [1, 1]} : vector<22x8xf32> to vector<16x8xf32>
    %56 = tpu.concatenate %49, %50, %51, %52, %53, %54, %55 in 1 : vector<16x8xf32>, vector<16x8xf32>, vector<16x8xf32>, vector<16x8xf32>, vector<16x8xf32>, vector<16x8xf32>, vector<16x8xf32> -> vector<16x56xf32>
    %57 = tpu.concatenate %45, %56 in 0 : vector<16x56xf32>, vector<16x56xf32> -> vector<32x56xf32>
    %c1_23 = arith.constant 1 : index
    %c0_24 = arith.constant 0 : index
    %c0_25 = arith.constant 0 : index
    %58 = vector.load %arg2[%c1_23, %c0_24, %c0_25] : memref<3x56x32xf32, #tpu.memory_space<vmem>>, vector<1x56x32xf32>
    %59 = vector.shape_cast %58 : vector<1x56x32xf32> to vector<56x32xf32>
    %cst_26 = arith.constant dense<0.000000e+00> : vector<32x32xf32>
    %60 = tpu.matmul %57, %59, %cst_26 {dimension_numbers = #tpu.dot_dimension_numbers<[1], [0], [0], [1], [0, 0, 1, 1], [], []>} : vector<32x56xf32>, vector<56x32xf32>, vector<32x32xf32> -> vector<32x32xf32>
    %c1_27 = arith.constant 1 : index
    %c0_28 = arith.constant 0 : index
    %c0_29 = arith.constant 0 : index
    %61 = vector.load %arg3[%c1_27, %c0_28, %c0_29] : memref<3x1x32xf32, #tpu.memory_space<vmem>>, vector<1x1x32xf32>
    %62 = vector.shape_cast %61 : vector<1x1x32xf32> to vector<1x32xf32>
    %63 = vector.broadcast %62 : vector<1x32xf32> to vector<32x32xf32>
    %64 = arith.addf %60, %63 : vector<32x32xf32>
    %cst_30 = arith.constant 0.000000e+00 : f32
    %65 = vector.broadcast %cst_30 : f32 to vector<32x32xf32>
    %66 = arith.maximumf %64, %65 : vector<32x32xf32>
    %67 = arith.addf %34, %66 : vector<32x32xf32>
    %c2 = arith.constant 2 : index
    %c0_31 = arith.constant 0 : index
    %c0_32 = arith.constant 0 : index
    %c0_33 = arith.constant 0 : index
    %68 = vector.load %arg1[%c2, %c0_31, %c0_32, %c0_33] : memref<3x2x16x8xf32, #tpu.memory_space<vmem>>, vector<1x1x16x8xf32>
    %69 = vector.shape_cast %68 : vector<1x1x16x8xf32> to vector<16x8xf32>
    %70 = tpu.concatenate %0, %69, %0 in 0 : vector<3x8xf32>, vector<16x8xf32>, vector<3x8xf32> -> vector<22x8xf32>
    %71 = vector.extract_strided_slice %70 {offsets = [0, 0], sizes = [16, 8], strides = [1, 1]} : vector<22x8xf32> to vector<16x8xf32>
    %72 = vector.extract_strided_slice %70 {offsets = [1, 0], sizes = [16, 8], strides = [1, 1]} : vector<22x8xf32> to vector<16x8xf32>
    %73 = vector.extract_strided_slice %70 {offsets = [2, 0], sizes = [16, 8], strides = [1, 1]} : vector<22x8xf32> to vector<16x8xf32>
    %74 = vector.extract_strided_slice %70 {offsets = [3, 0], sizes = [16, 8], strides = [1, 1]} : vector<22x8xf32> to vector<16x8xf32>
    %75 = vector.extract_strided_slice %70 {offsets = [4, 0], sizes = [16, 8], strides = [1, 1]} : vector<22x8xf32> to vector<16x8xf32>
    %76 = vector.extract_strided_slice %70 {offsets = [5, 0], sizes = [16, 8], strides = [1, 1]} : vector<22x8xf32> to vector<16x8xf32>
    %77 = vector.extract_strided_slice %70 {offsets = [6, 0], sizes = [16, 8], strides = [1, 1]} : vector<22x8xf32> to vector<16x8xf32>
    %78 = tpu.concatenate %71, %72, %73, %74, %75, %76, %77 in 1 : vector<16x8xf32>, vector<16x8xf32>, vector<16x8xf32>, vector<16x8xf32>, vector<16x8xf32>, vector<16x8xf32>, vector<16x8xf32> -> vector<16x56xf32>
    %c2_34 = arith.constant 2 : index
    %c1_35 = arith.constant 1 : index
    %c0_36 = arith.constant 0 : index
    %c0_37 = arith.constant 0 : index
    %79 = vector.load %arg1[%c2_34, %c1_35, %c0_36, %c0_37] : memref<3x2x16x8xf32, #tpu.memory_space<vmem>>, vector<1x1x16x8xf32>
    %80 = vector.shape_cast %79 : vector<1x1x16x8xf32> to vector<16x8xf32>
    %81 = tpu.concatenate %0, %80, %0 in 0 : vector<3x8xf32>, vector<16x8xf32>, vector<3x8xf32> -> vector<22x8xf32>
    %82 = vector.extract_strided_slice %81 {offsets = [0, 0], sizes = [16, 8], strides = [1, 1]} : vector<22x8xf32> to vector<16x8xf32>
    %83 = vector.extract_strided_slice %81 {offsets = [1, 0], sizes = [16, 8], strides = [1, 1]} : vector<22x8xf32> to vector<16x8xf32>
    %84 = vector.extract_strided_slice %81 {offsets = [2, 0], sizes = [16, 8], strides = [1, 1]} : vector<22x8xf32> to vector<16x8xf32>
    %85 = vector.extract_strided_slice %81 {offsets = [3, 0], sizes = [16, 8], strides = [1, 1]} : vector<22x8xf32> to vector<16x8xf32>
    %86 = vector.extract_strided_slice %81 {offsets = [4, 0], sizes = [16, 8], strides = [1, 1]} : vector<22x8xf32> to vector<16x8xf32>
    %87 = vector.extract_strided_slice %81 {offsets = [5, 0], sizes = [16, 8], strides = [1, 1]} : vector<22x8xf32> to vector<16x8xf32>
    %88 = vector.extract_strided_slice %81 {offsets = [6, 0], sizes = [16, 8], strides = [1, 1]} : vector<22x8xf32> to vector<16x8xf32>
    %89 = tpu.concatenate %82, %83, %84, %85, %86, %87, %88 in 1 : vector<16x8xf32>, vector<16x8xf32>, vector<16x8xf32>, vector<16x8xf32>, vector<16x8xf32>, vector<16x8xf32>, vector<16x8xf32> -> vector<16x56xf32>
    %90 = tpu.concatenate %78, %89 in 0 : vector<16x56xf32>, vector<16x56xf32> -> vector<32x56xf32>
    %c2_38 = arith.constant 2 : index
    %c0_39 = arith.constant 0 : index
    %c0_40 = arith.constant 0 : index
    %91 = vector.load %arg2[%c2_38, %c0_39, %c0_40] : memref<3x56x32xf32, #tpu.memory_space<vmem>>, vector<1x56x32xf32>
    %92 = vector.shape_cast %91 : vector<1x56x32xf32> to vector<56x32xf32>
    %cst_41 = arith.constant dense<0.000000e+00> : vector<32x32xf32>
    %93 = tpu.matmul %90, %92, %cst_41 {dimension_numbers = #tpu.dot_dimension_numbers<[1], [0], [0], [1], [0, 0, 1, 1], [], []>} : vector<32x56xf32>, vector<56x32xf32>, vector<32x32xf32> -> vector<32x32xf32>
    %c2_42 = arith.constant 2 : index
    %c0_43 = arith.constant 0 : index
    %c0_44 = arith.constant 0 : index
    %94 = vector.load %arg3[%c2_42, %c0_43, %c0_44] : memref<3x1x32xf32, #tpu.memory_space<vmem>>, vector<1x1x32xf32>
    %95 = vector.shape_cast %94 : vector<1x1x32xf32> to vector<1x32xf32>
    %96 = vector.broadcast %95 : vector<1x32xf32> to vector<32x32xf32>
    %97 = arith.addf %93, %96 : vector<32x32xf32>
    %cst_45 = arith.constant 0.000000e+00 : f32
    %98 = vector.broadcast %cst_45 : f32 to vector<32x32xf32>
    %99 = arith.maximumf %97, %98 : vector<32x32xf32>
    %100 = arith.addf %67, %99 : vector<32x32xf32>
    %101 = vector.extract_strided_slice %100 {offsets = [0, 0], sizes = [16, 32], strides = [1, 1]} : vector<32x32xf32> to vector<16x32xf32>
    %102 = vector.extract_strided_slice %101 {offsets = [0, 0], sizes = [10, 32], strides = [1, 1]} : vector<16x32xf32> to vector<10x32xf32>
    %103 = vector.extract_strided_slice %101 {offsets = [1, 0], sizes = [10, 32], strides = [1, 1]} : vector<16x32xf32> to vector<10x32xf32>
    %104 = vector.extract_strided_slice %101 {offsets = [2, 0], sizes = [10, 32], strides = [1, 1]} : vector<16x32xf32> to vector<10x32xf32>
    %105 = vector.extract_strided_slice %101 {offsets = [3, 0], sizes = [10, 32], strides = [1, 1]} : vector<16x32xf32> to vector<10x32xf32>
    %106 = vector.extract_strided_slice %101 {offsets = [4, 0], sizes = [10, 32], strides = [1, 1]} : vector<16x32xf32> to vector<10x32xf32>
    %107 = vector.extract_strided_slice %101 {offsets = [5, 0], sizes = [10, 32], strides = [1, 1]} : vector<16x32xf32> to vector<10x32xf32>
    %108 = vector.extract_strided_slice %101 {offsets = [6, 0], sizes = [10, 32], strides = [1, 1]} : vector<16x32xf32> to vector<10x32xf32>
    %109 = tpu.concatenate %102, %103, %104, %105, %106, %107, %108 in 1 : vector<10x32xf32>, vector<10x32xf32>, vector<10x32xf32>, vector<10x32xf32>, vector<10x32xf32>, vector<10x32xf32>, vector<10x32xf32> -> vector<10x224xf32>
    %110 = vector.extract_strided_slice %100 {offsets = [16, 0], sizes = [16, 32], strides = [1, 1]} : vector<32x32xf32> to vector<16x32xf32>
    %111 = vector.extract_strided_slice %110 {offsets = [0, 0], sizes = [10, 32], strides = [1, 1]} : vector<16x32xf32> to vector<10x32xf32>
    %112 = vector.extract_strided_slice %110 {offsets = [1, 0], sizes = [10, 32], strides = [1, 1]} : vector<16x32xf32> to vector<10x32xf32>
    %113 = vector.extract_strided_slice %110 {offsets = [2, 0], sizes = [10, 32], strides = [1, 1]} : vector<16x32xf32> to vector<10x32xf32>
    %114 = vector.extract_strided_slice %110 {offsets = [3, 0], sizes = [10, 32], strides = [1, 1]} : vector<16x32xf32> to vector<10x32xf32>
    %115 = vector.extract_strided_slice %110 {offsets = [4, 0], sizes = [10, 32], strides = [1, 1]} : vector<16x32xf32> to vector<10x32xf32>
    %116 = vector.extract_strided_slice %110 {offsets = [5, 0], sizes = [10, 32], strides = [1, 1]} : vector<16x32xf32> to vector<10x32xf32>
    %117 = vector.extract_strided_slice %110 {offsets = [6, 0], sizes = [10, 32], strides = [1, 1]} : vector<16x32xf32> to vector<10x32xf32>
    %118 = tpu.concatenate %111, %112, %113, %114, %115, %116, %117 in 1 : vector<10x32xf32>, vector<10x32xf32>, vector<10x32xf32>, vector<10x32xf32>, vector<10x32xf32>, vector<10x32xf32>, vector<10x32xf32> -> vector<10x224xf32>
    %119 = tpu.concatenate %109, %118 in 0 : vector<10x224xf32>, vector<10x224xf32> -> vector<20x224xf32>
    %c0_46 = arith.constant 0 : index
    %c0_47 = arith.constant 0 : index
    %c0_48 = arith.constant 0 : index
    %120 = vector.load %arg4[%c0_46, %c0_47, %c0_48] : memref<1x224x32xf32, #tpu.memory_space<vmem>>, vector<1x224x32xf32>
    %121 = vector.shape_cast %120 : vector<1x224x32xf32> to vector<224x32xf32>
    %cst_49 = arith.constant dense<0.000000e+00> : vector<20x32xf32>
    %122 = tpu.matmul %119, %121, %cst_49 {dimension_numbers = #tpu.dot_dimension_numbers<[1], [0], [0], [1], [0, 0, 1, 1], [], []>} : vector<20x224xf32>, vector<224x32xf32>, vector<20x32xf32> -> vector<20x32xf32>
    %c0_50 = arith.constant 0 : index
    %c0_51 = arith.constant 0 : index
    %c0_52 = arith.constant 0 : index
    %123 = vector.load %arg5[%c0_50, %c0_51, %c0_52] : memref<1x1x32xf32, #tpu.memory_space<vmem>>, vector<1x1x32xf32>
    %124 = vector.shape_cast %123 : vector<1x1x32xf32> to vector<1x32xf32>
    %125 = vector.broadcast %124 : vector<1x32xf32> to vector<20x32xf32>
    %126 = arith.addf %122, %125 : vector<20x32xf32>
    %cst_53 = arith.constant 0.000000e+00 : f32
    %127 = vector.broadcast %cst_53 : f32 to vector<13x32xf32>
    %c0_i32 = arith.constant 0 : i32
    %c20_i32 = arith.constant 20 : i32
    %128 = arith.addi %c0_i32, %c20_i32 : i32
    %c1_i32 = arith.constant 1 : i32
    %129 = scf.for %arg13 = %c0_i32 to %128 step %c1_i32 iter_args(%arg14 = %126) -> (vector<20x32xf32>)  : i32 {
      %c0_58 = arith.constant 0 : index
      %156 = arith.index_cast %arg13 : i32 to index
      %c0_59 = arith.constant 0 : index
      %c0_60 = arith.constant 0 : index
      %157 = vector.load %arg6[%c0_58, %156, %c0_59, %c0_60] : memref<1x20x864x32xf32, #tpu.memory_space<vmem>>, vector<1x1x864x32xf32>
      %158 = vector.shape_cast %157 : vector<1x1x864x32xf32> to vector<864x32xf32>
      %c0_61 = arith.constant 0 : index
      %159 = arith.index_cast %arg13 : i32 to index
      %c0_62 = arith.constant 0 : index
      %c0_63 = arith.constant 0 : index
      %160 = vector.load %arg7[%c0_61, %159, %c0_62, %c0_63] : memref<1x20x1x32xf32, #tpu.memory_space<vmem>>, vector<1x1x1x32xf32>
      %161 = vector.shape_cast %160 : vector<1x1x1x32xf32> to vector<1x32xf32>
      %c0_64 = arith.constant 0 : index
      %162 = arith.index_cast %arg13 : i32 to index
      %c0_65 = arith.constant 0 : index
      %c0_66 = arith.constant 0 : index
      %163 = vector.load %arg8[%c0_64, %162, %c0_65, %c0_66] : memref<1x20x864x32xf32, #tpu.memory_space<vmem>>, vector<1x1x864x32xf32>
      %164 = vector.shape_cast %163 : vector<1x1x864x32xf32> to vector<864x32xf32>
      %c0_67 = arith.constant 0 : index
      %165 = arith.index_cast %arg13 : i32 to index
      %c0_68 = arith.constant 0 : index
      %c0_69 = arith.constant 0 : index
      %166 = vector.load %arg9[%c0_67, %165, %c0_68, %c0_69] : memref<1x20x1x32xf32, #tpu.memory_space<vmem>>, vector<1x1x1x32xf32>
      %167 = vector.shape_cast %166 : vector<1x1x1x32xf32> to vector<1x32xf32>
      %c0_70 = arith.constant 0 : index
      %168 = arith.index_cast %arg13 : i32 to index
      %c0_71 = arith.constant 0 : index
      %c0_72 = arith.constant 0 : index
      %169 = vector.load %arg10[%c0_70, %168, %c0_71, %c0_72] : memref<1x20x1x32xf32, #tpu.memory_space<vmem>>, vector<1x1x1x32xf32>
      %170 = vector.shape_cast %169 : vector<1x1x1x32xf32> to vector<1x32xf32>
      %c0_73 = arith.constant 0 : index
      %171 = arith.index_cast %arg13 : i32 to index
      %c0_74 = arith.constant 0 : index
      %c0_75 = arith.constant 0 : index
      %172 = vector.load %arg11[%c0_73, %171, %c0_74, %c0_75] : memref<1x20x1x32xf32, #tpu.memory_space<vmem>>, vector<1x1x1x32xf32>
      %173 = vector.shape_cast %172 : vector<1x1x1x32xf32> to vector<1x32xf32>
      %174 = vector.broadcast %170 : vector<1x32xf32> to vector<20x32xf32>
      %175 = arith.mulf %arg14, %174 : vector<20x32xf32>
      %176 = vector.broadcast %173 : vector<1x32xf32> to vector<20x32xf32>
      %177 = arith.addf %175, %176 : vector<20x32xf32>
      %cst_76 = arith.constant 0.000000e+00 : f32
      %178 = vector.broadcast %cst_76 : f32 to vector<20x32xf32>
      %179 = arith.maximumf %177, %178 : vector<20x32xf32>
      %180 = vector.extract_strided_slice %179 {offsets = [0, 0], sizes = [10, 32], strides = [1, 1]} : vector<20x32xf32> to vector<10x32xf32>
      %181 = tpu.concatenate %127, %180, %127 in 0 : vector<13x32xf32>, vector<10x32xf32>, vector<13x32xf32> -> vector<36x32xf32>
      %182 = vector.extract_strided_slice %181 {offsets = [0, 0], sizes = [10, 32], strides = [1, 1]} : vector<36x32xf32> to vector<10x32xf32>
      %183 = vector.extract_strided_slice %181 {offsets = [1, 0], sizes = [10, 32], strides = [1, 1]} : vector<36x32xf32> to vector<10x32xf32>
      %184 = vector.extract_strided_slice %181 {offsets = [2, 0], sizes = [10, 32], strides = [1, 1]} : vector<36x32xf32> to vector<10x32xf32>
      %185 = vector.extract_strided_slice %181 {offsets = [3, 0], sizes = [10, 32], strides = [1, 1]} : vector<36x32xf32> to vector<10x32xf32>
      %186 = vector.extract_strided_slice %181 {offsets = [4, 0], sizes = [10, 32], strides = [1, 1]} : vector<36x32xf32> to vector<10x32xf32>
      %187 = vector.extract_strided_slice %181 {offsets = [5, 0], sizes = [10, 32], strides = [1, 1]} : vector<36x32xf32> to vector<10x32xf32>
      %188 = vector.extract_strided_slice %181 {offsets = [6, 0], sizes = [10, 32], strides = [1, 1]} : vector<36x32xf32> to vector<10x32xf32>
      %189 = vector.extract_strided_slice %181 {offsets = [7, 0], sizes = [10, 32], strides = [1, 1]} : vector<36x32xf32> to vector<10x32xf32>
      %190 = vector.extract_strided_slice %181 {offsets = [8, 0], sizes = [10, 32], strides = [1, 1]} : vector<36x32xf32> to vector<10x32xf32>
      %191 = vector.extract_strided_slice %181 {offsets = [9, 0], sizes = [10, 32], strides = [1, 1]} : vector<36x32xf32> to vector<10x32xf32>
      %192 = vector.extract_strided_slice %181 {offsets = [10, 0], sizes = [10, 32], strides = [1, 1]} : vector<36x32xf32> to vector<10x32xf32>
      %193 = vector.extract_strided_slice %181 {offsets = [11, 0], sizes = [10, 32], strides = [1, 1]} : vector<36x32xf32> to vector<10x32xf32>
      %194 = vector.extract_strided_slice %181 {offsets = [12, 0], sizes = [10, 32], strides = [1, 1]} : vector<36x32xf32> to vector<10x32xf32>
      %195 = vector.extract_strided_slice %181 {offsets = [13, 0], sizes = [10, 32], strides = [1, 1]} : vector<36x32xf32> to vector<10x32xf32>
      %196 = vector.extract_strided_slice %181 {offsets = [14, 0], sizes = [10, 32], strides = [1, 1]} : vector<36x32xf32> to vector<10x32xf32>
      %197 = vector.extract_strided_slice %181 {offsets = [15, 0], sizes = [10, 32], strides = [1, 1]} : vector<36x32xf32> to vector<10x32xf32>
      %198 = vector.extract_strided_slice %181 {offsets = [16, 0], sizes = [10, 32], strides = [1, 1]} : vector<36x32xf32> to vector<10x32xf32>
      %199 = vector.extract_strided_slice %181 {offsets = [17, 0], sizes = [10, 32], strides = [1, 1]} : vector<36x32xf32> to vector<10x32xf32>
      %200 = vector.extract_strided_slice %181 {offsets = [18, 0], sizes = [10, 32], strides = [1, 1]} : vector<36x32xf32> to vector<10x32xf32>
      %201 = vector.extract_strided_slice %181 {offsets = [19, 0], sizes = [10, 32], strides = [1, 1]} : vector<36x32xf32> to vector<10x32xf32>
      %202 = vector.extract_strided_slice %181 {offsets = [20, 0], sizes = [10, 32], strides = [1, 1]} : vector<36x32xf32> to vector<10x32xf32>
      %203 = vector.extract_strided_slice %181 {offsets = [21, 0], sizes = [10, 32], strides = [1, 1]} : vector<36x32xf32> to vector<10x32xf32>
      %204 = vector.extract_strided_slice %181 {offsets = [22, 0], sizes = [10, 32], strides = [1, 1]} : vector<36x32xf32> to vector<10x32xf32>
      %205 = vector.extract_strided_slice %181 {offsets = [23, 0], sizes = [10, 32], strides = [1, 1]} : vector<36x32xf32> to vector<10x32xf32>
      %206 = vector.extract_strided_slice %181 {offsets = [24, 0], sizes = [10, 32], strides = [1, 1]} : vector<36x32xf32> to vector<10x32xf32>
      %207 = vector.extract_strided_slice %181 {offsets = [25, 0], sizes = [10, 32], strides = [1, 1]} : vector<36x32xf32> to vector<10x32xf32>
      %208 = vector.extract_strided_slice %181 {offsets = [26, 0], sizes = [10, 32], strides = [1, 1]} : vector<36x32xf32> to vector<10x32xf32>
      %209 = tpu.concatenate %182, %183, %184, %185, %186, %187, %188, %189, %190, %191, %192, %193, %194, %195, %196, %197 in 1 : vector<10x32xf32>, vector<10x32xf32>, vector<10x32xf32>, vector<10x32xf32>, vector<10x32xf32>, vector<10x32xf32>, vector<10x32xf32>, vector<10x32xf32>, vector<10x32xf32>, vector<10x32xf32>, vector<10x32xf32>, vector<10x32xf32>, vector<10x32xf32>, vector<10x32xf32>, vector<10x32xf32>, vector<10x32xf32> -> vector<10x512xf32>
      %210 = tpu.concatenate %198, %199, %200, %201, %202, %203, %204, %205, %206, %207, %208 in 1 : vector<10x32xf32>, vector<10x32xf32>, vector<10x32xf32>, vector<10x32xf32>, vector<10x32xf32>, vector<10x32xf32>, vector<10x32xf32>, vector<10x32xf32>, vector<10x32xf32>, vector<10x32xf32>, vector<10x32xf32> -> vector<10x352xf32>
      %211 = tpu.concatenate %209, %210 in 1 : vector<10x512xf32>, vector<10x352xf32> -> vector<10x864xf32>
      %212 = vector.extract_strided_slice %179 {offsets = [10, 0], sizes = [10, 32], strides = [1, 1]} : vector<20x32xf32> to vector<10x32xf32>
      %213 = tpu.concatenate %127, %212, %127 in 0 : vector<13x32xf32>, vector<10x32xf32>, vector<13x32xf32> -> vector<36x32xf32>
      %214 = vector.extract_strided_slice %213 {offsets = [0, 0], sizes = [10, 32], strides = [1, 1]} : vector<36x32xf32> to vector<10x32xf32>
      %215 = vector.extract_strided_slice %213 {offsets = [1, 0], sizes = [10, 32], strides = [1, 1]} : vector<36x32xf32> to vector<10x32xf32>
      %216 = vector.extract_strided_slice %213 {offsets = [2, 0], sizes = [10, 32], strides = [1, 1]} : vector<36x32xf32> to vector<10x32xf32>
      %217 = vector.extract_strided_slice %213 {offsets = [3, 0], sizes = [10, 32], strides = [1, 1]} : vector<36x32xf32> to vector<10x32xf32>
      %218 = vector.extract_strided_slice %213 {offsets = [4, 0], sizes = [10, 32], strides = [1, 1]} : vector<36x32xf32> to vector<10x32xf32>
      %219 = vector.extract_strided_slice %213 {offsets = [5, 0], sizes = [10, 32], strides = [1, 1]} : vector<36x32xf32> to vector<10x32xf32>
      %220 = vector.extract_strided_slice %213 {offsets = [6, 0], sizes = [10, 32], strides = [1, 1]} : vector<36x32xf32> to vector<10x32xf32>
      %221 = vector.extract_strided_slice %213 {offsets = [7, 0], sizes = [10, 32], strides = [1, 1]} : vector<36x32xf32> to vector<10x32xf32>
      %222 = vector.extract_strided_slice %213 {offsets = [8, 0], sizes = [10, 32], strides = [1, 1]} : vector<36x32xf32> to vector<10x32xf32>
      %223 = vector.extract_strided_slice %213 {offsets = [9, 0], sizes = [10, 32], strides = [1, 1]} : vector<36x32xf32> to vector<10x32xf32>
      %224 = vector.extract_strided_slice %213 {offsets = [10, 0], sizes = [10, 32], strides = [1, 1]} : vector<36x32xf32> to vector<10x32xf32>
      %225 = vector.extract_strided_slice %213 {offsets = [11, 0], sizes = [10, 32], strides = [1, 1]} : vector<36x32xf32> to vector<10x32xf32>
      %226 = vector.extract_strided_slice %213 {offsets = [12, 0], sizes = [10, 32], strides = [1, 1]} : vector<36x32xf32> to vector<10x32xf32>
      %227 = vector.extract_strided_slice %213 {offsets = [13, 0], sizes = [10, 32], strides = [1, 1]} : vector<36x32xf32> to vector<10x32xf32>
      %228 = vector.extract_strided_slice %213 {offsets = [14, 0], sizes = [10, 32], strides = [1, 1]} : vector<36x32xf32> to vector<10x32xf32>
      %229 = vector.extract_strided_slice %213 {offsets = [15, 0], sizes = [10, 32], strides = [1, 1]} : vector<36x32xf32> to vector<10x32xf32>
      %230 = vector.extract_strided_slice %213 {offsets = [16, 0], sizes = [10, 32], strides = [1, 1]} : vector<36x32xf32> to vector<10x32xf32>
      %231 = vector.extract_strided_slice %213 {offsets = [17, 0], sizes = [10, 32], strides = [1, 1]} : vector<36x32xf32> to vector<10x32xf32>
      %232 = vector.extract_strided_slice %213 {offsets = [18, 0], sizes = [10, 32], strides = [1, 1]} : vector<36x32xf32> to vector<10x32xf32>
      %233 = vector.extract_strided_slice %213 {offsets = [19, 0], sizes = [10, 32], strides = [1, 1]} : vector<36x32xf32> to vector<10x32xf32>
      %234 = vector.extract_strided_slice %213 {offsets = [20, 0], sizes = [10, 32], strides = [1, 1]} : vector<36x32xf32> to vector<10x32xf32>
      %235 = vector.extract_strided_slice %213 {offsets = [21, 0], sizes = [10, 32], strides = [1, 1]} : vector<36x32xf32> to vector<10x32xf32>
      %236 = vector.extract_strided_slice %213 {offsets = [22, 0], sizes = [10, 32], strides = [1, 1]} : vector<36x32xf32> to vector<10x32xf32>
      %237 = vector.extract_strided_slice %213 {offsets = [23, 0], sizes = [10, 32], strides = [1, 1]} : vector<36x32xf32> to vector<10x32xf32>
      %238 = vector.extract_strided_slice %213 {offsets = [24, 0], sizes = [10, 32], strides = [1, 1]} : vector<36x32xf32> to vector<10x32xf32>
      %239 = vector.extract_strided_slice %213 {offsets = [25, 0], sizes = [10, 32], strides = [1, 1]} : vector<36x32xf32> to vector<10x32xf32>
      %240 = vector.extract_strided_slice %213 {offsets = [26, 0], sizes = [10, 32], strides = [1, 1]} : vector<36x32xf32> to vector<10x32xf32>
      %241 = tpu.concatenate %214, %215, %216, %217, %218, %219, %220, %221, %222, %223, %224, %225, %226, %227, %228, %229 in 1 : vector<10x32xf32>, vector<10x32xf32>, vector<10x32xf32>, vector<10x32xf32>, vector<10x32xf32>, vector<10x32xf32>, vector<10x32xf32>, vector<10x32xf32>, vector<10x32xf32>, vector<10x32xf32>, vector<10x32xf32>, vector<10x32xf32>, vector<10x32xf32>, vector<10x32xf32>, vector<10x32xf32>, vector<10x32xf32> -> vector<10x512xf32>
      %242 = tpu.concatenate %230, %231, %232, %233, %234, %235, %236, %237, %238, %239, %240 in 1 : vector<10x32xf32>, vector<10x32xf32>, vector<10x32xf32>, vector<10x32xf32>, vector<10x32xf32>, vector<10x32xf32>, vector<10x32xf32>, vector<10x32xf32>, vector<10x32xf32>, vector<10x32xf32>, vector<10x32xf32> -> vector<10x352xf32>
      %243 = tpu.concatenate %241, %242 in 1 : vector<10x512xf32>, vector<10x352xf32> -> vector<10x864xf32>
      %244 = tpu.concatenate %211, %243 in 0 : vector<10x864xf32>, vector<10x864xf32> -> vector<20x864xf32>
      %cst_77 = arith.constant dense<0.000000e+00> : vector<20x32xf32>
      %245 = tpu.matmul %244, %158, %cst_77 {dimension_numbers = #tpu.dot_dimension_numbers<[1], [0], [0], [1], [0, 0, 1, 1], [], []>} : vector<20x864xf32>, vector<864x32xf32>, vector<20x32xf32> -> vector<20x32xf32>
      %246 = vector.broadcast %161 : vector<1x32xf32> to vector<20x32xf32>
      %247 = arith.addf %245, %246 : vector<20x32xf32>
      %248 = vector.broadcast %170 : vector<1x32xf32> to vector<20x32xf32>
      %249 = arith.mulf %247, %248 : vector<20x32xf32>
      %250 = vector.broadcast %173 : vector<1x32xf32> to vector<20x32xf32>
      %251 = arith.addf %249, %250 : vector<20x32xf32>
      %cst_78 = arith.constant 0.000000e+00 : f32
      %252 = vector.broadcast %cst_78 : f32 to vector<20x32xf32>
      %253 = arith.maximumf %251, %252 : vector<20x32xf32>
      %254 = vector.extract_strided_slice %253 {offsets = [0, 0], sizes = [10, 32], strides = [1, 1]} : vector<20x32xf32> to vector<10x32xf32>
      %255 = tpu.concatenate %127, %254, %127 in 0 : vector<13x32xf32>, vector<10x32xf32>, vector<13x32xf32> -> vector<36x32xf32>
      %256 = vector.extract_strided_slice %255 {offsets = [0, 0], sizes = [10, 32], strides = [1, 1]} : vector<36x32xf32> to vector<10x32xf32>
      %257 = vector.extract_strided_slice %255 {offsets = [1, 0], sizes = [10, 32], strides = [1, 1]} : vector<36x32xf32> to vector<10x32xf32>
      %258 = vector.extract_strided_slice %255 {offsets = [2, 0], sizes = [10, 32], strides = [1, 1]} : vector<36x32xf32> to vector<10x32xf32>
      %259 = vector.extract_strided_slice %255 {offsets = [3, 0], sizes = [10, 32], strides = [1, 1]} : vector<36x32xf32> to vector<10x32xf32>
      %260 = vector.extract_strided_slice %255 {offsets = [4, 0], sizes = [10, 32], strides = [1, 1]} : vector<36x32xf32> to vector<10x32xf32>
      %261 = vector.extract_strided_slice %255 {offsets = [5, 0], sizes = [10, 32], strides = [1, 1]} : vector<36x32xf32> to vector<10x32xf32>
      %262 = vector.extract_strided_slice %255 {offsets = [6, 0], sizes = [10, 32], strides = [1, 1]} : vector<36x32xf32> to vector<10x32xf32>
      %263 = vector.extract_strided_slice %255 {offsets = [7, 0], sizes = [10, 32], strides = [1, 1]} : vector<36x32xf32> to vector<10x32xf32>
      %264 = vector.extract_strided_slice %255 {offsets = [8, 0], sizes = [10, 32], strides = [1, 1]} : vector<36x32xf32> to vector<10x32xf32>
      %265 = vector.extract_strided_slice %255 {offsets = [9, 0], sizes = [10, 32], strides = [1, 1]} : vector<36x32xf32> to vector<10x32xf32>
      %266 = vector.extract_strided_slice %255 {offsets = [10, 0], sizes = [10, 32], strides = [1, 1]} : vector<36x32xf32> to vector<10x32xf32>
      %267 = vector.extract_strided_slice %255 {offsets = [11, 0], sizes = [10, 32], strides = [1, 1]} : vector<36x32xf32> to vector<10x32xf32>
      %268 = vector.extract_strided_slice %255 {offsets = [12, 0], sizes = [10, 32], strides = [1, 1]} : vector<36x32xf32> to vector<10x32xf32>
      %269 = vector.extract_strided_slice %255 {offsets = [13, 0], sizes = [10, 32], strides = [1, 1]} : vector<36x32xf32> to vector<10x32xf32>
      %270 = vector.extract_strided_slice %255 {offsets = [14, 0], sizes = [10, 32], strides = [1, 1]} : vector<36x32xf32> to vector<10x32xf32>
      %271 = vector.extract_strided_slice %255 {offsets = [15, 0], sizes = [10, 32], strides = [1, 1]} : vector<36x32xf32> to vector<10x32xf32>
      %272 = vector.extract_strided_slice %255 {offsets = [16, 0], sizes = [10, 32], strides = [1, 1]} : vector<36x32xf32> to vector<10x32xf32>
      %273 = vector.extract_strided_slice %255 {offsets = [17, 0], sizes = [10, 32], strides = [1, 1]} : vector<36x32xf32> to vector<10x32xf32>
      %274 = vector.extract_strided_slice %255 {offsets = [18, 0], sizes = [10, 32], strides = [1, 1]} : vector<36x32xf32> to vector<10x32xf32>
      %275 = vector.extract_strided_slice %255 {offsets = [19, 0], sizes = [10, 32], strides = [1, 1]} : vector<36x32xf32> to vector<10x32xf32>
      %276 = vector.extract_strided_slice %255 {offsets = [20, 0], sizes = [10, 32], strides = [1, 1]} : vector<36x32xf32> to vector<10x32xf32>
      %277 = vector.extract_strided_slice %255 {offsets = [21, 0], sizes = [10, 32], strides = [1, 1]} : vector<36x32xf32> to vector<10x32xf32>
      %278 = vector.extract_strided_slice %255 {offsets = [22, 0], sizes = [10, 32], strides = [1, 1]} : vector<36x32xf32> to vector<10x32xf32>
      %279 = vector.extract_strided_slice %255 {offsets = [23, 0], sizes = [10, 32], strides = [1, 1]} : vector<36x32xf32> to vector<10x32xf32>
      %280 = vector.extract_strided_slice %255 {offsets = [24, 0], sizes = [10, 32], strides = [1, 1]} : vector<36x32xf32> to vector<10x32xf32>
      %281 = vector.extract_strided_slice %255 {offsets = [25, 0], sizes = [10, 32], strides = [1, 1]} : vector<36x32xf32> to vector<10x32xf32>
      %282 = vector.extract_strided_slice %255 {offsets = [26, 0], sizes = [10, 32], strides = [1, 1]} : vector<36x32xf32> to vector<10x32xf32>
      %283 = tpu.concatenate %256, %257, %258, %259, %260, %261, %262, %263, %264, %265, %266, %267, %268, %269, %270, %271 in 1 : vector<10x32xf32>, vector<10x32xf32>, vector<10x32xf32>, vector<10x32xf32>, vector<10x32xf32>, vector<10x32xf32>, vector<10x32xf32>, vector<10x32xf32>, vector<10x32xf32>, vector<10x32xf32>, vector<10x32xf32>, vector<10x32xf32>, vector<10x32xf32>, vector<10x32xf32>, vector<10x32xf32>, vector<10x32xf32> -> vector<10x512xf32>
      %284 = tpu.concatenate %272, %273, %274, %275, %276, %277, %278, %279, %280, %281, %282 in 1 : vector<10x32xf32>, vector<10x32xf32>, vector<10x32xf32>, vector<10x32xf32>, vector<10x32xf32>, vector<10x32xf32>, vector<10x32xf32>, vector<10x32xf32>, vector<10x32xf32>, vector<10x32xf32>, vector<10x32xf32> -> vector<10x352xf32>
      %285 = tpu.concatenate %283, %284 in 1 : vector<10x512xf32>, vector<10x352xf32> -> vector<10x864xf32>
      %286 = vector.extract_strided_slice %253 {offsets = [10, 0], sizes = [10, 32], strides = [1, 1]} : vector<20x32xf32> to vector<10x32xf32>
      %287 = tpu.concatenate %127, %286, %127 in 0 : vector<13x32xf32>, vector<10x32xf32>, vector<13x32xf32> -> vector<36x32xf32>
      %288 = vector.extract_strided_slice %287 {offsets = [0, 0], sizes = [10, 32], strides = [1, 1]} : vector<36x32xf32> to vector<10x32xf32>
      %289 = vector.extract_strided_slice %287 {offsets = [1, 0], sizes = [10, 32], strides = [1, 1]} : vector<36x32xf32> to vector<10x32xf32>
      %290 = vector.extract_strided_slice %287 {offsets = [2, 0], sizes = [10, 32], strides = [1, 1]} : vector<36x32xf32> to vector<10x32xf32>
      %291 = vector.extract_strided_slice %287 {offsets = [3, 0], sizes = [10, 32], strides = [1, 1]} : vector<36x32xf32> to vector<10x32xf32>
      %292 = vector.extract_strided_slice %287 {offsets = [4, 0], sizes = [10, 32], strides = [1, 1]} : vector<36x32xf32> to vector<10x32xf32>
      %293 = vector.extract_strided_slice %287 {offsets = [5, 0], sizes = [10, 32], strides = [1, 1]} : vector<36x32xf32> to vector<10x32xf32>
      %294 = vector.extract_strided_slice %287 {offsets = [6, 0], sizes = [10, 32], strides = [1, 1]} : vector<36x32xf32> to vector<10x32xf32>
      %295 = vector.extract_strided_slice %287 {offsets = [7, 0], sizes = [10, 32], strides = [1, 1]} : vector<36x32xf32> to vector<10x32xf32>
      %296 = vector.extract_strided_slice %287 {offsets = [8, 0], sizes = [10, 32], strides = [1, 1]} : vector<36x32xf32> to vector<10x32xf32>
      %297 = vector.extract_strided_slice %287 {offsets = [9, 0], sizes = [10, 32], strides = [1, 1]} : vector<36x32xf32> to vector<10x32xf32>
      %298 = vector.extract_strided_slice %287 {offsets = [10, 0], sizes = [10, 32], strides = [1, 1]} : vector<36x32xf32> to vector<10x32xf32>
      %299 = vector.extract_strided_slice %287 {offsets = [11, 0], sizes = [10, 32], strides = [1, 1]} : vector<36x32xf32> to vector<10x32xf32>
      %300 = vector.extract_strided_slice %287 {offsets = [12, 0], sizes = [10, 32], strides = [1, 1]} : vector<36x32xf32> to vector<10x32xf32>
      %301 = vector.extract_strided_slice %287 {offsets = [13, 0], sizes = [10, 32], strides = [1, 1]} : vector<36x32xf32> to vector<10x32xf32>
      %302 = vector.extract_strided_slice %287 {offsets = [14, 0], sizes = [10, 32], strides = [1, 1]} : vector<36x32xf32> to vector<10x32xf32>
      %303 = vector.extract_strided_slice %287 {offsets = [15, 0], sizes = [10, 32], strides = [1, 1]} : vector<36x32xf32> to vector<10x32xf32>
      %304 = vector.extract_strided_slice %287 {offsets = [16, 0], sizes = [10, 32], strides = [1, 1]} : vector<36x32xf32> to vector<10x32xf32>
      %305 = vector.extract_strided_slice %287 {offsets = [17, 0], sizes = [10, 32], strides = [1, 1]} : vector<36x32xf32> to vector<10x32xf32>
      %306 = vector.extract_strided_slice %287 {offsets = [18, 0], sizes = [10, 32], strides = [1, 1]} : vector<36x32xf32> to vector<10x32xf32>
      %307 = vector.extract_strided_slice %287 {offsets = [19, 0], sizes = [10, 32], strides = [1, 1]} : vector<36x32xf32> to vector<10x32xf32>
      %308 = vector.extract_strided_slice %287 {offsets = [20, 0], sizes = [10, 32], strides = [1, 1]} : vector<36x32xf32> to vector<10x32xf32>
      %309 = vector.extract_strided_slice %287 {offsets = [21, 0], sizes = [10, 32], strides = [1, 1]} : vector<36x32xf32> to vector<10x32xf32>
      %310 = vector.extract_strided_slice %287 {offsets = [22, 0], sizes = [10, 32], strides = [1, 1]} : vector<36x32xf32> to vector<10x32xf32>
      %311 = vector.extract_strided_slice %287 {offsets = [23, 0], sizes = [10, 32], strides = [1, 1]} : vector<36x32xf32> to vector<10x32xf32>
      %312 = vector.extract_strided_slice %287 {offsets = [24, 0], sizes = [10, 32], strides = [1, 1]} : vector<36x32xf32> to vector<10x32xf32>
      %313 = vector.extract_strided_slice %287 {offsets = [25, 0], sizes = [10, 32], strides = [1, 1]} : vector<36x32xf32> to vector<10x32xf32>
      %314 = vector.extract_strided_slice %287 {offsets = [26, 0], sizes = [10, 32], strides = [1, 1]} : vector<36x32xf32> to vector<10x32xf32>
      %315 = tpu.concatenate %288, %289, %290, %291, %292, %293, %294, %295, %296, %297, %298, %299, %300, %301, %302, %303 in 1 : vector<10x32xf32>, vector<10x32xf32>, vector<10x32xf32>, vector<10x32xf32>, vector<10x32xf32>, vector<10x32xf32>, vector<10x32xf32>, vector<10x32xf32>, vector<10x32xf32>, vector<10x32xf32>, vector<10x32xf32>, vector<10x32xf32>, vector<10x32xf32>, vector<10x32xf32>, vector<10x32xf32>, vector<10x32xf32> -> vector<10x512xf32>
      %316 = tpu.concatenate %304, %305, %306, %307, %308, %309, %310, %311, %312, %313, %314 in 1 : vector<10x32xf32>, vector<10x32xf32>, vector<10x32xf32>, vector<10x32xf32>, vector<10x32xf32>, vector<10x32xf32>, vector<10x32xf32>, vector<10x32xf32>, vector<10x32xf32>, vector<10x32xf32>, vector<10x32xf32> -> vector<10x352xf32>
      %317 = tpu.concatenate %315, %316 in 1 : vector<10x512xf32>, vector<10x352xf32> -> vector<10x864xf32>
      %318 = tpu.concatenate %285, %317 in 0 : vector<10x864xf32>, vector<10x864xf32> -> vector<20x864xf32>
      %cst_79 = arith.constant dense<0.000000e+00> : vector<20x32xf32>
      %319 = tpu.matmul %318, %164, %cst_79 {dimension_numbers = #tpu.dot_dimension_numbers<[1], [0], [0], [1], [0, 0, 1, 1], [], []>} : vector<20x864xf32>, vector<864x32xf32>, vector<20x32xf32> -> vector<20x32xf32>
      %320 = vector.broadcast %167 : vector<1x32xf32> to vector<20x32xf32>
      %321 = arith.addf %319, %320 : vector<20x32xf32>
      %322 = vector.broadcast %170 : vector<1x32xf32> to vector<20x32xf32>
      %323 = arith.mulf %321, %322 : vector<20x32xf32>
      %324 = vector.broadcast %173 : vector<1x32xf32> to vector<20x32xf32>
      %325 = arith.addf %323, %324 : vector<20x32xf32>
      %cst_80 = arith.constant 0.000000e+00 : f32
      %326 = vector.broadcast %cst_80 : f32 to vector<20x32xf32>
      %327 = arith.maximumf %325, %326 : vector<20x32xf32>
      %328 = vector.extract_strided_slice %327 {offsets = [0, 0], sizes = [10, 32], strides = [1, 1]} : vector<20x32xf32> to vector<10x32xf32>
      %329 = tpu.concatenate %127, %328, %127 in 0 : vector<13x32xf32>, vector<10x32xf32>, vector<13x32xf32> -> vector<36x32xf32>
      %330 = vector.extract_strided_slice %329 {offsets = [0, 0], sizes = [10, 32], strides = [1, 1]} : vector<36x32xf32> to vector<10x32xf32>
      %331 = vector.extract_strided_slice %329 {offsets = [1, 0], sizes = [10, 32], strides = [1, 1]} : vector<36x32xf32> to vector<10x32xf32>
      %332 = vector.extract_strided_slice %329 {offsets = [2, 0], sizes = [10, 32], strides = [1, 1]} : vector<36x32xf32> to vector<10x32xf32>
      %333 = vector.extract_strided_slice %329 {offsets = [3, 0], sizes = [10, 32], strides = [1, 1]} : vector<36x32xf32> to vector<10x32xf32>
      %334 = vector.extract_strided_slice %329 {offsets = [4, 0], sizes = [10, 32], strides = [1, 1]} : vector<36x32xf32> to vector<10x32xf32>
      %335 = vector.extract_strided_slice %329 {offsets = [5, 0], sizes = [10, 32], strides = [1, 1]} : vector<36x32xf32> to vector<10x32xf32>
      %336 = vector.extract_strided_slice %329 {offsets = [6, 0], sizes = [10, 32], strides = [1, 1]} : vector<36x32xf32> to vector<10x32xf32>
      %337 = vector.extract_strided_slice %329 {offsets = [7, 0], sizes = [10, 32], strides = [1, 1]} : vector<36x32xf32> to vector<10x32xf32>
      %338 = vector.extract_strided_slice %329 {offsets = [8, 0], sizes = [10, 32], strides = [1, 1]} : vector<36x32xf32> to vector<10x32xf32>
      %339 = vector.extract_strided_slice %329 {offsets = [9, 0], sizes = [10, 32], strides = [1, 1]} : vector<36x32xf32> to vector<10x32xf32>
      %340 = vector.extract_strided_slice %329 {offsets = [10, 0], sizes = [10, 32], strides = [1, 1]} : vector<36x32xf32> to vector<10x32xf32>
      %341 = vector.extract_strided_slice %329 {offsets = [11, 0], sizes = [10, 32], strides = [1, 1]} : vector<36x32xf32> to vector<10x32xf32>
      %342 = vector.extract_strided_slice %329 {offsets = [12, 0], sizes = [10, 32], strides = [1, 1]} : vector<36x32xf32> to vector<10x32xf32>
      %343 = vector.extract_strided_slice %329 {offsets = [13, 0], sizes = [10, 32], strides = [1, 1]} : vector<36x32xf32> to vector<10x32xf32>
      %344 = vector.extract_strided_slice %329 {offsets = [14, 0], sizes = [10, 32], strides = [1, 1]} : vector<36x32xf32> to vector<10x32xf32>
      %345 = vector.extract_strided_slice %329 {offsets = [15, 0], sizes = [10, 32], strides = [1, 1]} : vector<36x32xf32> to vector<10x32xf32>
      %346 = vector.extract_strided_slice %329 {offsets = [16, 0], sizes = [10, 32], strides = [1, 1]} : vector<36x32xf32> to vector<10x32xf32>
      %347 = vector.extract_strided_slice %329 {offsets = [17, 0], sizes = [10, 32], strides = [1, 1]} : vector<36x32xf32> to vector<10x32xf32>
      %348 = vector.extract_strided_slice %329 {offsets = [18, 0], sizes = [10, 32], strides = [1, 1]} : vector<36x32xf32> to vector<10x32xf32>
      %349 = vector.extract_strided_slice %329 {offsets = [19, 0], sizes = [10, 32], strides = [1, 1]} : vector<36x32xf32> to vector<10x32xf32>
      %350 = vector.extract_strided_slice %329 {offsets = [20, 0], sizes = [10, 32], strides = [1, 1]} : vector<36x32xf32> to vector<10x32xf32>
      %351 = vector.extract_strided_slice %329 {offsets = [21, 0], sizes = [10, 32], strides = [1, 1]} : vector<36x32xf32> to vector<10x32xf32>
      %352 = vector.extract_strided_slice %329 {offsets = [22, 0], sizes = [10, 32], strides = [1, 1]} : vector<36x32xf32> to vector<10x32xf32>
      %353 = vector.extract_strided_slice %329 {offsets = [23, 0], sizes = [10, 32], strides = [1, 1]} : vector<36x32xf32> to vector<10x32xf32>
      %354 = vector.extract_strided_slice %329 {offsets = [24, 0], sizes = [10, 32], strides = [1, 1]} : vector<36x32xf32> to vector<10x32xf32>
      %355 = vector.extract_strided_slice %329 {offsets = [25, 0], sizes = [10, 32], strides = [1, 1]} : vector<36x32xf32> to vector<10x32xf32>
      %356 = vector.extract_strided_slice %329 {offsets = [26, 0], sizes = [10, 32], strides = [1, 1]} : vector<36x32xf32> to vector<10x32xf32>
      %357 = tpu.concatenate %330, %331, %332, %333, %334, %335, %336, %337, %338, %339, %340, %341, %342, %343, %344, %345 in 1 : vector<10x32xf32>, vector<10x32xf32>, vector<10x32xf32>, vector<10x32xf32>, vector<10x32xf32>, vector<10x32xf32>, vector<10x32xf32>, vector<10x32xf32>, vector<10x32xf32>, vector<10x32xf32>, vector<10x32xf32>, vector<10x32xf32>, vector<10x32xf32>, vector<10x32xf32>, vector<10x32xf32>, vector<10x32xf32> -> vector<10x512xf32>
      %358 = tpu.concatenate %346, %347, %348, %349, %350, %351, %352, %353, %354, %355, %356 in 1 : vector<10x32xf32>, vector<10x32xf32>, vector<10x32xf32>, vector<10x32xf32>, vector<10x32xf32>, vector<10x32xf32>, vector<10x32xf32>, vector<10x32xf32>, vector<10x32xf32>, vector<10x32xf32>, vector<10x32xf32> -> vector<10x352xf32>
      %359 = tpu.concatenate %357, %358 in 1 : vector<10x512xf32>, vector<10x352xf32> -> vector<10x864xf32>
      %360 = vector.extract_strided_slice %327 {offsets = [10, 0], sizes = [10, 32], strides = [1, 1]} : vector<20x32xf32> to vector<10x32xf32>
      %361 = tpu.concatenate %127, %360, %127 in 0 : vector<13x32xf32>, vector<10x32xf32>, vector<13x32xf32> -> vector<36x32xf32>
      %362 = vector.extract_strided_slice %361 {offsets = [0, 0], sizes = [10, 32], strides = [1, 1]} : vector<36x32xf32> to vector<10x32xf32>
      %363 = vector.extract_strided_slice %361 {offsets = [1, 0], sizes = [10, 32], strides = [1, 1]} : vector<36x32xf32> to vector<10x32xf32>
      %364 = vector.extract_strided_slice %361 {offsets = [2, 0], sizes = [10, 32], strides = [1, 1]} : vector<36x32xf32> to vector<10x32xf32>
      %365 = vector.extract_strided_slice %361 {offsets = [3, 0], sizes = [10, 32], strides = [1, 1]} : vector<36x32xf32> to vector<10x32xf32>
      %366 = vector.extract_strided_slice %361 {offsets = [4, 0], sizes = [10, 32], strides = [1, 1]} : vector<36x32xf32> to vector<10x32xf32>
      %367 = vector.extract_strided_slice %361 {offsets = [5, 0], sizes = [10, 32], strides = [1, 1]} : vector<36x32xf32> to vector<10x32xf32>
      %368 = vector.extract_strided_slice %361 {offsets = [6, 0], sizes = [10, 32], strides = [1, 1]} : vector<36x32xf32> to vector<10x32xf32>
      %369 = vector.extract_strided_slice %361 {offsets = [7, 0], sizes = [10, 32], strides = [1, 1]} : vector<36x32xf32> to vector<10x32xf32>
      %370 = vector.extract_strided_slice %361 {offsets = [8, 0], sizes = [10, 32], strides = [1, 1]} : vector<36x32xf32> to vector<10x32xf32>
      %371 = vector.extract_strided_slice %361 {offsets = [9, 0], sizes = [10, 32], strides = [1, 1]} : vector<36x32xf32> to vector<10x32xf32>
      %372 = vector.extract_strided_slice %361 {offsets = [10, 0], sizes = [10, 32], strides = [1, 1]} : vector<36x32xf32> to vector<10x32xf32>
      %373 = vector.extract_strided_slice %361 {offsets = [11, 0], sizes = [10, 32], strides = [1, 1]} : vector<36x32xf32> to vector<10x32xf32>
      %374 = vector.extract_strided_slice %361 {offsets = [12, 0], sizes = [10, 32], strides = [1, 1]} : vector<36x32xf32> to vector<10x32xf32>
      %375 = vector.extract_strided_slice %361 {offsets = [13, 0], sizes = [10, 32], strides = [1, 1]} : vector<36x32xf32> to vector<10x32xf32>
      %376 = vector.extract_strided_slice %361 {offsets = [14, 0], sizes = [10, 32], strides = [1, 1]} : vector<36x32xf32> to vector<10x32xf32>
      %377 = vector.extract_strided_slice %361 {offsets = [15, 0], sizes = [10, 32], strides = [1, 1]} : vector<36x32xf32> to vector<10x32xf32>
      %378 = vector.extract_strided_slice %361 {offsets = [16, 0], sizes = [10, 32], strides = [1, 1]} : vector<36x32xf32> to vector<10x32xf32>
      %379 = vector.extract_strided_slice %361 {offsets = [17, 0], sizes = [10, 32], strides = [1, 1]} : vector<36x32xf32> to vector<10x32xf32>
      %380 = vector.extract_strided_slice %361 {offsets = [18, 0], sizes = [10, 32], strides = [1, 1]} : vector<36x32xf32> to vector<10x32xf32>
      %381 = vector.extract_strided_slice %361 {offsets = [19, 0], sizes = [10, 32], strides = [1, 1]} : vector<36x32xf32> to vector<10x32xf32>
      %382 = vector.extract_strided_slice %361 {offsets = [20, 0], sizes = [10, 32], strides = [1, 1]} : vector<36x32xf32> to vector<10x32xf32>
      %383 = vector.extract_strided_slice %361 {offsets = [21, 0], sizes = [10, 32], strides = [1, 1]} : vector<36x32xf32> to vector<10x32xf32>
      %384 = vector.extract_strided_slice %361 {offsets = [22, 0], sizes = [10, 32], strides = [1, 1]} : vector<36x32xf32> to vector<10x32xf32>
      %385 = vector.extract_strided_slice %361 {offsets = [23, 0], sizes = [10, 32], strides = [1, 1]} : vector<36x32xf32> to vector<10x32xf32>
      %386 = vector.extract_strided_slice %361 {offsets = [24, 0], sizes = [10, 32], strides = [1, 1]} : vector<36x32xf32> to vector<10x32xf32>
      %387 = vector.extract_strided_slice %361 {offsets = [25, 0], sizes = [10, 32], strides = [1, 1]} : vector<36x32xf32> to vector<10x32xf32>
      %388 = vector.extract_strided_slice %361 {offsets = [26, 0], sizes = [10, 32], strides = [1, 1]} : vector<36x32xf32> to vector<10x32xf32>
      %389 = tpu.concatenate %362, %363, %364, %365, %366, %367, %368, %369, %370, %371, %372, %373, %374, %375, %376, %377 in 1 : vector<10x32xf32>, vector<10x32xf32>, vector<10x32xf32>, vector<10x32xf32>, vector<10x32xf32>, vector<10x32xf32>, vector<10x32xf32>, vector<10x32xf32>, vector<10x32xf32>, vector<10x32xf32>, vector<10x32xf32>, vector<10x32xf32>, vector<10x32xf32>, vector<10x32xf32>, vector<10x32xf32>, vector<10x32xf32> -> vector<10x512xf32>
      %390 = tpu.concatenate %378, %379, %380, %381, %382, %383, %384, %385, %386, %387, %388 in 1 : vector<10x32xf32>, vector<10x32xf32>, vector<10x32xf32>, vector<10x32xf32>, vector<10x32xf32>, vector<10x32xf32>, vector<10x32xf32>, vector<10x32xf32>, vector<10x32xf32>, vector<10x32xf32>, vector<10x32xf32> -> vector<10x352xf32>
      %391 = tpu.concatenate %389, %390 in 1 : vector<10x512xf32>, vector<10x352xf32> -> vector<10x864xf32>
      %392 = tpu.concatenate %359, %391 in 0 : vector<10x864xf32>, vector<10x864xf32> -> vector<20x864xf32>
      %cst_81 = arith.constant dense<0.000000e+00> : vector<20x32xf32>
      %393 = tpu.matmul %392, %158, %cst_81 {dimension_numbers = #tpu.dot_dimension_numbers<[1], [0], [0], [1], [0, 0, 1, 1], [], []>} : vector<20x864xf32>, vector<864x32xf32>, vector<20x32xf32> -> vector<20x32xf32>
      %394 = vector.broadcast %161 : vector<1x32xf32> to vector<20x32xf32>
      %395 = arith.addf %393, %394 : vector<20x32xf32>
      %396 = vector.broadcast %170 : vector<1x32xf32> to vector<20x32xf32>
      %397 = arith.mulf %395, %396 : vector<20x32xf32>
      %398 = vector.broadcast %173 : vector<1x32xf32> to vector<20x32xf32>
      %399 = arith.addf %397, %398 : vector<20x32xf32>
      %cst_82 = arith.constant 0.000000e+00 : f32
      %400 = vector.broadcast %cst_82 : f32 to vector<20x32xf32>
      %401 = arith.maximumf %399, %400 : vector<20x32xf32>
      %402 = vector.extract_strided_slice %401 {offsets = [0, 0], sizes = [10, 32], strides = [1, 1]} : vector<20x32xf32> to vector<10x32xf32>
      %403 = tpu.concatenate %127, %402, %127 in 0 : vector<13x32xf32>, vector<10x32xf32>, vector<13x32xf32> -> vector<36x32xf32>
      %404 = vector.extract_strided_slice %403 {offsets = [0, 0], sizes = [10, 32], strides = [1, 1]} : vector<36x32xf32> to vector<10x32xf32>
      %405 = vector.extract_strided_slice %403 {offsets = [1, 0], sizes = [10, 32], strides = [1, 1]} : vector<36x32xf32> to vector<10x32xf32>
      %406 = vector.extract_strided_slice %403 {offsets = [2, 0], sizes = [10, 32], strides = [1, 1]} : vector<36x32xf32> to vector<10x32xf32>
      %407 = vector.extract_strided_slice %403 {offsets = [3, 0], sizes = [10, 32], strides = [1, 1]} : vector<36x32xf32> to vector<10x32xf32>
      %408 = vector.extract_strided_slice %403 {offsets = [4, 0], sizes = [10, 32], strides = [1, 1]} : vector<36x32xf32> to vector<10x32xf32>
      %409 = vector.extract_strided_slice %403 {offsets = [5, 0], sizes = [10, 32], strides = [1, 1]} : vector<36x32xf32> to vector<10x32xf32>
      %410 = vector.extract_strided_slice %403 {offsets = [6, 0], sizes = [10, 32], strides = [1, 1]} : vector<36x32xf32> to vector<10x32xf32>
      %411 = vector.extract_strided_slice %403 {offsets = [7, 0], sizes = [10, 32], strides = [1, 1]} : vector<36x32xf32> to vector<10x32xf32>
      %412 = vector.extract_strided_slice %403 {offsets = [8, 0], sizes = [10, 32], strides = [1, 1]} : vector<36x32xf32> to vector<10x32xf32>
      %413 = vector.extract_strided_slice %403 {offsets = [9, 0], sizes = [10, 32], strides = [1, 1]} : vector<36x32xf32> to vector<10x32xf32>
      %414 = vector.extract_strided_slice %403 {offsets = [10, 0], sizes = [10, 32], strides = [1, 1]} : vector<36x32xf32> to vector<10x32xf32>
      %415 = vector.extract_strided_slice %403 {offsets = [11, 0], sizes = [10, 32], strides = [1, 1]} : vector<36x32xf32> to vector<10x32xf32>
      %416 = vector.extract_strided_slice %403 {offsets = [12, 0], sizes = [10, 32], strides = [1, 1]} : vector<36x32xf32> to vector<10x32xf32>
      %417 = vector.extract_strided_slice %403 {offsets = [13, 0], sizes = [10, 32], strides = [1, 1]} : vector<36x32xf32> to vector<10x32xf32>
      %418 = vector.extract_strided_slice %403 {offsets = [14, 0], sizes = [10, 32], strides = [1, 1]} : vector<36x32xf32> to vector<10x32xf32>
      %419 = vector.extract_strided_slice %403 {offsets = [15, 0], sizes = [10, 32], strides = [1, 1]} : vector<36x32xf32> to vector<10x32xf32>
      %420 = vector.extract_strided_slice %403 {offsets = [16, 0], sizes = [10, 32], strides = [1, 1]} : vector<36x32xf32> to vector<10x32xf32>
      %421 = vector.extract_strided_slice %403 {offsets = [17, 0], sizes = [10, 32], strides = [1, 1]} : vector<36x32xf32> to vector<10x32xf32>
      %422 = vector.extract_strided_slice %403 {offsets = [18, 0], sizes = [10, 32], strides = [1, 1]} : vector<36x32xf32> to vector<10x32xf32>
      %423 = vector.extract_strided_slice %403 {offsets = [19, 0], sizes = [10, 32], strides = [1, 1]} : vector<36x32xf32> to vector<10x32xf32>
      %424 = vector.extract_strided_slice %403 {offsets = [20, 0], sizes = [10, 32], strides = [1, 1]} : vector<36x32xf32> to vector<10x32xf32>
      %425 = vector.extract_strided_slice %403 {offsets = [21, 0], sizes = [10, 32], strides = [1, 1]} : vector<36x32xf32> to vector<10x32xf32>
      %426 = vector.extract_strided_slice %403 {offsets = [22, 0], sizes = [10, 32], strides = [1, 1]} : vector<36x32xf32> to vector<10x32xf32>
      %427 = vector.extract_strided_slice %403 {offsets = [23, 0], sizes = [10, 32], strides = [1, 1]} : vector<36x32xf32> to vector<10x32xf32>
      %428 = vector.extract_strided_slice %403 {offsets = [24, 0], sizes = [10, 32], strides = [1, 1]} : vector<36x32xf32> to vector<10x32xf32>
      %429 = vector.extract_strided_slice %403 {offsets = [25, 0], sizes = [10, 32], strides = [1, 1]} : vector<36x32xf32> to vector<10x32xf32>
      %430 = vector.extract_strided_slice %403 {offsets = [26, 0], sizes = [10, 32], strides = [1, 1]} : vector<36x32xf32> to vector<10x32xf32>
      %431 = tpu.concatenate %404, %405, %406, %407, %408, %409, %410, %411, %412, %413, %414, %415, %416, %417, %418, %419 in 1 : vector<10x32xf32>, vector<10x32xf32>, vector<10x32xf32>, vector<10x32xf32>, vector<10x32xf32>, vector<10x32xf32>, vector<10x32xf32>, vector<10x32xf32>, vector<10x32xf32>, vector<10x32xf32>, vector<10x32xf32>, vector<10x32xf32>, vector<10x32xf32>, vector<10x32xf32>, vector<10x32xf32>, vector<10x32xf32> -> vector<10x512xf32>
      %432 = tpu.concatenate %420, %421, %422, %423, %424, %425, %426, %427, %428, %429, %430 in 1 : vector<10x32xf32>, vector<10x32xf32>, vector<10x32xf32>, vector<10x32xf32>, vector<10x32xf32>, vector<10x32xf32>, vector<10x32xf32>, vector<10x32xf32>, vector<10x32xf32>, vector<10x32xf32>, vector<10x32xf32> -> vector<10x352xf32>
      %433 = tpu.concatenate %431, %432 in 1 : vector<10x512xf32>, vector<10x352xf32> -> vector<10x864xf32>
      %434 = vector.extract_strided_slice %401 {offsets = [10, 0], sizes = [10, 32], strides = [1, 1]} : vector<20x32xf32> to vector<10x32xf32>
      %435 = tpu.concatenate %127, %434, %127 in 0 : vector<13x32xf32>, vector<10x32xf32>, vector<13x32xf32> -> vector<36x32xf32>
      %436 = vector.extract_strided_slice %435 {offsets = [0, 0], sizes = [10, 32], strides = [1, 1]} : vector<36x32xf32> to vector<10x32xf32>
      %437 = vector.extract_strided_slice %435 {offsets = [1, 0], sizes = [10, 32], strides = [1, 1]} : vector<36x32xf32> to vector<10x32xf32>
      %438 = vector.extract_strided_slice %435 {offsets = [2, 0], sizes = [10, 32], strides = [1, 1]} : vector<36x32xf32> to vector<10x32xf32>
      %439 = vector.extract_strided_slice %435 {offsets = [3, 0], sizes = [10, 32], strides = [1, 1]} : vector<36x32xf32> to vector<10x32xf32>
      %440 = vector.extract_strided_slice %435 {offsets = [4, 0], sizes = [10, 32], strides = [1, 1]} : vector<36x32xf32> to vector<10x32xf32>
      %441 = vector.extract_strided_slice %435 {offsets = [5, 0], sizes = [10, 32], strides = [1, 1]} : vector<36x32xf32> to vector<10x32xf32>
      %442 = vector.extract_strided_slice %435 {offsets = [6, 0], sizes = [10, 32], strides = [1, 1]} : vector<36x32xf32> to vector<10x32xf32>
      %443 = vector.extract_strided_slice %435 {offsets = [7, 0], sizes = [10, 32], strides = [1, 1]} : vector<36x32xf32> to vector<10x32xf32>
      %444 = vector.extract_strided_slice %435 {offsets = [8, 0], sizes = [10, 32], strides = [1, 1]} : vector<36x32xf32> to vector<10x32xf32>
      %445 = vector.extract_strided_slice %435 {offsets = [9, 0], sizes = [10, 32], strides = [1, 1]} : vector<36x32xf32> to vector<10x32xf32>
      %446 = vector.extract_strided_slice %435 {offsets = [10, 0], sizes = [10, 32], strides = [1, 1]} : vector<36x32xf32> to vector<10x32xf32>
      %447 = vector.extract_strided_slice %435 {offsets = [11, 0], sizes = [10, 32], strides = [1, 1]} : vector<36x32xf32> to vector<10x32xf32>
      %448 = vector.extract_strided_slice %435 {offsets = [12, 0], sizes = [10, 32], strides = [1, 1]} : vector<36x32xf32> to vector<10x32xf32>
      %449 = vector.extract_strided_slice %435 {offsets = [13, 0], sizes = [10, 32], strides = [1, 1]} : vector<36x32xf32> to vector<10x32xf32>
      %450 = vector.extract_strided_slice %435 {offsets = [14, 0], sizes = [10, 32], strides = [1, 1]} : vector<36x32xf32> to vector<10x32xf32>
      %451 = vector.extract_strided_slice %435 {offsets = [15, 0], sizes = [10, 32], strides = [1, 1]} : vector<36x32xf32> to vector<10x32xf32>
      %452 = vector.extract_strided_slice %435 {offsets = [16, 0], sizes = [10, 32], strides = [1, 1]} : vector<36x32xf32> to vector<10x32xf32>
      %453 = vector.extract_strided_slice %435 {offsets = [17, 0], sizes = [10, 32], strides = [1, 1]} : vector<36x32xf32> to vector<10x32xf32>
      %454 = vector.extract_strided_slice %435 {offsets = [18, 0], sizes = [10, 32], strides = [1, 1]} : vector<36x32xf32> to vector<10x32xf32>
      %455 = vector.extract_strided_slice %435 {offsets = [19, 0], sizes = [10, 32], strides = [1, 1]} : vector<36x32xf32> to vector<10x32xf32>
      %456 = vector.extract_strided_slice %435 {offsets = [20, 0], sizes = [10, 32], strides = [1, 1]} : vector<36x32xf32> to vector<10x32xf32>
      %457 = vector.extract_strided_slice %435 {offsets = [21, 0], sizes = [10, 32], strides = [1, 1]} : vector<36x32xf32> to vector<10x32xf32>
      %458 = vector.extract_strided_slice %435 {offsets = [22, 0], sizes = [10, 32], strides = [1, 1]} : vector<36x32xf32> to vector<10x32xf32>
      %459 = vector.extract_strided_slice %435 {offsets = [23, 0], sizes = [10, 32], strides = [1, 1]} : vector<36x32xf32> to vector<10x32xf32>
      %460 = vector.extract_strided_slice %435 {offsets = [24, 0], sizes = [10, 32], strides = [1, 1]} : vector<36x32xf32> to vector<10x32xf32>
      %461 = vector.extract_strided_slice %435 {offsets = [25, 0], sizes = [10, 32], strides = [1, 1]} : vector<36x32xf32> to vector<10x32xf32>
      %462 = vector.extract_strided_slice %435 {offsets = [26, 0], sizes = [10, 32], strides = [1, 1]} : vector<36x32xf32> to vector<10x32xf32>
      %463 = tpu.concatenate %436, %437, %438, %439, %440, %441, %442, %443, %444, %445, %446, %447, %448, %449, %450, %451 in 1 : vector<10x32xf32>, vector<10x32xf32>, vector<10x32xf32>, vector<10x32xf32>, vector<10x32xf32>, vector<10x32xf32>, vector<10x32xf32>, vector<10x32xf32>, vector<10x32xf32>, vector<10x32xf32>, vector<10x32xf32>, vector<10x32xf32>, vector<10x32xf32>, vector<10x32xf32>, vector<10x32xf32>, vector<10x32xf32> -> vector<10x512xf32>
      %464 = tpu.concatenate %452, %453, %454, %455, %456, %457, %458, %459, %460, %461, %462 in 1 : vector<10x32xf32>, vector<10x32xf32>, vector<10x32xf32>, vector<10x32xf32>, vector<10x32xf32>, vector<10x32xf32>, vector<10x32xf32>, vector<10x32xf32>, vector<10x32xf32>, vector<10x32xf32>, vector<10x32xf32> -> vector<10x352xf32>
      %465 = tpu.concatenate %463, %464 in 1 : vector<10x512xf32>, vector<10x352xf32> -> vector<10x864xf32>
      %466 = tpu.concatenate %433, %465 in 0 : vector<10x864xf32>, vector<10x864xf32> -> vector<20x864xf32>
      %cst_83 = arith.constant dense<0.000000e+00> : vector<20x32xf32>
      %467 = tpu.matmul %466, %164, %cst_83 {dimension_numbers = #tpu.dot_dimension_numbers<[1], [0], [0], [1], [0, 0, 1, 1], [], []>} : vector<20x864xf32>, vector<864x32xf32>, vector<20x32xf32> -> vector<20x32xf32>
      %468 = vector.broadcast %167 : vector<1x32xf32> to vector<20x32xf32>
      %469 = arith.addf %467, %468 : vector<20x32xf32>
      %cst_84 = arith.constant 3.000000e-01 : f32
      %470 = vector.broadcast %cst_84 : f32 to vector<20x32xf32>
      %471 = arith.mulf %470, %469 : vector<20x32xf32>
      %472 = arith.addf %arg14, %471 : vector<20x32xf32>
      scf.yield %472 : vector<20x32xf32>
    }
    %c20_i32_54 = arith.constant 20 : i32
    %130 = vector.extract_strided_slice %129 {offsets = [0, 0], sizes = [1, 32], strides = [1, 1]} : vector<20x32xf32> to vector<1x32xf32>
    %131 = vector.extract_strided_slice %129 {offsets = [1, 0], sizes = [1, 32], strides = [1, 1]} : vector<20x32xf32> to vector<1x32xf32>
    %132 = vector.extract_strided_slice %129 {offsets = [2, 0], sizes = [1, 32], strides = [1, 1]} : vector<20x32xf32> to vector<1x32xf32>
    %133 = vector.extract_strided_slice %129 {offsets = [3, 0], sizes = [1, 32], strides = [1, 1]} : vector<20x32xf32> to vector<1x32xf32>
    %134 = vector.extract_strided_slice %129 {offsets = [4, 0], sizes = [1, 32], strides = [1, 1]} : vector<20x32xf32> to vector<1x32xf32>
    %135 = vector.extract_strided_slice %129 {offsets = [5, 0], sizes = [1, 32], strides = [1, 1]} : vector<20x32xf32> to vector<1x32xf32>
    %136 = vector.extract_strided_slice %129 {offsets = [6, 0], sizes = [1, 32], strides = [1, 1]} : vector<20x32xf32> to vector<1x32xf32>
    %137 = vector.extract_strided_slice %129 {offsets = [7, 0], sizes = [1, 32], strides = [1, 1]} : vector<20x32xf32> to vector<1x32xf32>
    %138 = vector.extract_strided_slice %129 {offsets = [8, 0], sizes = [1, 32], strides = [1, 1]} : vector<20x32xf32> to vector<1x32xf32>
    %139 = vector.extract_strided_slice %129 {offsets = [9, 0], sizes = [1, 32], strides = [1, 1]} : vector<20x32xf32> to vector<1x32xf32>
    %140 = tpu.concatenate %130, %131, %132, %133, %134, %135, %136, %137, %138, %139 in 1 : vector<1x32xf32>, vector<1x32xf32>, vector<1x32xf32>, vector<1x32xf32>, vector<1x32xf32>, vector<1x32xf32>, vector<1x32xf32>, vector<1x32xf32>, vector<1x32xf32>, vector<1x32xf32> -> vector<1x320xf32>
    %141 = vector.extract_strided_slice %129 {offsets = [10, 0], sizes = [1, 32], strides = [1, 1]} : vector<20x32xf32> to vector<1x32xf32>
    %142 = vector.extract_strided_slice %129 {offsets = [11, 0], sizes = [1, 32], strides = [1, 1]} : vector<20x32xf32> to vector<1x32xf32>
    %143 = vector.extract_strided_slice %129 {offsets = [12, 0], sizes = [1, 32], strides = [1, 1]} : vector<20x32xf32> to vector<1x32xf32>
    %144 = vector.extract_strided_slice %129 {offsets = [13, 0], sizes = [1, 32], strides = [1, 1]} : vector<20x32xf32> to vector<1x32xf32>
    %145 = vector.extract_strided_slice %129 {offsets = [14, 0], sizes = [1, 32], strides = [1, 1]} : vector<20x32xf32> to vector<1x32xf32>
    %146 = vector.extract_strided_slice %129 {offsets = [15, 0], sizes = [1, 32], strides = [1, 1]} : vector<20x32xf32> to vector<1x32xf32>
    %147 = vector.extract_strided_slice %129 {offsets = [16, 0], sizes = [1, 32], strides = [1, 1]} : vector<20x32xf32> to vector<1x32xf32>
    %148 = vector.extract_strided_slice %129 {offsets = [17, 0], sizes = [1, 32], strides = [1, 1]} : vector<20x32xf32> to vector<1x32xf32>
    %149 = vector.extract_strided_slice %129 {offsets = [18, 0], sizes = [1, 32], strides = [1, 1]} : vector<20x32xf32> to vector<1x32xf32>
    %150 = vector.extract_strided_slice %129 {offsets = [19, 0], sizes = [1, 32], strides = [1, 1]} : vector<20x32xf32> to vector<1x32xf32>
    %151 = tpu.concatenate %141, %142, %143, %144, %145, %146, %147, %148, %149, %150 in 1 : vector<1x32xf32>, vector<1x32xf32>, vector<1x32xf32>, vector<1x32xf32>, vector<1x32xf32>, vector<1x32xf32>, vector<1x32xf32>, vector<1x32xf32>, vector<1x32xf32>, vector<1x32xf32> -> vector<1x320xf32>
    %152 = tpu.concatenate %140, %151 in 0 : vector<1x320xf32>, vector<1x320xf32> -> vector<2x320xf32>
    %c0_55 = arith.constant 0 : index
    %c0_56 = arith.constant 0 : index
    %c0_57 = arith.constant 0 : index
    %153 = vector.load %arg12[%c0_55, %c0_56, %c0_57] : memref<1x2x320xf32, #tpu.memory_space<vmem>>, vector<1x2x320xf32>
    %154 = vector.shape_cast %153 : vector<1x2x320xf32> to vector<2x320xf32>
    %155 = vector.shape_cast %152 : vector<2x320xf32> to vector<1x2x320xf32>
    tpu.vector_store %arg12[%c0_55, %c0_56, %c0_57], %155 {strides = array<i32>} : memref<1x2x320xf32, #tpu.memory_space<vmem>>, vector<1x2x320xf32>,
    return
  }
  func.func @transform_0(%arg0: i32) -> (i32, i32, i32, i32) {
    %c0_i32 = arith.constant 0 : i32
    %c0_i32_0 = arith.constant 0 : i32
    %c0_i32_1 = arith.constant 0 : i32
    %c0_i32_2 = arith.constant 0 : i32
    %c0_i32_3 = arith.constant 0 : i32
    return %c0_i32, %c0_i32_0, %c0_i32_1, %c0_i32_2 : i32, i32, i32, i32
  }
  func.func @transform_1(%arg0: i32) -> (i32, i32, i32) {
    %c0_i32 = arith.constant 0 : i32
    %c0_i32_0 = arith.constant 0 : i32
    %c0_i32_1 = arith.constant 0 : i32
    %c0_i32_2 = arith.constant 0 : i32
    return %c0_i32, %c0_i32_0, %c0_i32_1 : i32, i32, i32
  }
  func.func @transform_2(%arg0: i32) -> (i32, i32, i32) {
    %c0_i32 = arith.constant 0 : i32
    %c0_i32_0 = arith.constant 0 : i32
    %c0_i32_1 = arith.constant 0 : i32
    %c0_i32_2 = arith.constant 0 : i32
    return %c0_i32, %c0_i32_0, %c0_i32_1 : i32, i32, i32
  }
  func.func @transform_3(%arg0: i32) -> (i32, i32, i32) {
    %c0_i32 = arith.constant 0 : i32
    %c0_i32_0 = arith.constant 0 : i32
    %c0_i32_1 = arith.constant 0 : i32
    return %arg0, %c0_i32, %c0_i32_0 : i32, i32, i32
  }
  func.func @transform_4(%arg0: i32) -> (i32, i32, i32) {
    %c0_i32 = arith.constant 0 : i32
    %c0_i32_0 = arith.constant 0 : i32
    %c0_i32_1 = arith.constant 0 : i32
    return %arg0, %c0_i32, %c0_i32_0 : i32, i32, i32
  }
  func.func @transform_5(%arg0: i32) -> (i32, i32, i32, i32) {
    %c0_i32 = arith.constant 0 : i32
    %c0_i32_0 = arith.constant 0 : i32
    %c0_i32_1 = arith.constant 0 : i32
    %c0_i32_2 = arith.constant 0 : i32
    return %arg0, %c0_i32, %c0_i32_0, %c0_i32_1 : i32, i32, i32, i32
  }
  func.func @transform_6(%arg0: i32) -> (i32, i32, i32, i32) {
    %c0_i32 = arith.constant 0 : i32
    %c0_i32_0 = arith.constant 0 : i32
    %c0_i32_1 = arith.constant 0 : i32
    %c0_i32_2 = arith.constant 0 : i32
    return %arg0, %c0_i32, %c0_i32_0, %c0_i32_1 : i32, i32, i32, i32
  }
  func.func @transform_7(%arg0: i32) -> (i32, i32, i32, i32) {
    %c0_i32 = arith.constant 0 : i32
    %c0_i32_0 = arith.constant 0 : i32
    %c0_i32_1 = arith.constant 0 : i32
    %c0_i32_2 = arith.constant 0 : i32
    return %arg0, %c0_i32, %c0_i32_0, %c0_i32_1 : i32, i32, i32, i32
  }
  func.func @transform_8(%arg0: i32) -> (i32, i32, i32, i32) {
    %c0_i32 = arith.constant 0 : i32
    %c0_i32_0 = arith.constant 0 : i32
    %c0_i32_1 = arith.constant 0 : i32
    %c0_i32_2 = arith.constant 0 : i32
    return %arg0, %c0_i32, %c0_i32_0, %c0_i32_1 : i32, i32, i32, i32
  }
  func.func @transform_9(%arg0: i32) -> (i32, i32, i32, i32) {
    %c0_i32 = arith.constant 0 : i32
    %c0_i32_0 = arith.constant 0 : i32
    %c0_i32_1 = arith.constant 0 : i32
    %c0_i32_2 = arith.constant 0 : i32
    return %arg0, %c0_i32, %c0_i32_0, %c0_i32_1 : i32, i32, i32, i32
  }
  func.func @transform_10(%arg0: i32) -> (i32, i32, i32, i32) {
    %c0_i32 = arith.constant 0 : i32
    %c0_i32_0 = arith.constant 0 : i32
    %c0_i32_1 = arith.constant 0 : i32
    %c0_i32_2 = arith.constant 0 : i32
    return %arg0, %c0_i32, %c0_i32_0, %c0_i32_1 : i32, i32, i32, i32
  }
  func.func @transform_11(%arg0: i32) -> (i32, i32, i32) {
    %c0_i32 = arith.constant 0 : i32
    %c0_i32_0 = arith.constant 0 : i32
    %c0_i32_1 = arith.constant 0 : i32
    return %arg0, %c0_i32, %c0_i32_0 : i32, i32, i32
  }
}

module attributes {stable_mosaic.version = 11 : i64} {
  func.func @_mlp_head_kernel(%arg0: memref<2x2x320xf32, #tpu.memory_space<vmem>>, %arg1: memref<320x64xf32, #tpu.memory_space<vmem>>, %arg2: memref<1x64xf32, #tpu.memory_space<vmem>>, %arg3: memref<39x64x64xf32, #tpu.memory_space<vmem>>, %arg4: memref<39x1x64xf32, #tpu.memory_space<vmem>>, %arg5: memref<39x1x64xf32, #tpu.memory_space<vmem>>, %arg6: memref<39x1x64xf32, #tpu.memory_space<vmem>>, %arg7: memref<64x512xf32, #tpu.memory_space<vmem>>, %arg8: memref<1x512xf32, #tpu.memory_space<vmem>>, %arg9: memref<512x128xf32, #tpu.memory_space<vmem>>, %arg10: memref<1x128xf32, #tpu.memory_space<vmem>>, %arg11: memref<1x128xf32, #tpu.memory_space<vmem>>, %arg12: memref<1x128xf32, #tpu.memory_space<vmem>>, %arg13: memref<128x32xf32, #tpu.memory_space<vmem>>, %arg14: memref<1x32xf32, #tpu.memory_space<vmem>>, %arg15: memref<1x32xf32, #tpu.memory_space<vmem>>, %arg16: memref<1x32xf32, #tpu.memory_space<vmem>>, %arg17: memref<32x8xf32, #tpu.memory_space<vmem>>, %arg18: memref<1x8xf32, #tpu.memory_space<vmem>>, %arg19: memref<1x8xf32, #tpu.memory_space<vmem>>, %arg20: memref<1x8xf32, #tpu.memory_space<vmem>>, %arg21: memref<8x1xf32, #tpu.memory_space<vmem>>, %arg22: memref<1x1xf32, #tpu.memory_space<vmem>>, %arg23: memref<2x1xf32, #tpu.memory_space<vmem>>) attributes {dimension_semantics = [], scalar_prefetch = 0 : i64, scratch_operands = 0 : i64, tpu.core_type = #tpu.core_type<tc>} {
    %c0 = arith.constant 0 : index
    %c0_0 = arith.constant 0 : index
    %c0_1 = arith.constant 0 : index
    %0 = vector.load %arg0[%c0, %c0_0, %c0_1] : memref<2x2x320xf32, #tpu.memory_space<vmem>>, vector<1x2x320xf32>
    %1 = vector.shape_cast %0 : vector<1x2x320xf32> to vector<2x320xf32>
    %c1 = arith.constant 1 : index
    %c0_2 = arith.constant 0 : index
    %c0_3 = arith.constant 0 : index
    %2 = vector.load %arg0[%c1, %c0_2, %c0_3] : memref<2x2x320xf32, #tpu.memory_space<vmem>>, vector<1x2x320xf32>
    %3 = vector.shape_cast %2 : vector<1x2x320xf32> to vector<2x320xf32>
    %4 = arith.addf %1, %3 : vector<2x320xf32>
    %c0_4 = arith.constant 0 : index
    %c0_5 = arith.constant 0 : index
    %5 = vector.load %arg1[%c0_4, %c0_5] : memref<320x64xf32, #tpu.memory_space<vmem>>, vector<320x64xf32>
    %cst = arith.constant dense<0.000000e+00> : vector<2x64xf32>
    %6 = tpu.matmul %4, %5, %cst {dimension_numbers = #tpu.dot_dimension_numbers<[1], [0], [0], [1], [0, 0, 1, 1], [], []>} : vector<2x320xf32>, vector<320x64xf32>, vector<2x64xf32> -> vector<2x64xf32>
    %c0_6 = arith.constant 0 : index
    %c0_7 = arith.constant 0 : index
    %7 = vector.load %arg2[%c0_6, %c0_7] : memref<1x64xf32, #tpu.memory_space<vmem>>, vector<1x64xf32>
    %8 = vector.broadcast %7 : vector<1x64xf32> to vector<2x64xf32>
    %9 = arith.addf %6, %8 : vector<2x64xf32>
    %cst_8 = arith.constant 0.000000e+00 : f32
    %10 = vector.broadcast %cst_8 : f32 to vector<2x64xf32>
    %11 = arith.maximumf %9, %10 : vector<2x64xf32>
    %c0_i32 = arith.constant 0 : i32
    %c39_i32 = arith.constant 39 : i32
    %12 = arith.addi %c0_i32, %c39_i32 : i32
    %c1_i32 = arith.constant 1 : i32
    %13 = scf.for %arg24 = %c0_i32 to %12 step %c1_i32 iter_args(%arg25 = %11) -> (vector<2x64xf32>)  : i32 {
      %71 = arith.index_cast %arg24 : i32 to index
      %c0_55 = arith.constant 0 : index
      %c0_56 = arith.constant 0 : index
      %72 = vector.load %arg3[%71, %c0_55, %c0_56] : memref<39x64x64xf32, #tpu.memory_space<vmem>>, vector<1x64x64xf32>
      %73 = vector.shape_cast %72 : vector<1x64x64xf32> to vector<64x64xf32>
      %cst_57 = arith.constant dense<0.000000e+00> : vector<2x64xf32>
      %74 = tpu.matmul %arg25, %73, %cst_57 {dimension_numbers = #tpu.dot_dimension_numbers<[1], [0], [0], [1], [0, 0, 1, 1], [], []>} : vector<2x64xf32>, vector<64x64xf32>, vector<2x64xf32> -> vector<2x64xf32>
      %75 = arith.index_cast %arg24 : i32 to index
      %c0_58 = arith.constant 0 : index
      %c0_59 = arith.constant 0 : index
      %76 = vector.load %arg4[%75, %c0_58, %c0_59] : memref<39x1x64xf32, #tpu.memory_space<vmem>>, vector<1x1x64xf32>
      %77 = vector.shape_cast %76 : vector<1x1x64xf32> to vector<1x64xf32>
      %78 = vector.broadcast %77 : vector<1x64xf32> to vector<2x64xf32>
      %79 = arith.addf %74, %78 : vector<2x64xf32>
      %80 = arith.index_cast %arg24 : i32 to index
      %c0_60 = arith.constant 0 : index
      %c0_61 = arith.constant 0 : index
      %81 = vector.load %arg5[%80, %c0_60, %c0_61] : memref<39x1x64xf32, #tpu.memory_space<vmem>>, vector<1x1x64xf32>
      %82 = vector.shape_cast %81 : vector<1x1x64xf32> to vector<1x64xf32>
      %83 = vector.broadcast %82 : vector<1x64xf32> to vector<2x64xf32>
      %84 = arith.mulf %79, %83 : vector<2x64xf32>
      %85 = arith.index_cast %arg24 : i32 to index
      %c0_62 = arith.constant 0 : index
      %c0_63 = arith.constant 0 : index
      %86 = vector.load %arg6[%85, %c0_62, %c0_63] : memref<39x1x64xf32, #tpu.memory_space<vmem>>, vector<1x1x64xf32>
      %87 = vector.shape_cast %86 : vector<1x1x64xf32> to vector<1x64xf32>
      %88 = vector.broadcast %87 : vector<1x64xf32> to vector<2x64xf32>
      %89 = arith.addf %84, %88 : vector<2x64xf32>
      %cst_64 = arith.constant 0.000000e+00 : f32
      %90 = vector.broadcast %cst_64 : f32 to vector<2x64xf32>
      %91 = arith.maximumf %89, %90 : vector<2x64xf32>
      scf.yield %91 : vector<2x64xf32>
    }
    %c39_i32_9 = arith.constant 39 : i32
    %c0_10 = arith.constant 0 : index
    %c0_11 = arith.constant 0 : index
    %14 = vector.load %arg7[%c0_10, %c0_11] : memref<64x512xf32, #tpu.memory_space<vmem>>, vector<64x512xf32>
    %cst_12 = arith.constant dense<0.000000e+00> : vector<2x512xf32>
    %15 = tpu.matmul %13, %14, %cst_12 {dimension_numbers = #tpu.dot_dimension_numbers<[1], [0], [0], [1], [0, 0, 1, 1], [], []>} : vector<2x64xf32>, vector<64x512xf32>, vector<2x512xf32> -> vector<2x512xf32>
    %c0_13 = arith.constant 0 : index
    %c0_14 = arith.constant 0 : index
    %16 = vector.load %arg8[%c0_13, %c0_14] : memref<1x512xf32, #tpu.memory_space<vmem>>, vector<1x512xf32>
    %17 = vector.broadcast %16 : vector<1x512xf32> to vector<2x512xf32>
    %18 = arith.addf %15, %17 : vector<2x512xf32>
    %c0_15 = arith.constant 0 : index
    %c0_16 = arith.constant 0 : index
    %19 = vector.load %arg9[%c0_15, %c0_16] : memref<512x128xf32, #tpu.memory_space<vmem>>, vector<512x128xf32>
    %cst_17 = arith.constant dense<0.000000e+00> : vector<2x128xf32>
    %20 = tpu.matmul %18, %19, %cst_17 {dimension_numbers = #tpu.dot_dimension_numbers<[1], [0], [0], [1], [0, 0, 1, 1], [], []>} : vector<2x512xf32>, vector<512x128xf32>, vector<2x128xf32> -> vector<2x128xf32>
    %c0_18 = arith.constant 0 : index
    %c0_19 = arith.constant 0 : index
    %21 = vector.load %arg10[%c0_18, %c0_19] : memref<1x128xf32, #tpu.memory_space<vmem>>, vector<1x128xf32>
    %22 = vector.broadcast %21 : vector<1x128xf32> to vector<2x128xf32>
    %23 = arith.addf %20, %22 : vector<2x128xf32>
    %c0_20 = arith.constant 0 : index
    %c0_21 = arith.constant 0 : index
    %24 = vector.load %arg11[%c0_20, %c0_21] : memref<1x128xf32, #tpu.memory_space<vmem>>, vector<1x128xf32>
    %25 = vector.broadcast %24 : vector<1x128xf32> to vector<2x128xf32>
    %26 = arith.mulf %23, %25 : vector<2x128xf32>
    %c0_22 = arith.constant 0 : index
    %c0_23 = arith.constant 0 : index
    %27 = vector.load %arg12[%c0_22, %c0_23] : memref<1x128xf32, #tpu.memory_space<vmem>>, vector<1x128xf32>
    %28 = vector.broadcast %27 : vector<1x128xf32> to vector<2x128xf32>
    %29 = arith.addf %26, %28 : vector<2x128xf32>
    %cst_24 = arith.constant 0.000000e+00 : f32
    %30 = vector.broadcast %cst_24 : f32 to vector<2x128xf32>
    %31 = arith.maximumf %29, %30 : vector<2x128xf32>
    %c0_25 = arith.constant 0 : index
    %c0_26 = arith.constant 0 : index
    %32 = vector.load %arg13[%c0_25, %c0_26] : memref<128x32xf32, #tpu.memory_space<vmem>>, vector<128x32xf32>
    %cst_27 = arith.constant dense<0.000000e+00> : vector<2x32xf32>
    %33 = tpu.matmul %31, %32, %cst_27 {dimension_numbers = #tpu.dot_dimension_numbers<[1], [0], [0], [1], [0, 0, 1, 1], [], []>} : vector<2x128xf32>, vector<128x32xf32>, vector<2x32xf32> -> vector<2x32xf32>
    %c0_28 = arith.constant 0 : index
    %c0_29 = arith.constant 0 : index
    %34 = vector.load %arg14[%c0_28, %c0_29] : memref<1x32xf32, #tpu.memory_space<vmem>>, vector<1x32xf32>
    %35 = vector.broadcast %34 : vector<1x32xf32> to vector<2x32xf32>
    %36 = arith.addf %33, %35 : vector<2x32xf32>
    %c0_30 = arith.constant 0 : index
    %c0_31 = arith.constant 0 : index
    %37 = vector.load %arg15[%c0_30, %c0_31] : memref<1x32xf32, #tpu.memory_space<vmem>>, vector<1x32xf32>
    %38 = vector.broadcast %37 : vector<1x32xf32> to vector<2x32xf32>
    %39 = arith.mulf %36, %38 : vector<2x32xf32>
    %c0_32 = arith.constant 0 : index
    %c0_33 = arith.constant 0 : index
    %40 = vector.load %arg16[%c0_32, %c0_33] : memref<1x32xf32, #tpu.memory_space<vmem>>, vector<1x32xf32>
    %41 = vector.broadcast %40 : vector<1x32xf32> to vector<2x32xf32>
    %42 = arith.addf %39, %41 : vector<2x32xf32>
    %cst_34 = arith.constant 0.000000e+00 : f32
    %43 = vector.broadcast %cst_34 : f32 to vector<2x32xf32>
    %44 = arith.maximumf %42, %43 : vector<2x32xf32>
    %c0_35 = arith.constant 0 : index
    %c0_36 = arith.constant 0 : index
    %45 = vector.load %arg17[%c0_35, %c0_36] : memref<32x8xf32, #tpu.memory_space<vmem>>, vector<32x8xf32>
    %cst_37 = arith.constant dense<0.000000e+00> : vector<2x8xf32>
    %46 = tpu.matmul %44, %45, %cst_37 {dimension_numbers = #tpu.dot_dimension_numbers<[1], [0], [0], [1], [0, 0, 1, 1], [], []>} : vector<2x32xf32>, vector<32x8xf32>, vector<2x8xf32> -> vector<2x8xf32>
    %c0_38 = arith.constant 0 : index
    %c0_39 = arith.constant 0 : index
    %47 = vector.load %arg18[%c0_38, %c0_39] : memref<1x8xf32, #tpu.memory_space<vmem>>, vector<1x8xf32>
    %48 = vector.broadcast %47 : vector<1x8xf32> to vector<2x8xf32>
    %49 = arith.addf %46, %48 : vector<2x8xf32>
    %c0_40 = arith.constant 0 : index
    %c0_41 = arith.constant 0 : index
    %50 = vector.load %arg19[%c0_40, %c0_41] : memref<1x8xf32, #tpu.memory_space<vmem>>, vector<1x8xf32>
    %51 = vector.broadcast %50 : vector<1x8xf32> to vector<2x8xf32>
    %52 = arith.mulf %49, %51 : vector<2x8xf32>
    %c0_42 = arith.constant 0 : index
    %c0_43 = arith.constant 0 : index
    %53 = vector.load %arg20[%c0_42, %c0_43] : memref<1x8xf32, #tpu.memory_space<vmem>>, vector<1x8xf32>
    %54 = vector.broadcast %53 : vector<1x8xf32> to vector<2x8xf32>
    %55 = arith.addf %52, %54 : vector<2x8xf32>
    %cst_44 = arith.constant 0.000000e+00 : f32
    %56 = vector.broadcast %cst_44 : f32 to vector<2x8xf32>
    %57 = arith.maximumf %55, %56 : vector<2x8xf32>
    %c0_45 = arith.constant 0 : index
    %c0_46 = arith.constant 0 : index
    %58 = vector.load %arg21[%c0_45, %c0_46] : memref<8x1xf32, #tpu.memory_space<vmem>>, vector<8x1xf32>
    %cst_47 = arith.constant dense<0.000000e+00> : vector<2x1xf32>
    %59 = tpu.matmul %57, %58, %cst_47 {dimension_numbers = #tpu.dot_dimension_numbers<[1], [0], [0], [1], [0, 0, 1, 1], [], []>} : vector<2x8xf32>, vector<8x1xf32>, vector<2x1xf32> -> vector<2x1xf32>
    %c0_48 = arith.constant 0 : index
    %c0_49 = arith.constant 0 : index
    %60 = vector.load %arg22[%c0_48, %c0_49] : memref<1x1xf32, #tpu.memory_space<vmem>>, vector<1x1xf32>
    %61 = vector.broadcast %60 : vector<1x1xf32> to vector<2x1xf32>
    %62 = arith.addf %59, %61 : vector<2x1xf32>
    %cst_50 = arith.constant 0.000000e+00 : f32
    %63 = vector.broadcast %cst_50 : f32 to vector<2x1xf32>
    %64 = arith.subf %63, %62 : vector<2x1xf32>
    %65 = math.exp %64 : vector<2x1xf32>
    %cst_51 = arith.constant 1.000000e+00 : f32
    %66 = vector.broadcast %cst_51 : f32 to vector<2x1xf32>
    %67 = arith.addf %66, %65 : vector<2x1xf32>
    %cst_52 = arith.constant 1.000000e+00 : f32
    %68 = vector.broadcast %cst_52 : f32 to vector<2x1xf32>
    %69 = arith.divf %68, %67 : vector<2x1xf32>
    %c0_53 = arith.constant 0 : index
    %c0_54 = arith.constant 0 : index
    %70 = vector.load %arg23[%c0_53, %c0_54] : memref<2x1xf32, #tpu.memory_space<vmem>>, vector<2x1xf32>
    tpu.vector_store %arg23[%c0_53, %c0_54], %69 {strides = array<i32>} : memref<2x1xf32, #tpu.memory_space<vmem>>, vector<2x1xf32>,
    return
  }
}

</mosaic_0001>

<llo_original>
// kernel: predict_forward.3
$region0: #{predict_forward.3}
  #allocation0 [shape = 'u32[]', space=smem, size = 0x4, offset = 0x4, fixed_abs, tag = 'smem constant byte address 0x4 - core index']
  #allocation1 [shape = 'u32[72,128]{1,0:T(1,128)}', space=vmem, size = 0x9000, scoped, tag = 'internal scratch']
  #allocation2 [shape = 'f32[1,1]{1,0:T(1,128)S(1)}', space=vmem, size = 0x200, scoped, tag = 'scoped memory for predict_forward.3']
  %s0 = inlined_call_operand.vmem [shape: f32[2,2,320], index: 0, kind: input, shape index: {}]
  %s1 = inlined_call_operand.vmem [shape: f32[320,64], index: 1, kind: input, shape index: {}]
  %s2 = inlined_call_operand.vmem [shape: f32[1,64], index: 2, kind: input, shape index: {}]
  %s3 = inlined_call_operand.vmem [shape: f32[39,64,64], index: 3, kind: input, shape index: {}]
  %s4 = inlined_call_operand.vmem [shape: f32[39,1,64], index: 4, kind: input, shape index: {}]
  %s5 = inlined_call_operand.vmem [shape: f32[39,1,64], index: 5, kind: input, shape index: {}]
  %s6 = inlined_call_operand.vmem [shape: f32[39,1,64], index: 6, kind: input, shape index: {}]
  %s7 = inlined_call_operand.vmem [shape: f32[64,512], index: 7, kind: input, shape index: {}]
  %s8 = inlined_call_operand.vmem [shape: f32[1,512], index: 8, kind: input, shape index: {}]
  %s9 = inlined_call_operand.vmem [shape: f32[512,128], index: 9, kind: input, shape index: {}]
  %s10 = inlined_call_operand.vmem [shape: f32[1,128], index: 10, kind: input, shape index: {}]
  %s11 = inlined_call_operand.vmem [shape: f32[1,128], index: 11, kind: input, shape index: {}]
  %s12 = inlined_call_operand.vmem [shape: f32[1,128], index: 12, kind: input, shape index: {}]
  %s13 = inlined_call_operand.vmem [shape: f32[128,32], index: 13, kind: input, shape index: {}]
  %s14 = inlined_call_operand.vmem [shape: f32[1,32], index: 14, kind: input, shape index: {}]
  %s15 = inlined_call_operand.vmem [shape: f32[1,32], index: 15, kind: input, shape index: {}]
  %s16 = inlined_call_operand.vmem [shape: f32[1,32], index: 16, kind: input, shape index: {}]
  %s17 = inlined_call_operand.vmem [shape: f32[32,8], index: 17, kind: input, shape index: {}]
  %s18 = inlined_call_operand.vmem [shape: f32[1,8], index: 18, kind: input, shape index: {}]
  %s19 = inlined_call_operand.vmem [shape: f32[1,8], index: 19, kind: input, shape index: {}]
  %s20 = inlined_call_operand.vmem [shape: f32[1,8], index: 20, kind: input, shape index: {}]
  %s21 = inlined_call_operand.vmem [shape: f32[8,1], index: 21, kind: input, shape index: {}]
  %s22 = inlined_call_operand.<no memory space> [shape: f32[1,1], index: 22, kind: input, shape index: {}]
  %s23 = inlined_call_operand.vmem [shape: f32[2,1], index: 23, kind: output, shape index: {}]
  %s24 = sld [smem:[#allocation0]]
  $region109: #{predict_forward.3} parent=0
    _
  %s26 = ssub.s32 1, %s24
  %s27 = scalar_select 0, %s26, %s24
  %v28 = vstv %s22
  %29 = vst [vmem:[#allocation2] sm:$0x1] %v28
  // Predicated region
  $region2: #{predict_forward.3} parent=0 // pred_check
    _
  $region3: #{predict_forward.3} parent=0 // pred_check_branch
    %31 = sbr.rel (0) target = $region5
  $region4: #{predict_forward.3} parent=0 // pred_region
    _
  $region5: #{predict_forward.3} parent=0 // pred_fallthru
    _
  // Predicated region
  $region6: #{predict_forward.3} parent=0 // pred_check
    _
  $region7: #{predict_forward.3} parent=0 // pred_check_branch
    %33 = sbr.rel (0) target = $region9
  $region8: #{predict_forward.3} parent=0 // pred_region
    _
  $region9: #{predict_forward.3} parent=0 // pred_fallthru
    _
  // Predicated region
  $region10: #{predict_forward.3} parent=0 // pred_check
    _
  $region11: #{predict_forward.3} parent=0 // pred_check_branch
    %35 = sbr.rel (0) target = $region13
  $region12: #{predict_forward.3} parent=0 // pred_region
    _
  $region13: #{predict_forward.3} parent=0 // pred_fallthru
    _
  // Predicated region
  $region14: #{predict_forward.3} parent=0 // pred_check
    _
  $region15: #{predict_forward.3} parent=0 // pred_check_branch
    %37 = sbr.rel (0) target = $region17
  $region16: #{predict_forward.3} parent=0 // pred_region
    _
  $region17: #{predict_forward.3} parent=0 // pred_fallthru
    _
  // Predicated region
  $region18: #{predict_forward.3} parent=0 // pred_check
    _
  $region19: #{predict_forward.3} parent=0 // pred_check_branch
    %39 = sbr.rel (0) target = $region21
  $region20: #{predict_forward.3} parent=0 // pred_region
    _
  $region21: #{predict_forward.3} parent=0 // pred_fallthru
    _
  // Predicated region
  $region22: #{predict_forward.3} parent=0 // pred_check
    _
  $region23: #{predict_forward.3} parent=0 // pred_check_branch
    %41 = sbr.rel (0) target = $region25
  $region24: #{predict_forward.3} parent=0 // pred_region
    _
  $region25: #{predict_forward.3} parent=0 // pred_fallthru
    _
  // Predicated region
  $region26: #{predict_forward.3} parent=0 // pred_check
    _
  $region27: #{predict_forward.3} parent=0 // pred_check_branch
    %43 = sbr.rel (0) target = $region29
  $region28: #{predict_forward.3} parent=0 // pred_region
    _
  $region29: #{predict_forward.3} parent=0 // pred_fallthru
    _
  // Predicated region
  $region30: #{predict_forward.3} parent=0 // pred_check
    _
  $region31: #{predict_forward.3} parent=0 // pred_check_branch
    %45 = sbr.rel (0) target = $region33
  $region32: #{predict_forward.3} parent=0 // pred_region
    _
  $region33: #{predict_forward.3} parent=0 // pred_fallthru
    _
  // Predicated region
  $region34: #{predict_forward.3} parent=0 // pred_check
    _
  $region35: #{predict_forward.3} parent=0 // pred_check_branch
    %47 = sbr.rel (0) target = $region37
  $region36: #{predict_forward.3} parent=0 // pred_region
    _
  $region37: #{predict_forward.3} parent=0 // pred_fallthru
    _
  // Predicated region
  $region38: #{predict_forward.3} parent=0 // pred_check
    _
  $region39: #{predict_forward.3} parent=0 // pred_check_branch
    %49 = sbr.rel (0) target = $region41
  $region40: #{predict_forward.3} parent=0 // pred_region
    _
  $region41: #{predict_forward.3} parent=0 // pred_fallthru
    _
  // Predicated region
  $region42: #{predict_forward.3} parent=0 // pred_check
    _
  $region43: #{predict_forward.3} parent=0 // pred_check_branch
    %51 = sbr.rel (0) target = $region45
  $region44: #{predict_forward.3} parent=0 // pred_region
    _
  $region45: #{predict_forward.3} parent=0 // pred_fallthru
    _
  // Predicated region
  $region46: #{predict_forward.3} parent=0 // pred_check
    _
  $region47: #{predict_forward.3} parent=0 // pred_check_branch
    %53 = sbr.rel (0) target = $region49
  $region48: #{predict_forward.3} parent=0 // pred_region
    _
  $region49: #{predict_forward.3} parent=0 // pred_fallthru
    _
  // Predicated region
  $region50: #{predict_forward.3} parent=0 // pred_check
    _
  $region51: #{predict_forward.3} parent=0 // pred_check_branch
    %55 = sbr.rel (0) target = $region53
  $region52: #{predict_forward.3} parent=0 // pred_region
    _
  $region53: #{predict_forward.3} parent=0 // pred_fallthru
    _
  // Predicated region
  $region54: #{predict_forward.3} parent=0 // pred_check
    _
  $region55: #{predict_forward.3} parent=0 // pred_check_branch
    %57 = sbr.rel (0) target = $region57
  $region56: #{predict_forward.3} parent=0 // pred_region
    _
  $region57: #{predict_forward.3} parent=0 // pred_fallthru
    _
  // Predicated region
  $region58: #{predict_forward.3} parent=0 // pred_check
    _
  $region59: #{predict_forward.3} parent=0 // pred_check_branch
    %59 = sbr.rel (0) target = $region61
  $region60: #{predict_forward.3} parent=0 // pred_region
    _
  $region61: #{predict_forward.3} parent=0 // pred_fallthru
    _
  // Predicated region
  $region62: #{predict_forward.3} parent=0 // pred_check
    _
  $region63: #{predict_forward.3} parent=0 // pred_check_branch
    %61 = sbr.rel (0) target = $region65
  $region64: #{predict_forward.3} parent=0 // pred_region
    _
  $region65: #{predict_forward.3} parent=0 // pred_fallthru
    _
  // Predicated region
  $region66: #{predict_forward.3} parent=0 // pred_check
    _
  $region67: #{predict_forward.3} parent=0 // pred_check_branch
    %63 = sbr.rel (0) target = $region69
  $region68: #{predict_forward.3} parent=0 // pred_region
    _
  $region69: #{predict_forward.3} parent=0 // pred_fallthru
    _
  // Predicated region
  $region70: #{predict_forward.3} parent=0 // pred_check
    _
  $region71: #{predict_forward.3} parent=0 // pred_check_branch
    %65 = sbr.rel (0) target = $region73
  $region72: #{predict_forward.3} parent=0 // pred_region
    _
  $region73: #{predict_forward.3} parent=0 // pred_fallthru
    _
  // Predicated region
  $region74: #{predict_forward.3} parent=0 // pred_check
    _
  $region75: #{predict_forward.3} parent=0 // pred_check_branch
    %67 = sbr.rel (0) target = $region77
  $region76: #{predict_forward.3} parent=0 // pred_region
    _
  $region77: #{predict_forward.3} parent=0 // pred_fallthru
    _
  // Predicated region
  $region78: #{predict_forward.3} parent=0 // pred_check
    _
  $region79: #{predict_forward.3} parent=0 // pred_check_branch
    %69 = sbr.rel (0) target = $region81
  $region80: #{predict_forward.3} parent=0 // pred_region
    _
  $region81: #{predict_forward.3} parent=0 // pred_fallthru
    _
  // Predicated region
  $region82: #{predict_forward.3} parent=0 // pred_check
    _
  $region83: #{predict_forward.3} parent=0 // pred_check_branch
    %71 = sbr.rel (0) target = $region85
  $region84: #{predict_forward.3} parent=0 // pred_region
    _
  $region85: #{predict_forward.3} parent=0 // pred_fallthru
    _
  // Predicated region
  $region86: #{predict_forward.3} parent=0 // pred_check
    _
  $region87: #{predict_forward.3} parent=0 // pred_check_branch
    %73 = sbr.rel (0) target = $region89
  $region88: #{predict_forward.3} parent=0 // pred_region
    _
  $region89: #{predict_forward.3} parent=0 // pred_fallthru
    _
  // Predicated region
  $region90: #{predict_forward.3} parent=0 // pred_check
    _
  $region91: #{predict_forward.3} parent=0 // pred_check_branch
    %75 = sbr.rel (0) target = $region93
  $region92: #{predict_forward.3} parent=0 // pred_region
    _
  $region93: #{predict_forward.3} parent=0 // pred_fallthru
    _
  %v76 = vld [vmem:[%s0] sm:$0x3f]
  %s77 = scalar_lea.vmem %s0, 6
  %v78 = vld [vmem:[%s77] sm:$0x3f]
  %v79 = vadd.f32 %v76, %v78
  %v80 = vld [vmem:[%s1] sm:$0xff]
  %v81 = vld [vmem:[%s1 + $0x8] sm:$0xff]
  %v82 = vld [vmem:[%s1 + $0x10] sm:$0xff]
  %v83 = vld [vmem:[%s1 + $0x18] sm:$0xff]
  %v84 = vld [vmem:[%s1 + $0x20] sm:$0xff]
  %v85 = vld [vmem:[%s1 + $0x28] sm:$0xff]
  %v86 = vld [vmem:[%s1 + $0x30] sm:$0xff]
  %v87 = vld [vmem:[%s1 + $0x38] sm:$0xff]
  %v88 = vld [vmem:[%s1 + $0x40] sm:$0xff]
  %v89 = vld [vmem:[%s1 + $0x48] sm:$0xff]
  %v90 = vld [vmem:[%s1 + $0x50] sm:$0xff]
  %v91 = vld [vmem:[%s1 + $0x58] sm:$0xff]
  %v92 = vld [vmem:[%s1 + $0x60] sm:$0xff]
  %v93 = vld [vmem:[%s1 + $0x68] sm:$0xff]
  %v94 = vld [vmem:[%s1 + $0x70] sm:$0xff]
  %v95 = vld [vmem:[%s1 + $0x78] sm:$0xff]
  %v96 = vld [vmem:[%s1 + $0x80] sm:$0xff]
  %v97 = vld [vmem:[%s1 + $0x88] sm:$0xff]
  %v98 = vld [vmem:[%s1 + $0x90] sm:$0xff]
  %v99 = vld [vmem:[%s1 + $0x98] sm:$0xff]
  %v100 = vld [vmem:[%s1 + $0xa0] sm:$0xff]
  %v101 = vld [vmem:[%s1 + $0xa8] sm:$0xff]
  %v102 = vld [vmem:[%s1 + $0xb0] sm:$0xff]
  %v103 = vld [vmem:[%s1 + $0xb8] sm:$0xff]
  %v104 = vld [vmem:[%s1 + $0xc0] sm:$0xff]
  %v105 = vld [vmem:[%s1 + $0xc8] sm:$0xff]
  %v106 = vld [vmem:[%s1 + $0xd0] sm:$0xff]
  %v107 = vld [vmem:[%s1 + $0xd8] sm:$0xff]
  %v108 = vld [vmem:[%s1 + $0xe0] sm:$0xff]
  %v109 = vld [vmem:[%s1 + $0xe8] sm:$0xff]
  %v110 = vld [vmem:[%s1 + $0xf0] sm:$0xff]
  %v111 = vld [vmem:[%s1 + $0xf8] sm:$0xff]
  %v112 = vld [vmem:[%s1 + $0x100] sm:$0xff]
  %v113 = vld [vmem:[%s1 + $0x108] sm:$0xff]
  %v114 = vld [vmem:[%s1 + $0x110] sm:$0xff]
  %v115 = vld [vmem:[%s1 + $0x118] sm:$0xff]
  %v116 = vld [vmem:[%s1 + $0x120] sm:$0xff]
  %v117 = vld [vmem:[%s1 + $0x128] sm:$0xff]
  %v118 = vld [vmem:[%s1 + $0x130] sm:$0xff]
  %v119 = vld [vmem:[%s1 + $0x138] sm:$0xff]
  %v120 = vld [vmem:[%s2] sm:$0x1]
  %v122 = vperm.slane %v120, 0
  %125 = vst [vmem:[#allocation1] ss:$4 sm:$0xff] %v79
  %v126 = vld.sshfl [vmem:[#allocation1] sm:$0xff pattern:$0x73625140]
  %v127 = vld.sshfl [vmem:[#allocation1 + $0x8] sm:$0xff pattern:$0x73625140]
  %v128 = vld.sshfl [vmem:[#allocation1 + $0x10] sm:$0xff pattern:$0x73625140]
  %vm131 = vcmask 523264
  %v132 = vsel %vm131, %v128, 0
  %134 = vmatpush.msra.mxu0 %v95
  %135 = vmatpush.msra.mxu0 %v94
  %136 = vmatpush.msra.mxu0 %v93
  %137 = vmatpush.msra.mxu0 %v92
  %138 = vmatpush.msra.mxu0 %v91
  %139 = vmatpush.msra.mxu0 %v90
  %140 = vmatpush.msra.mxu0 %v89
  %141 = vmatpush.msra.mxu0 %v88
  %142 = vmatpush.msra.mxu0 %v87
  %143 = vmatpush.msra.mxu0 %v86
  %144 = vmatpush.msra.mxu0 %v85
  %145 = vmatpush.msra.mxu0 %v84
  %146 = vmatpush.msra.mxu0 %v83
  %147 = vmatpush.msra.mxu0 %v82
  %148 = vmatpush.msra.mxu0 %v81
  %149 = vmatpush.msra.mxu0 %v80
  %150 = vmatmul.f32.gmra.mxu0 %v126
  %v151 = vpop.f32.mrf.mxu0
  %v152 = vadd.f32 %v122, %v151
  %153 = vdwg.mxu0
  %154 = vmatpush.msra.mxu0 %v111
  %155 = vmatpush.msra.mxu0 %v110
  %156 = vmatpush.msra.mxu0 %v109
  %157 = vmatpush.msra.mxu0 %v108
  %158 = vmatpush.msra.mxu0 %v107
  %159 = vmatpush.msra.mxu0 %v106
  %160 = vmatpush.msra.mxu0 %v105
  %161 = vmatpush.msra.mxu0 %v104
  %162 = vmatpush.msra.mxu0 %v103
  %163 = vmatpush.msra.mxu0 %v102
  %164 = vmatpush.msra.mxu0 %v101
  %165 = vmatpush.msra.mxu0 %v100
  %166 = vmatpush.msra.mxu0 %v99
  %167 = vmatpush.msra.mxu0 %v98
  %168 = vmatpush.msra.mxu0 %v97
  %169 = vmatpush.msra.mxu0 %v96
  %170 = vmatmul.f32.gmra.mxu0 %v127
  %v171 = vpop.f32.mrf.mxu0
  %v172 = vadd.f32 %v152, %v171
  %173 = vdwg.mxu0
  %174 = vmatpush.msra.mxu0 0.0
  %175 = vmatpush.msra.mxu0 0.0
  %176 = vmatpush.msra.mxu0 0.0
  %177 = vmatpush.msra.mxu0 0.0
  %178 = vmatpush.msra.mxu0 0.0
  %179 = vmatpush.msra.mxu0 0.0
  %180 = vmatpush.msra.mxu0 0.0
  %181 = vmatpush.msra.mxu0 0.0
  %182 = vmatpush.msra.mxu0 %v119
  %183 = vmatpush.msra.mxu0 %v118
  %184 = vmatpush.msra.mxu0 %v117
  %185 = vmatpush.msra.mxu0 %v116
  %186 = vmatpush.msra.mxu0 %v115
  %187 = vmatpush.msra.mxu0 %v114
  %188 = vmatpush.msra.mxu0 %v113
  %189 = vmatpush.msra.mxu0 %v112
  %190 = vmatmul.f32.gmra.mxu0 %v132
  %v191 = vpop.f32.mrf.mxu0
  %v192 = vadd.f32 %v172, %v191
  %193 = vdwg.mxu0
  %v194 = vmax.f32 %v192, 0.0
  loop: start=0, step=1, limit=39
  $region94: #{predict_forward.3} parent=0 // loop_pre_header
    _
  $region95: #{predict_forward.3} parent=0 // loop_header
    %s196 = sphi 0, %s200
    %p197 = scmp.ge.s32.totalorder %s196, 39
    %v201 = vphi %v194, %v252
  $region96: #{predict_forward.3} parent=0 // loop_header_branch
    %199 = sbr.rel (%p197) target = $region100
  $region97: #{predict_forward.3} parent=0 // loop_body
    %s202 = smul.u32 %s196, 64
    %s203 = scalar_lea.vmem %s3, %s202
    %v204 = vld [vmem:[%s203] sm:$0xff]
    %v205 = vld [vmem:[%s203 + $0x8] sm:$0xff]
    %v206 = vld [vmem:[%s203 + $0x10] sm:$0xff]
    %v207 = vld [vmem:[%s203 + $0x18] sm:$0xff]
    %v208 = vld [vmem:[%s203 + $0x20] sm:$0xff]
    %v209 = vld [vmem:[%s203 + $0x28] sm:$0xff]
    %v210 = vld [vmem:[%s203 + $0x30] sm:$0xff]
    %v211 = vld [vmem:[%s203 + $0x38] sm:$0xff]
    %s212 = scalar_lea.vmem %s4, %s196
    %v213 = vld [vmem:[%s212] sm:$0x1]
    %v215 = vperm.slane %v213, 0
    %v218 = vsel %vm131, %v201, 0
    %220 = vmatpush.msra.mxu0 0.0
    %221 = vmatpush.msra.mxu0 0.0
    %222 = vmatpush.msra.mxu0 0.0
    %223 = vmatpush.msra.mxu0 0.0
    %224 = vmatpush.msra.mxu0 0.0
    %225 = vmatpush.msra.mxu0 0.0
    %226 = vmatpush.msra.mxu0 0.0
    %227 = vmatpush.msra.mxu0 0.0
    %228 = vmatpush.msra.mxu0 %v211
    %229 = vmatpush.msra.mxu0 %v210
    %230 = vmatpush.msra.mxu0 %v209
    %231 = vmatpush.msra.mxu0 %v208
    %232 = vmatpush.msra.mxu0 %v207
    %233 = vmatpush.msra.mxu0 %v206
    %234 = vmatpush.msra.mxu0 %v205
    %235 = vmatpush.msra.mxu0 %v204
    %236 = vmatmul.f32.gmra.mxu0 %v218
    %v237 = vpop.f32.mrf.mxu0
    %v238 = vadd.f32 %v215, %v237
    %239 = vdwg.mxu0
    %s240 = scalar_lea.vmem %s5, %s196
    %v241 = vld [vmem:[%s240] sm:$0x1]
    %v243 = vperm.slane %v241, 0
    %v245 = vmul.f32 %v238, %v243
    %s246 = scalar_lea.vmem %s6, %s196
    %v247 = vld [vmem:[%s246] sm:$0x1]
    %v249 = vperm.slane %v247, 0
    %v251 = vadd.f32 %v245, %v249
    %v252 = vmax.f32 %v251, 0.0
  $region98: #{predict_forward.3} parent=0 // loop_footer
    %s200 = sadd.s32 1, %s196
  $region99: #{predict_forward.3} parent=0 // loop_footer_branch
    %195 = sbr.rel target = $region95
  $region100: #{predict_forward.3} parent=0 // loop_exit
    _
  %v253 = vld [vmem:[%s7] sm:$0xff]
  %v254 = vld [vmem:[%s7 + $0x8] sm:$0xff]
  %v255 = vld [vmem:[%s7 + $0x10] sm:$0xff]
  %v256 = vld [vmem:[%s7 + $0x18] sm:$0xff]
  %v257 = vld [vmem:[%s7 + $0x20] sm:$0xff]
  %v258 = vld [vmem:[%s7 + $0x28] sm:$0xff]
  %v259 = vld [vmem:[%s7 + $0x30] sm:$0xff]
  %v260 = vld [vmem:[%s7 + $0x38] sm:$0xff]
  %v261 = vld [vmem:[%s7 + $0x40] sm:$0xff]
  %v262 = vld [vmem:[%s7 + $0x48] sm:$0xff]
  %v263 = vld [vmem:[%s7 + $0x50] sm:$0xff]
  %v264 = vld [vmem:[%s7 + $0x58] sm:$0xff]
  %v265 = vld [vmem:[%s7 + $0x60] sm:$0xff]
  %v266 = vld [vmem:[%s7 + $0x68] sm:$0xff]
  %v267 = vld [vmem:[%s7 + $0x70] sm:$0xff]
  %v268 = vld [vmem:[%s7 + $0x78] sm:$0xff]
  %v269 = vld [vmem:[%s7 + $0x80] sm:$0xff]
  %v270 = vld [vmem:[%s7 + $0x88] sm:$0xff]
  %v271 = vld [vmem:[%s7 + $0x90] sm:$0xff]
  %v272 = vld [vmem:[%s7 + $0x98] sm:$0xff]
  %v273 = vld [vmem:[%s7 + $0xa0] sm:$0xff]
  %v274 = vld [vmem:[%s7 + $0xa8] sm:$0xff]
  %v275 = vld [vmem:[%s7 + $0xb0] sm:$0xff]
  %v276 = vld [vmem:[%s7 + $0xb8] sm:$0xff]
  %v277 = vld [vmem:[%s7 + $0xc0] sm:$0xff]
  %v278 = vld [vmem:[%s7 + $0xc8] sm:$0xff]
  %v279 = vld [vmem:[%s7 + $0xd0] sm:$0xff]
  %v280 = vld [vmem:[%s7 + $0xd8] sm:$0xff]
  %v281 = vld [vmem:[%s7 + $0xe0] sm:$0xff]
  %v282 = vld [vmem:[%s7 + $0xe8] sm:$0xff]
  %v283 = vld [vmem:[%s7 + $0xf0] sm:$0xff]
  %v284 = vld [vmem:[%s7 + $0xf8] sm:$0xff]
  %v285 = vld [vmem:[%s8] sm:$0xf]
  %v287 = vperm.slane %v285, 0
  %v288 = vperm.slane %v285, 1
  %v289 = vperm.slane %v285, 2
  %v290 = vperm.slane %v285, 3
  %v296 = vsel %vm131, %v201, 0
  %298 = vmatpush.msra.mxu0 0.0
  %299 = vmatpush.msra.mxu0 0.0
  %300 = vmatpush.msra.mxu0 0.0
  %301 = vmatpush.msra.mxu0 0.0
  %302 = vmatpush.msra.mxu0 0.0
  %303 = vmatpush.msra.mxu0 0.0
  %304 = vmatpush.msra.mxu0 0.0
  %305 = vmatpush.msra.mxu0 0.0
  %306 = vmatpush.msra.mxu0 %v281
  %307 = vmatpush.msra.mxu0 %v277
  %308 = vmatpush.msra.mxu0 %v273
  %309 = vmatpush.msra.mxu0 %v269
  %310 = vmatpush.msra.mxu0 %v265
  %311 = vmatpush.msra.mxu0 %v261
  %312 = vmatpush.msra.mxu0 %v257
  %313 = vmatpush.msra.mxu0 %v253
  %314 = vmatmul.f32.gmra.mxu0 %v296
  %v315 = vpop.f32.mrf.mxu0
  %v316 = vadd.f32 %v287, %v315
  %317 = vdwg.mxu0
  %318 = vmatpush.msra.mxu0 0.0
  %319 = vmatpush.msra.mxu0 0.0
  %320 = vmatpush.msra.mxu0 0.0
  %321 = vmatpush.msra.mxu0 0.0
  %322 = vmatpush.msra.mxu0 0.0
  %323 = vmatpush.msra.mxu0 0.0
  %324 = vmatpush.msra.mxu0 0.0
  %325 = vmatpush.msra.mxu0 0.0
  %326 = vmatpush.msra.mxu0 %v282
  %327 = vmatpush.msra.mxu0 %v278
  %328 = vmatpush.msra.mxu0 %v274
  %329 = vmatpush.msra.mxu0 %v270
  %330 = vmatpush.msra.mxu0 %v266
  %331 = vmatpush.msra.mxu0 %v262
  %332 = vmatpush.msra.mxu0 %v258
  %333 = vmatpush.msra.mxu0 %v254
  %334 = vmatmul.f32.gmra.mxu0 %v296
  %v335 = vpop.f32.mrf.mxu0
  %v336 = vadd.f32 %v288, %v335
  %337 = vdwg.mxu0
  %338 = vmatpush.msra.mxu0 0.0
  %339 = vmatpush.msra.mxu0 0.0
  %340 = vmatpush.msra.mxu0 0.0
  %341 = vmatpush.msra.mxu0 0.0
  %342 = vmatpush.msra.mxu0 0.0
  %343 = vmatpush.msra.mxu0 0.0
  %344 = vmatpush.msra.mxu0 0.0
  %345 = vmatpush.msra.mxu0 0.0
  %346 = vmatpush.msra.mxu0 %v283
  %347 = vmatpush.msra.mxu0 %v279
  %348 = vmatpush.msra.mxu0 %v275
  %349 = vmatpush.msra.mxu0 %v271
  %350 = vmatpush.msra.mxu0 %v267
  %351 = vmatpush.msra.mxu0 %v263
  %352 = vmatpush.msra.mxu0 %v259
  %353 = vmatpush.msra.mxu0 %v255
  %354 = vmatmul.f32.gmra.mxu0 %v296
  %v355 = vpop.f32.mrf.mxu0
  %v356 = vadd.f32 %v289, %v355
  %357 = vdwg.mxu0
  %358 = vmatpush.msra.mxu0 0.0
  %359 = vmatpush.msra.mxu0 0.0
  %360 = vmatpush.msra.mxu0 0.0
  %361 = vmatpush.msra.mxu0 0.0
  %362 = vmatpush.msra.mxu0 0.0
  %363 = vmatpush.msra.mxu0 0.0
  %364 = vmatpush.msra.mxu0 0.0
  %365 = vmatpush.msra.mxu0 0.0
  %366 = vmatpush.msra.mxu0 %v284
  %367 = vmatpush.msra.mxu0 %v280
  %368 = vmatpush.msra.mxu0 %v276
  %369 = vmatpush.msra.mxu0 %v272
  %370 = vmatpush.msra.mxu0 %v268
  %371 = vmatpush.msra.mxu0 %v264
  %372 = vmatpush.msra.mxu0 %v260
  %373 = vmatpush.msra.mxu0 %v256
  %374 = vmatmul.f32.gmra.mxu0 %v296
  %v375 = vpop.f32.mrf.mxu0
  %v376 = vadd.f32 %v290, %v375
  %377 = vdwg.mxu0
  %v378 = vld [vmem:[%s9] sm:$0xff]
  %v379 = vld [vmem:[%s9 + $0x8] sm:$0xff]
  %v380 = vld [vmem:[%s9 + $0x10] sm:$0xff]
  %v381 = vld [vmem:[%s9 + $0x18] sm:$0xff]
  %v382 = vld [vmem:[%s9 + $0x20] sm:$0xff]
  %v383 = vld [vmem:[%s9 + $0x28] sm:$0xff]
  %v384 = vld [vmem:[%s9 + $0x30] sm:$0xff]
  %v385 = vld [vmem:[%s9 + $0x38] sm:$0xff]
  %v386 = vld [vmem:[%s9 + $0x40] sm:$0xff]
  %v387 = vld [vmem:[%s9 + $0x48] sm:$0xff]
  %v388 = vld [vmem:[%s9 + $0x50] sm:$0xff]
  %v389 = vld [vmem:[%s9 + $0x58] sm:$0xff]
  %v390 = vld [vmem:[%s9 + $0x60] sm:$0xff]
  %v391 = vld [vmem:[%s9 + $0x68] sm:$0xff]
  %v392 = vld [vmem:[%s9 + $0x70] sm:$0xff]
  %v393 = vld [vmem:[%s9 + $0x78] sm:$0xff]
  %v394 = vld [vmem:[%s9 + $0x80] sm:$0xff]
  %v395 = vld [vmem:[%s9 + $0x88] sm:$0xff]
  %v396 = vld [vmem:[%s9 + $0x90] sm:$0xff]
  %v397 = vld [vmem:[%s9 + $0x98] sm:$0xff]
  %v398 = vld [vmem:[%s9 + $0xa0] sm:$0xff]
  %v399 = vld [vmem:[%s9 + $0xa8] sm:$0xff]
  %v400 = vld [vmem:[%s9 + $0xb0] sm:$0xff]
  %v401 = vld [vmem:[%s9 + $0xb8] sm:$0xff]
  %v402 = vld [vmem:[%s9 + $0xc0] sm:$0xff]
  %v403 = vld [vmem:[%s9 + $0xc8] sm:$0xff]
  %v404 = vld [vmem:[%s9 + $0xd0] sm:$0xff]
  %v405 = vld [vmem:[%s9 + $0xd8] sm:$0xff]
  %v406 = vld [vmem:[%s9 + $0xe0] sm:$0xff]
  %v407 = vld [vmem:[%s9 + $0xe8] sm:$0xff]
  %v408 = vld [vmem:[%s9 + $0xf0] sm:$0xff]
  %v409 = vld [vmem:[%s9 + $0xf8] sm:$0xff]
  %v410 = vld [vmem:[%s9 + $0x100] sm:$0xff]
  %v411 = vld [vmem:[%s9 + $0x108] sm:$0xff]
  %v412 = vld [vmem:[%s9 + $0x110] sm:$0xff]
  %v413 = vld [vmem:[%s9 + $0x118] sm:$0xff]
  %v414 = vld [vmem:[%s9 + $0x120] sm:$0xff]
  %v415 = vld [vmem:[%s9 + $0x128] sm:$0xff]
  %v416 = vld [vmem:[%s9 + $0x130] sm:$0xff]
  %v417 = vld [vmem:[%s9 + $0x138] sm:$0xff]
  %v418 = vld [vmem:[%s9 + $0x140] sm:$0xff]
  %v419 = vld [vmem:[%s9 + $0x148] sm:$0xff]
  %v420 = vld [vmem:[%s9 + $0x150] sm:$0xff]
  %v421 = vld [vmem:[%s9 + $0x158] sm:$0xff]
  %v422 = vld [vmem:[%s9 + $0x160] sm:$0xff]
  %v423 = vld [vmem:[%s9 + $0x168] sm:$0xff]
  %v424 = vld [vmem:[%s9 + $0x170] sm:$0xff]
  %v425 = vld [vmem:[%s9 + $0x178] sm:$0xff]
  %v426 = vld [vmem:[%s9 + $0x180] sm:$0xff]
  %v427 = vld [vmem:[%s9 + $0x188] sm:$0xff]
  %v428 = vld [vmem:[%s9 + $0x190] sm:$0xff]
  %v429 = vld [vmem:[%s9 + $0x198] sm:$0xff]
  %v430 = vld [vmem:[%s9 + $0x1a0] sm:$0xff]
  %v431 = vld [vmem:[%s9 + $0x1a8] sm:$0xff]
  %v432 = vld [vmem:[%s9 + $0x1b0] sm:$0xff]
  %v433 = vld [vmem:[%s9 + $0x1b8] sm:$0xff]
  %v434 = vld [vmem:[%s9 + $0x1c0] sm:$0xff]
  %v435 = vld [vmem:[%s9 + $0x1c8] sm:$0xff]
  %v436 = vld [vmem:[%s9 + $0x1d0] sm:$0xff]
  %v437 = vld [vmem:[%s9 + $0x1d8] sm:$0xff]
  %v438 = vld [vmem:[%s9 + $0x1e0] sm:$0xff]
  %v439 = vld [vmem:[%s9 + $0x1e8] sm:$0xff]
  %v440 = vld [vmem:[%s9 + $0x1f0] sm:$0xff]
  %v441 = vld [vmem:[%s9 + $0x1f8] sm:$0xff]
  %v442 = vld [vmem:[%s10] sm:$0x1]
  %v444 = vperm.slane %v442, 0
  %446 = vmatpush.msra.mxu0 %v393
  %447 = vmatpush.msra.mxu0 %v392
  %448 = vmatpush.msra.mxu0 %v391
  %449 = vmatpush.msra.mxu0 %v390
  %450 = vmatpush.msra.mxu0 %v389
  %451 = vmatpush.msra.mxu0 %v388
  %452 = vmatpush.msra.mxu0 %v387
  %453 = vmatpush.msra.mxu0 %v386
  %454 = vmatpush.msra.mxu0 %v385
  %455 = vmatpush.msra.mxu0 %v384
  %456 = vmatpush.msra.mxu0 %v383
  %457 = vmatpush.msra.mxu0 %v382
  %458 = vmatpush.msra.mxu0 %v381
  %459 = vmatpush.msra.mxu0 %v380
  %460 = vmatpush.msra.mxu0 %v379
  %461 = vmatpush.msra.mxu0 %v378
  %462 = vmatmul.f32.gmra.mxu0 %v316
  %v463 = vpop.f32.mrf.mxu0
  %v464 = vadd.f32 %v444, %v463
  %465 = vdwg.mxu0
  %466 = vmatpush.msra.mxu0 %v409
  %467 = vmatpush.msra.mxu0 %v408
  %468 = vmatpush.msra.mxu0 %v407
  %469 = vmatpush.msra.mxu0 %v406
  %470 = vmatpush.msra.mxu0 %v405
  %471 = vmatpush.msra.mxu0 %v404
  %472 = vmatpush.msra.mxu0 %v403
  %473 = vmatpush.msra.mxu0 %v402
  %474 = vmatpush.msra.mxu0 %v401
  %475 = vmatpush.msra.mxu0 %v400
  %476 = vmatpush.msra.mxu0 %v399
  %477 = vmatpush.msra.mxu0 %v398
  %478 = vmatpush.msra.mxu0 %v397
  %479 = vmatpush.msra.mxu0 %v396
  %480 = vmatpush.msra.mxu0 %v395
  %481 = vmatpush.msra.mxu0 %v394
  %482 = vmatmul.f32.gmra.mxu0 %v336
  %v483 = vpop.f32.mrf.mxu0
  %v484 = vadd.f32 %v464, %v483
  %485 = vdwg.mxu0
  %486 = vmatpush.msra.mxu0 %v425
  %487 = vmatpush.msra.mxu0 %v424
  %488 = vmatpush.msra.mxu0 %v423
  %489 = vmatpush.msra.mxu0 %v422
  %490 = vmatpush.msra.mxu0 %v421
  %491 = vmatpush.msra.mxu0 %v420
  %492 = vmatpush.msra.mxu0 %v419
  %493 = vmatpush.msra.mxu0 %v418
  %494 = vmatpush.msra.mxu0 %v417
  %495 = vmatpush.msra.mxu0 %v416
  %496 = vmatpush.msra.mxu0 %v415
  %497 = vmatpush.msra.mxu0 %v414
  %498 = vmatpush.msra.mxu0 %v413
  %499 = vmatpush.msra.mxu0 %v412
  %500 = vmatpush.msra.mxu0 %v411
  %501 = vmatpush.msra.mxu0 %v410
  %502 = vmatmul.f32.gmra.mxu0 %v356
  %v503 = vpop.f32.mrf.mxu0
  %v504 = vadd.f32 %v484, %v503
  %505 = vdwg.mxu0
  %506 = vmatpush.msra.mxu0 %v441
  %507 = vmatpush.msra.mxu0 %v440
  %508 = vmatpush.msra.mxu0 %v439
  %509 = vmatpush.msra.mxu0 %v438
  %510 = vmatpush.msra.mxu0 %v437
  %511 = vmatpush.msra.mxu0 %v436
  %512 = vmatpush.msra.mxu0 %v435
  %513 = vmatpush.msra.mxu0 %v434
  %514 = vmatpush.msra.mxu0 %v433
  %515 = vmatpush.msra.mxu0 %v432
  %516 = vmatpush.msra.mxu0 %v431
  %517 = vmatpush.msra.mxu0 %v430
  %518 = vmatpush.msra.mxu0 %v429
  %519 = vmatpush.msra.mxu0 %v428
  %520 = vmatpush.msra.mxu0 %v427
  %521 = vmatpush.msra.mxu0 %v426
  %522 = vmatmul.f32.gmra.mxu0 %v376
  %v523 = vpop.f32.mrf.mxu0
  %v524 = vadd.f32 %v504, %v523
  %525 = vdwg.mxu0
  %v526 = vld [vmem:[%s11] sm:$0x1]
  %v528 = vperm.slane %v526, 0
  %v530 = vmul.f32 %v524, %v528
  %v531 = vld [vmem:[%s12] sm:$0x1]
  %v533 = vperm.slane %v531, 0
  %v535 = vadd.f32 %v530, %v533
  %v536 = vmax.f32 %v535, 0.0
  %v537 = vld [vmem:[%s13] sm:$0xff]
  %v538 = vld [vmem:[%s13 + $0x8] sm:$0xff]
  %v539 = vld [vmem:[%s13 + $0x10] sm:$0xff]
  %v540 = vld [vmem:[%s13 + $0x18] sm:$0xff]
  %v541 = vld [vmem:[%s13 + $0x20] sm:$0xff]
  %v542 = vld [vmem:[%s13 + $0x28] sm:$0xff]
  %v543 = vld [vmem:[%s13 + $0x30] sm:$0xff]
  %v544 = vld [vmem:[%s13 + $0x38] sm:$0xff]
  %v545 = vld [vmem:[%s13 + $0x40] sm:$0xff]
  %v546 = vld [vmem:[%s13 + $0x48] sm:$0xff]
  %v547 = vld [vmem:[%s13 + $0x50] sm:$0xff]
  %v548 = vld [vmem:[%s13 + $0x58] sm:$0xff]
  %v549 = vld [vmem:[%s13 + $0x60] sm:$0xff]
  %v550 = vld [vmem:[%s13 + $0x68] sm:$0xff]
  %v551 = vld [vmem:[%s13 + $0x70] sm:$0xff]
  %v552 = vld [vmem:[%s13 + $0x78] sm:$0xff]
  %v553 = vld [vmem:[%s14] sm:$0x1]
  %v555 = vperm.slane %v553, 0
  %557 = vmatpush.msra.mxu0 %v552
  %558 = vmatpush.msra.mxu0 %v551
  %559 = vmatpush.msra.mxu0 %v550
  %560 = vmatpush.msra.mxu0 %v549
  %561 = vmatpush.msra.mxu0 %v548
  %562 = vmatpush.msra.mxu0 %v547
  %563 = vmatpush.msra.mxu0 %v546
  %564 = vmatpush.msra.mxu0 %v545
  %565 = vmatpush.msra.mxu0 %v544
  %566 = vmatpush.msra.mxu0 %v543
  %567 = vmatpush.msra.mxu0 %v542
  %568 = vmatpush.msra.mxu0 %v541
  %569 = vmatpush.msra.mxu0 %v540
  %570 = vmatpush.msra.mxu0 %v539
  %571 = vmatpush.msra.mxu0 %v538
  %572 = vmatpush.msra.mxu0 %v537
  %573 = vmatmul.f32.gmra.mxu0 %v536
  %v574 = vpop.f32.mrf.mxu0
  %v575 = vadd.f32 %v555, %v574
  %576 = vdwg.mxu0
  %v577 = vld [vmem:[%s15] sm:$0x1]
  %v579 = vperm.slane %v577, 0
  %v581 = vmul.f32 %v575, %v579
  %v582 = vld [vmem:[%s16] sm:$0x1]
  %v584 = vperm.slane %v582, 0
  %v586 = vadd.f32 %v581, %v584
  %v587 = vmax.f32 %v586, 0.0
  %v588 = vld [vmem:[%s17] sm:$0xff]
  %v589 = vld [vmem:[%s17 + $0x8] sm:$0xff]
  %v590 = vld [vmem:[%s17 + $0x10] sm:$0xff]
  %v591 = vld [vmem:[%s17 + $0x18] sm:$0xff]
  %v592 = vld [vmem:[%s18] sm:$0x1]
  %v594 = vperm.slane %v592, 0
  %vm596 = vcmask 261120
  %v598 = vsel %vm596, %v587, 0
  %600 = vmatpush.msra.mxu0 0.0
  %601 = vmatpush.msra.mxu0 0.0
  %602 = vmatpush.msra.mxu0 0.0
  %603 = vmatpush.msra.mxu0 0.0
  %604 = vmatpush.msra.mxu0 0.0
  %605 = vmatpush.msra.mxu0 0.0
  %606 = vmatpush.msra.mxu0 0.0
  %607 = vmatpush.msra.mxu0 0.0
  %608 = vmatpush.msra.mxu0 0.0
  %609 = vmatpush.msra.mxu0 0.0
  %610 = vmatpush.msra.mxu0 0.0
  %611 = vmatpush.msra.mxu0 0.0
  %612 = vmatpush.msra.mxu0 %v591
  %613 = vmatpush.msra.mxu0 %v590
  %614 = vmatpush.msra.mxu0 %v589
  %615 = vmatpush.msra.mxu0 %v588
  %616 = vmatmul.f32.gmra.mxu0 %v598
  %v617 = vpop.f32.mrf.mxu0
  %v618 = vadd.f32 %v594, %v617
  %619 = vdwg.mxu0
  %v620 = vld [vmem:[%s19] sm:$0x1]
  %v622 = vperm.slane %v620, 0
  %v624 = vmul.f32 %v618, %v622
  %v625 = vld [vmem:[%s20] sm:$0x1]
  %v627 = vperm.slane %v625, 0
  %v629 = vadd.f32 %v624, %v627
  %v630 = vmax.f32 %v629, 0.0
  %v631 = vld [vmem:[%s21] sm:$0xff]
  %v632 = vld [vmem:[#allocation2] sm:$0x1]
  %v634 = vperm.slane %v632, 0
  %vm636 = vcmask 64512
  %v638 = vsel %vm636, %v630, 0
  %640 = vmatpush.msra.mxu0 0.0
  %641 = vmatpush.msra.mxu0 0.0
  %642 = vmatpush.msra.mxu0 0.0
  %643 = vmatpush.msra.mxu0 0.0
  %644 = vmatpush.msra.mxu0 0.0
  %645 = vmatpush.msra.mxu0 0.0
  %646 = vmatpush.msra.mxu0 0.0
  %647 = vmatpush.msra.mxu0 0.0
  %648 = vmatpush.msra.mxu0 0.0
  %649 = vmatpush.msra.mxu0 0.0
  %650 = vmatpush.msra.mxu0 0.0
  %651 = vmatpush.msra.mxu0 0.0
  %652 = vmatpush.msra.mxu0 0.0
  %653 = vmatpush.msra.mxu0 0.0
  %654 = vmatpush.msra.mxu0 0.0
  %655 = vmatpush.msra.mxu0 %v631
  %656 = vmatmul.f32.gmra.mxu0 %v638
  %v657 = vpop.f32.mrf.mxu0
  %v658 = vadd.f32 %v634, %v657
  %659 = vdwg.mxu0
  %v660 = vsub.f32 0.0, %v658
  %v661 = vmul.f32 %v660, 1.442695
  %v662 = vpow.pop %v661
  %v663 = vadd.f32 %v662, 1.0
  %v664 = vrcp.pop %v663
  %v665 = vmul.f32 %v663, %v664
  %v666 = vsub.f32 1.0, %v665
  %v667 = vmul.f32 %v664, %v666
  %v668 = vadd.f32 %v664, %v667
  %vm669 = vweird.f32 %v663
  %vm670 = vweird.f32 %v664
  %vm671 = vmor %vm669, %vm670
  %v672 = vsel %vm671, %v664, %v668
  %v673 = vand.u32 2147483647, %v663
  %vm674 = vcmp.eq.f32.partialorder %v673, 8.507059e+37
  %v675 = vand.u32 %v663, 2147483648
  %v676 = vor.u32 1.1754944e-38, %v675
  %v677 = vsel %vm674, %v676, %v672
  %v678 = vmul.f32 1.0, %v677
  %vm679 = vcmask 1024
  %680 = vst.msk [vmem:[%s23] sm:$0x3] %vm679, %v678
  // Predicated region
  $region101: #{predict_forward.3} parent=0 // pred_check
    _
  $region102: #{predict_forward.3} parent=0 // pred_check_branch
    %682 = sbr.rel (0) target = $region104
  $region103: #{predict_forward.3} parent=0 // pred_region
    _
  $region104: #{predict_forward.3} parent=0 // pred_fallthru
    _
  // Predicated region
  $region105: #{predict_forward.3} parent=0 // pred_check
    _
  $region106: #{predict_forward.3} parent=0 // pred_check_branch
    %684 = sbr.rel (0) target = $region108
  $region107: #{predict_forward.3} parent=0 // pred_region
    _
  $region108: #{predict_forward.3} parent=0 // pred_fallthru
    _

// kernel: predict_forward.2
$region0: #{predict_forward.2}
  #allocation0 [shape = 'u32[]', space=smem, size = 0x4, offset = 0x4, fixed_abs, tag = 'smem constant byte address 0x4 - core index']
  #allocation1 [shape = 'u32[72,128]{1,0:T(1,128)}', space=vmem, size = 0x9000, scoped, tag = 'internal scratch']
  %s0 = inlined_call_operand.vmem [shape: f32[3,2,16,8], index: 0, kind: input, shape index: {}]
  %s1 = inlined_call_operand.vmem [shape: f32[3,56,32], index: 1, kind: input, shape index: {}]
  %s2 = inlined_call_operand.vmem [shape: f32[3,1,32], index: 2, kind: input, shape index: {}]
  %s3 = inlined_call_operand.vmem [shape: f32[2,224,32], index: 3, kind: input, shape index: {}]
  %s4 = inlined_call_operand.vmem [shape: f32[2,1,32], index: 4, kind: input, shape index: {}]
  %s5 = inlined_call_operand.vmem [shape: f32[2,20,864,32], index: 5, kind: input, shape index: {}]
  %s6 = inlined_call_operand.vmem [shape: f32[2,20,1,32], index: 6, kind: input, shape index: {}]
  %s7 = inlined_call_operand.vmem [shape: f32[2,20,864,32], index: 7, kind: input, shape index: {}]
  %s8 = inlined_call_operand.vmem [shape: f32[2,20,1,32], index: 8, kind: input, shape index: {}]
  %s9 = inlined_call_operand.vmem [shape: f32[2,20,1,32], index: 9, kind: input, shape index: {}]
  %s10 = inlined_call_operand.vmem [shape: f32[2,20,1,32], index: 10, kind: input, shape index: {}]
  %s11 = inlined_call_operand.vmem [shape: f32[2,2,320], index: 11, kind: output, shape index: {}]
  %s12 = sld [smem:[#allocation0]]
  $region84: #{predict_forward.2} parent=0
    _
  %s14 = ssub.s32 1, %s12
  %s15 = scalar_select 0, %s14, %s12
  loop: start=0, step=1, limit=4
  $region2: #{predict_forward.2} parent=0 // loop_pre_header
    _
  $region3: #{predict_forward.2} parent=0 // loop_header
    %s17 = sphi 0, %s21
    %p18 = scmp.ge.s32.totalorder %s17, 4
    %s25 = sphi 0, %s25
    %s27 = sphi 0, %s25
    %s28 = sphi 0, %s27
    %s42 = sphi 0, %s28
    %s46 = sphi 0, %s46
    %s48 = sphi 0, %s46
    %s49 = sphi 0, %s48
    %s63 = sphi 0, %s49
    %s67 = sphi 0, %s67
    %s69 = sphi 0, %s67
    %s70 = sphi 0, %s69
    %s84 = sphi 0, %s70
    %s90 = sphi 0, %s92
    %s93 = sphi 0, %s90
    %s94 = sphi 0, %s93
    %s110 = sphi 0, %s94
    %s116 = sphi 0, %s118
    %s119 = sphi 0, %s116
    %s120 = sphi 0, %s119
    %s136 = sphi 0, %s120
    %s142 = sphi 0, %s144
    %s145 = sphi 0, %s142
    %s146 = sphi 0, %s145
    %s162 = sphi 0, %s146
    %s168 = sphi 0, %s170
    %s171 = sphi 0, %s168
    %s172 = sphi 0, %s171
    %s188 = sphi 0, %s172
    %s194 = sphi 0, %s196
    %s197 = sphi 0, %s194
    %s198 = sphi 0, %s197
    %s214 = sphi 0, %s198
    %s220 = sphi 0, %s222
    %s223 = sphi 0, %s220
    %s224 = sphi 0, %s223
    %s240 = sphi 0, %s224
    %s246 = sphi 0, %s248
    %s249 = sphi 0, %s246
    %s250 = sphi 0, %s249
    %s266 = sphi 0, %s250
    %s272 = sphi 0, %s274
    %s275 = sphi 0, %s272
    %s276 = sphi 0, %s275
    %s292 = sphi 0, %s276
    %s298 = sphi 0, %s300
    %s301 = sphi 0, %s298
    %s302 = sphi 0, %s301
    %s318 = sphi 0, %s302
  $region4: #{predict_forward.2} parent=0 // loop_header_branch
    %20 = sbr.rel (%p18) target = $region8
  $region5: #{predict_forward.2} parent=0 // loop_body
    %s22 = ssub.s32 %s17, 1
    %s23 = ssub.s32 %s17, 2
    %s24 = sadd.s32 %s17, 1
    %s26 = sadd.s32 %s25, 1
    %p29 = scmp.eq.s32.totalorder %s17, 1
    %p30 = scmp.ne.s32.totalorder %s25, %s27
    %p31 = scmp.eq.s32.totalorder %s17, 0
    %p32 = por %p30, %p31
    %p33 = scmp.ne.s32.totalorder %s25, %s27
    %p34 = scmp.eq.s32.totalorder %s22, 1
    %p35 = por %p33, %p34
    %p36 = scmp.ne.s32.totalorder %s27, %s28
    %p37 = scmp.eq.s32.totalorder %s22, 0
    %p38 = por %p36, %p37
    %p39 = scmp.ne.s32.totalorder %s27, %s28
    %p40 = scmp.eq.s32.totalorder %s23, 1
    %p41 = por %p39, %p40
    %p43 = scmp.ne.s32.totalorder %s28, %s42
    %p44 = scmp.eq.s32.totalorder %s23, 0
    %p45 = por %p43, %p44
    %s47 = sadd.s32 %s46, 1
    %p50 = scmp.eq.s32.totalorder %s17, 1
    %p51 = scmp.ne.s32.totalorder %s46, %s48
    %p52 = scmp.eq.s32.totalorder %s17, 0
    %p53 = por %p51, %p52
    %p54 = scmp.ne.s32.totalorder %s46, %s48
    %p55 = scmp.eq.s32.totalorder %s22, 1
    %p56 = por %p54, %p55
    %p57 = scmp.ne.s32.totalorder %s48, %s49
    %p58 = scmp.eq.s32.totalorder %s22, 0
    %p59 = por %p57, %p58
    %p60 = scmp.ne.s32.totalorder %s48, %s49
    %p61 = scmp.eq.s32.totalorder %s23, 1
    %p62 = por %p60, %p61
    %p64 = scmp.ne.s32.totalorder %s49, %s63
    %p65 = scmp.eq.s32.totalorder %s23, 0
    %p66 = por %p64, %p65
    %s68 = sadd.s32 %s67, 1
    %p71 = scmp.eq.s32.totalorder %s17, 1
    %p72 = scmp.ne.s32.totalorder %s67, %s69
    %p73 = scmp.eq.s32.totalorder %s17, 0
    %p74 = por %p72, %p73
    %p75 = scmp.ne.s32.totalorder %s67, %s69
    %p76 = scmp.eq.s32.totalorder %s22, 1
    %p77 = por %p75, %p76
    %p78 = scmp.ne.s32.totalorder %s69, %s70
    %p79 = scmp.eq.s32.totalorder %s22, 0
    %p80 = por %p78, %p79
    %p81 = scmp.ne.s32.totalorder %s69, %s70
    %p82 = scmp.eq.s32.totalorder %s23, 1
    %p83 = por %p81, %p82
    %p85 = scmp.ne.s32.totalorder %s70, %s84
    %p86 = scmp.eq.s32.totalorder %s23, 0
    %p87 = por %p85, %p86
    %s88 = ssub.s32 %s17, %s24
    %p89 = scmp.eq.s32.totalorder %s88, 0
    %s91 = sadd.s32 %s90, 1
    %s92 = scalar_select %p89, %s90, %s91
    %p95 = pneg %p89
    %p96 = scmp.eq.s32.totalorder %s17, 1
    %p97 = por %p95, %p96
    %p98 = scmp.ne.s32.totalorder %s90, %s93
    %p99 = scmp.eq.s32.totalorder %s17, 0
    %p100 = por %p98, %p99
    %p101 = scmp.ne.s32.totalorder %s90, %s93
    %p102 = scmp.eq.s32.totalorder %s22, 1
    %p103 = por %p101, %p102
    %p104 = scmp.ne.s32.totalorder %s93, %s94
    %p105 = scmp.eq.s32.totalorder %s22, 0
    %p106 = por %p104, %p105
    %p107 = scmp.ne.s32.totalorder %s93, %s94
    %p108 = scmp.eq.s32.totalorder %s23, 1
    %p109 = por %p107, %p108
    %p111 = scmp.ne.s32.totalorder %s94, %s110
    %p112 = scmp.eq.s32.totalorder %s23, 0
    %p113 = por %p111, %p112
    %s114 = ssub.s32 %s17, %s24
    %p115 = scmp.eq.s32.totalorder %s114, 0
    %s117 = sadd.s32 %s116, 1
    %s118 = scalar_select %p115, %s116, %s117
    %p121 = pneg %p115
    %p122 = scmp.eq.s32.totalorder %s17, 1
    %p123 = por %p121, %p122
    %p124 = scmp.ne.s32.totalorder %s116, %s119
    %p125 = scmp.eq.s32.totalorder %s17, 0
    %p126 = por %p124, %p125
    %p127 = scmp.ne.s32.totalorder %s116, %s119
    %p128 = scmp.eq.s32.totalorder %s22, 1
    %p129 = por %p127, %p128
    %p130 = scmp.ne.s32.totalorder %s119, %s120
    %p131 = scmp.eq.s32.totalorder %s22, 0
    %p132 = por %p130, %p131
    %p133 = scmp.ne.s32.totalorder %s119, %s120
    %p134 = scmp.eq.s32.totalorder %s23, 1
    %p135 = por %p133, %p134
    %p137 = scmp.ne.s32.totalorder %s120, %s136
    %p138 = scmp.eq.s32.totalorder %s23, 0
    %p139 = por %p137, %p138
    %s140 = ssub.s32 %s17, %s24
    %p141 = scmp.eq.s32.totalorder %s140, 0
    %s143 = sadd.s32 %s142, 1
    %s144 = scalar_select %p141, %s142, %s143
    %p147 = pneg %p141
    %p148 = scmp.eq.s32.totalorder %s17, 1
    %p149 = por %p147, %p148
    %p150 = scmp.ne.s32.totalorder %s142, %s145
    %p151 = scmp.eq.s32.totalorder %s17, 0
    %p152 = por %p150, %p151
    %p153 = scmp.ne.s32.totalorder %s142, %s145
    %p154 = scmp.eq.s32.totalorder %s22, 1
    %p155 = por %p153, %p154
    %p156 = scmp.ne.s32.totalorder %s145, %s146
    %p157 = scmp.eq.s32.totalorder %s22, 0
    %p158 = por %p156, %p157
    %p159 = scmp.ne.s32.totalorder %s145, %s146
    %p160 = scmp.eq.s32.totalorder %s23, 1
    %p161 = por %p159, %p160
    %p163 = scmp.ne.s32.totalorder %s146, %s162
    %p164 = scmp.eq.s32.totalorder %s23, 0
    %p165 = por %p163, %p164
    %s166 = ssub.s32 %s17, %s24
    %p167 = scmp.eq.s32.totalorder %s166, 0
    %s169 = sadd.s32 %s168, 1
    %s170 = scalar_select %p167, %s168, %s169
    %p173 = pneg %p167
    %p174 = scmp.eq.s32.totalorder %s17, 1
    %p175 = por %p173, %p174
    %p176 = scmp.ne.s32.totalorder %s168, %s171
    %p177 = scmp.eq.s32.totalorder %s17, 0
    %p178 = por %p176, %p177
    %p179 = scmp.ne.s32.totalorder %s168, %s171
    %p180 = scmp.eq.s32.totalorder %s22, 1
    %p181 = por %p179, %p180
    %p182 = scmp.ne.s32.totalorder %s171, %s172
    %p183 = scmp.eq.s32.totalorder %s22, 0
    %p184 = por %p182, %p183
    %p185 = scmp.ne.s32.totalorder %s171, %s172
    %p186 = scmp.eq.s32.totalorder %s23, 1
    %p187 = por %p185, %p186
    %p189 = scmp.ne.s32.totalorder %s172, %s188
    %p190 = scmp.eq.s32.totalorder %s23, 0
    %p191 = por %p189, %p190
    %s192 = ssub.s32 %s17, %s24
    %p193 = scmp.eq.s32.totalorder %s192, 0
    %s195 = sadd.s32 %s194, 1
    %s196 = scalar_select %p193, %s194, %s195
    %p199 = pneg %p193
    %p200 = scmp.eq.s32.totalorder %s17, 1
    %p201 = por %p199, %p200
    %p202 = scmp.ne.s32.totalorder %s194, %s197
    %p203 = scmp.eq.s32.totalorder %s17, 0
    %p204 = por %p202, %p203
    %p205 = scmp.ne.s32.totalorder %s194, %s197
    %p206 = scmp.eq.s32.totalorder %s22, 1
    %p207 = por %p205, %p206
    %p208 = scmp.ne.s32.totalorder %s197, %s198
    %p209 = scmp.eq.s32.totalorder %s22, 0
    %p210 = por %p208, %p209
    %p211 = scmp.ne.s32.totalorder %s197, %s198
    %p212 = scmp.eq.s32.totalorder %s23, 1
    %p213 = por %p211, %p212
    %p215 = scmp.ne.s32.totalorder %s198, %s214
    %p216 = scmp.eq.s32.totalorder %s23, 0
    %p217 = por %p215, %p216
    %s218 = ssub.s32 %s17, %s24
    %p219 = scmp.eq.s32.totalorder %s218, 0
    %s221 = sadd.s32 %s220, 1
    %s222 = scalar_select %p219, %s220, %s221
    %p225 = pneg %p219
    %p226 = scmp.eq.s32.totalorder %s17, 1
    %p227 = por %p225, %p226
    %p228 = scmp.ne.s32.totalorder %s220, %s223
    %p229 = scmp.eq.s32.totalorder %s17, 0
    %p230 = por %p228, %p229
    %p231 = scmp.ne.s32.totalorder %s220, %s223
    %p232 = scmp.eq.s32.totalorder %s22, 1
    %p233 = por %p231, %p232
    %p234 = scmp.ne.s32.totalorder %s223, %s224
    %p235 = scmp.eq.s32.totalorder %s22, 0
    %p236 = por %p234, %p235
    %p237 = scmp.ne.s32.totalorder %s223, %s224
    %p238 = scmp.eq.s32.totalorder %s23, 1
    %p239 = por %p237, %p238
    %p241 = scmp.ne.s32.totalorder %s224, %s240
    %p242 = scmp.eq.s32.totalorder %s23, 0
    %p243 = por %p241, %p242
    %s244 = ssub.s32 %s17, %s24
    %p245 = scmp.eq.s32.totalorder %s244, 0
    %s247 = sadd.s32 %s246, 1
    %s248 = scalar_select %p245, %s246, %s247
    %p251 = pneg %p245
    %p252 = scmp.eq.s32.totalorder %s17, 1
    %p253 = por %p251, %p252
    %p254 = scmp.ne.s32.totalorder %s246, %s249
    %p255 = scmp.eq.s32.totalorder %s17, 0
    %p256 = por %p254, %p255
    %p257 = scmp.ne.s32.totalorder %s246, %s249
    %p258 = scmp.eq.s32.totalorder %s22, 1
    %p259 = por %p257, %p258
    %p260 = scmp.ne.s32.totalorder %s249, %s250
    %p261 = scmp.eq.s32.totalorder %s22, 0
    %p262 = por %p260, %p261
    %p263 = scmp.ne.s32.totalorder %s249, %s250
    %p264 = scmp.eq.s32.totalorder %s23, 1
    %p265 = por %p263, %p264
    %p267 = scmp.ne.s32.totalorder %s250, %s266
    %p268 = scmp.eq.s32.totalorder %s23, 0
    %p269 = por %p267, %p268
    %s270 = ssub.s32 %s17, %s24
    %p271 = scmp.eq.s32.totalorder %s270, 0
    %s273 = sadd.s32 %s272, 1
    %s274 = scalar_select %p271, %s272, %s273
    %p277 = pneg %p271
    %p278 = scmp.eq.s32.totalorder %s17, 1
    %p279 = por %p277, %p278
    %p280 = scmp.ne.s32.totalorder %s272, %s275
    %p281 = scmp.eq.s32.totalorder %s17, 0
    %p282 = por %p280, %p281
    %p283 = scmp.ne.s32.totalorder %s272, %s275
    %p284 = scmp.eq.s32.totalorder %s22, 1
    %p285 = por %p283, %p284
    %p286 = scmp.ne.s32.totalorder %s275, %s276
    %p287 = scmp.eq.s32.totalorder %s22, 0
    %p288 = por %p286, %p287
    %p289 = scmp.ne.s32.totalorder %s275, %s276
    %p290 = scmp.eq.s32.totalorder %s23, 1
    %p291 = por %p289, %p290
    %p293 = scmp.ne.s32.totalorder %s276, %s292
    %p294 = scmp.eq.s32.totalorder %s23, 0
    %p295 = por %p293, %p294
    %s296 = ssub.s32 %s17, %s24
    %p297 = scmp.eq.s32.totalorder %s296, 0
    %s299 = sadd.s32 %s298, 1
    %s300 = scalar_select %p297, %s298, %s299
    %p303 = pneg %p297
    %p304 = scmp.eq.s32.totalorder %s17, 1
    %p305 = por %p303, %p304
    %p306 = scmp.ne.s32.totalorder %s298, %s301
    %p307 = scmp.eq.s32.totalorder %s17, 0
    %p308 = por %p306, %p307
    %p309 = scmp.ne.s32.totalorder %s298, %s301
    %p310 = scmp.eq.s32.totalorder %s22, 1
    %p311 = por %p309, %p310
    %p312 = scmp.ne.s32.totalorder %s301, %s302
    %p313 = scmp.eq.s32.totalorder %s22, 0
    %p314 = por %p312, %p313
    %p315 = scmp.ne.s32.totalorder %s301, %s302
    %p316 = scmp.eq.s32.totalorder %s23, 1
    %p317 = por %p315, %p316
    %p319 = scmp.ne.s32.totalorder %s302, %s318
    %p320 = scmp.eq.s32.totalorder %s23, 0
    %p321 = por %p319, %p320
    %p322 = scmp.le.s32.totalorder 1, %s17
    %p323 = scmp.lt.s32.totalorder %s17, 3
    %p324 = pnand %p322, %p323
    %p325 = pneg %p324
    // Predicated region
    $region9: #{predict_forward.2} parent=5 // pred_check
      _
    $region10: #{predict_forward.2} parent=5 // pred_check_branch
      %327 = sbr.rel (%p324) target = $region12
    $region11: #{predict_forward.2} parent=5 // pred_region
      %s328 = ssub.s32 %s17, 1
      // Predicated region
      $region13: #{predict_forward.2} parent=11 // pred_check
        %p329 = pneg %p38
      $region14: #{predict_forward.2} parent=11 // pred_check_branch
        %331 = sbr.rel (%p329) target = $region16
      $region15: #{predict_forward.2} parent=11 // pred_region
        _
      $region16: #{predict_forward.2} parent=11 // pred_fallthru
        _
      // Predicated region
      $region17: #{predict_forward.2} parent=11 // pred_check
        %p332 = pneg %p59
      $region18: #{predict_forward.2} parent=11 // pred_check_branch
        %334 = sbr.rel (%p332) target = $region20
      $region19: #{predict_forward.2} parent=11 // pred_region
        _
      $region20: #{predict_forward.2} parent=11 // pred_fallthru
        _
      // Predicated region
      $region21: #{predict_forward.2} parent=11 // pred_check
        %p335 = pneg %p80
      $region22: #{predict_forward.2} parent=11 // pred_check_branch
        %337 = sbr.rel (%p335) target = $region24
      $region23: #{predict_forward.2} parent=11 // pred_region
        _
      $region24: #{predict_forward.2} parent=11 // pred_fallthru
        _
    $region12: #{predict_forward.2} parent=5 // pred_fallthru
      _
    %p338 = scmp.lt.s32.totalorder %s17, 2
    // Predicated region
    $region25: #{predict_forward.2} parent=5 // pred_check
      %p339 = pneg %p338
    $region26: #{predict_forward.2} parent=5 // pred_check_branch
      %341 = sbr.rel (%p339) target = $region28
    $region27: #{predict_forward.2} parent=5 // pred_region
      // Predicated region
      $region29: #{predict_forward.2} parent=27 // pred_check
        %p342 = pneg %p100
      $region30: #{predict_forward.2} parent=27 // pred_check_branch
        %344 = sbr.rel (%p342) target = $region32
      $region31: #{predict_forward.2} parent=27 // pred_region
        %p345 = scmp.lt.s32.totalorder %s17, 1
        %s346 = scalar_select %p345, %s17, 1
        %s347 = smul.addr %s346, 28
        %s348 = smul.addr %s347, 8
        %s349 = scalar_lea.vmem %s3, %s348
      $region32: #{predict_forward.2} parent=27 // pred_fallthru
        _
      // Predicated region
      $region33: #{predict_forward.2} parent=27 // pred_check
        %p350 = pneg %p126
      $region34: #{predict_forward.2} parent=27 // pred_check_branch
        %352 = sbr.rel (%p350) target = $region36
      $region35: #{predict_forward.2} parent=27 // pred_region
        %p353 = scmp.lt.s32.totalorder %s17, 1
        %s354 = scalar_select %p353, %s17, 1
        %s355 = scalar_lea.vmem %s4, %s354
      $region36: #{predict_forward.2} parent=27 // pred_fallthru
        _
      // Predicated region
      $region37: #{predict_forward.2} parent=27 // pred_check
        %p356 = pneg %p152
      $region38: #{predict_forward.2} parent=27 // pred_check_branch
        %358 = sbr.rel (%p356) target = $region40
      $region39: #{predict_forward.2} parent=27 // pred_region
        %p359 = scmp.lt.s32.totalorder %s17, 1
        %s360 = scalar_select %p359, %s17, 1
        %s361 = smul.addr %s360, 2160
        %s362 = smul.addr %s361, 8
        %s363 = scalar_lea.vmem %s5, %s362
      $region40: #{predict_forward.2} parent=27 // pred_fallthru
        _
      // Predicated region
      $region41: #{predict_forward.2} parent=27 // pred_check
        %p364 = pneg %p178
      $region42: #{predict_forward.2} parent=27 // pred_check_branch
        %366 = sbr.rel (%p364) target = $region44
      $region43: #{predict_forward.2} parent=27 // pred_region
        %p367 = scmp.lt.s32.totalorder %s17, 1
        %s368 = scalar_select %p367, %s17, 1
        %s369 = smul.addr %s368, 20
        %s370 = scalar_lea.vmem %s6, %s369
      $region44: #{predict_forward.2} parent=27 // pred_fallthru
        _
      // Predicated region
      $region45: #{predict_forward.2} parent=27 // pred_check
        %p371 = pneg %p204
      $region46: #{predict_forward.2} parent=27 // pred_check_branch
        %373 = sbr.rel (%p371) target = $region48
      $region47: #{predict_forward.2} parent=27 // pred_region
        %p374 = scmp.lt.s32.totalorder %s17, 1
        %s375 = scalar_select %p374, %s17, 1
        %s376 = smul.addr %s375, 2160
        %s377 = smul.addr %s376, 8
        %s378 = scalar_lea.vmem %s7, %s377
      $region48: #{predict_forward.2} parent=27 // pred_fallthru
        _
      // Predicated region
      $region49: #{predict_forward.2} parent=27 // pred_check
        %p379 = pneg %p230
      $region50: #{predict_forward.2} parent=27 // pred_check_branch
        %381 = sbr.rel (%p379) target = $region52
      $region51: #{predict_forward.2} parent=27 // pred_region
        %p382 = scmp.lt.s32.totalorder %s17, 1
        %s383 = scalar_select %p382, %s17, 1
        %s384 = smul.addr %s383, 20
        %s385 = scalar_lea.vmem %s8, %s384
      $region52: #{predict_forward.2} parent=27 // pred_fallthru
        _
      // Predicated region
      $region53: #{predict_forward.2} parent=27 // pred_check
        %p386 = pneg %p256
      $region54: #{predict_forward.2} parent=27 // pred_check_branch
        %388 = sbr.rel (%p386) target = $region56
      $region55: #{predict_forward.2} parent=27 // pred_region
        %p389 = scmp.lt.s32.totalorder %s17, 1
        %s390 = scalar_select %p389, %s17, 1
        %s391 = smul.addr %s390, 20
        %s392 = scalar_lea.vmem %s9, %s391
      $region56: #{predict_forward.2} parent=27 // pred_fallthru
        _
      // Predicated region
      $region57: #{predict_forward.2} parent=27 // pred_check
        %p393 = pneg %p282
      $region58: #{predict_forward.2} parent=27 // pred_check_branch
        %395 = sbr.rel (%p393) target = $region60
      $region59: #{predict_forward.2} parent=27 // pred_region
        %p396 = scmp.lt.s32.totalorder %s17, 1
        %s397 = scalar_select %p396, %s17, 1
        %s398 = smul.addr %s397, 20
        %s399 = scalar_lea.vmem %s10, %s398
      $region60: #{predict_forward.2} parent=27 // pred_fallthru
        _
    $region28: #{predict_forward.2} parent=5 // pred_fallthru
      _
    %p400 = scmp.le.s32.totalorder 1, %s17
    %p401 = scmp.lt.s32.totalorder %s17, 3
    %p402 = pnand %p400, %p401
    %p403 = pneg %p402
    // Predicated region
    $region61: #{predict_forward.2} parent=5 // pred_check
      _
    $region62: #{predict_forward.2} parent=5 // pred_check_branch
      %405 = sbr.rel (%p402) target = $region64
    $region63: #{predict_forward.2} parent=5 // pred_region
      %s406 = ssub.s32 %s17, 1
      %p407 = pneg %p38
      %p408 = pneg %p35
      %p409 = pneg %p59
      %p410 = pneg %p56
      %p411 = pneg %p80
      %p412 = pneg %p77
      %p413 = scmp.lt.s32.totalorder %s22, 1
      %s414 = scalar_select %p413, %s22, 1
      %s415 = smul.addr %s414, 28
      %s416 = smul.addr %s415, 8
      %s417 = scalar_lea.vmem %s3, %s416
      %p418 = pneg %p106
      %p419 = pneg %p103
      %p420 = scmp.lt.s32.totalorder %s22, 1
      %s421 = scalar_select %p420, %s22, 1
      %s422 = scalar_lea.vmem %s4, %s421
      %p423 = pneg %p132
      %p424 = pneg %p129
      %p425 = scmp.lt.s32.totalorder %s22, 1
      %s426 = scalar_select %p425, %s22, 1
      %s427 = smul.addr %s426, 2160
      %s428 = smul.addr %s427, 8
      %s429 = scalar_lea.vmem %s5, %s428
      %p430 = pneg %p158
      %p431 = pneg %p155
      %p432 = scmp.lt.s32.totalorder %s22, 1
      %s433 = scalar_select %p432, %s22, 1
      %s434 = smul.addr %s433, 20
      %s435 = scalar_lea.vmem %s6, %s434
      %p436 = pneg %p184
      %p437 = pneg %p181
      %p438 = scmp.lt.s32.totalorder %s22, 1
      %s439 = scalar_select %p438, %s22, 1
      %s440 = smul.addr %s439, 2160
      %s441 = smul.addr %s440, 8
      %s442 = scalar_lea.vmem %s7, %s441
      %p443 = pneg %p210
      %p444 = pneg %p207
      %p445 = scmp.lt.s32.totalorder %s22, 1
      %s446 = scalar_select %p445, %s22, 1
      %s447 = smul.addr %s446, 20
      %s448 = scalar_lea.vmem %s8, %s447
      %p449 = pneg %p236
      %p450 = pneg %p233
      %p451 = scmp.lt.s32.totalorder %s22, 1
      %s452 = scalar_select %p451, %s22, 1
      %s453 = smul.addr %s452, 20
      %s454 = scalar_lea.vmem %s9, %s453
      %p455 = pneg %p262
      %p456 = pneg %p259
      %p457 = scmp.lt.s32.totalorder %s22, 1
      %s458 = scalar_select %p457, %s22, 1
      %s459 = smul.addr %s458, 20
      %s460 = scalar_lea.vmem %s10, %s459
      %p461 = pneg %p288
      %p462 = pneg %p285
      %p463 = pneg %p314
      %p464 = pneg %p311
      %p465 = scmp.lt.s32.totalorder %s22, 1
      %s466 = scalar_select %p465, %s22, 1
      %s467 = smul.addr %s466, 3
      %s468 = smul.addr %s467, 2
      %s469 = scalar_lea.vmem %s11, %s468
      %p470 = scmp.lt.s32.totalorder %s22, 1
      %s471 = scalar_select %p470, %s22, 1
      %s472 = smul.addr %s471, 28
      %s473 = smul.addr %s472, 8
      %s474 = scalar_lea.vmem %s3, %s473
      %p475 = scmp.lt.s32.totalorder %s22, 1
      %s476 = scalar_select %p475, %s22, 1
      %s477 = scalar_lea.vmem %s4, %s476
      %p478 = scmp.lt.s32.totalorder %s22, 1
      %s479 = scalar_select %p478, %s22, 1
      %s480 = smul.addr %s479, 2160
      %s481 = smul.addr %s480, 8
      %s482 = scalar_lea.vmem %s5, %s481
      %p483 = scmp.lt.s32.totalorder %s22, 1
      %s484 = scalar_select %p483, %s22, 1
      %s485 = smul.addr %s484, 20
      %s486 = scalar_lea.vmem %s6, %s485
      %p487 = scmp.lt.s32.totalorder %s22, 1
      %s488 = scalar_select %p487, %s22, 1
      %s489 = smul.addr %s488, 2160
      %s490 = smul.addr %s489, 8
      %s491 = scalar_lea.vmem %s7, %s490
      %p492 = scmp.lt.s32.totalorder %s22, 1
      %s493 = scalar_select %p492, %s22, 1
      %s494 = smul.addr %s493, 20
      %s495 = scalar_lea.vmem %s8, %s494
      %p496 = scmp.lt.s32.totalorder %s22, 1
      %s497 = scalar_select %p496, %s22, 1
      %s498 = smul.addr %s497, 20
      %s499 = scalar_lea.vmem %s9, %s498
      %p500 = scmp.lt.s32.totalorder %s22, 1
      %s501 = scalar_select %p500, %s22, 1
      %s502 = smul.addr %s501, 20
      %s503 = scalar_lea.vmem %s10, %s502
      %p504 = scmp.lt.s32.totalorder %s22, 1
      %s505 = scalar_select %p504, %s22, 1
      %s506 = smul.addr %s505, 3
      %s507 = smul.addr %s506, 2
      %s508 = scalar_lea.vmem %s11, %s507
      %v509 = vld [vmem:[%s0] sm:$0xff]
      %v510 = vld [vmem:[%s0 + $0x8] sm:$0xff]
      %vm513 = vcmask 1042432
      %v514 = vrot.slane %v509, 5
      %v515 = vrot.slane %v510, 5
      %v516 = vsel %vm513, %v514, %v515
      %v520 = vsel %vm513, 0.0, %v514
      %v521 = vsel %vm513, %v515, 0.0
      %vm524 = vcmask 1046528
      %v525 = vrot.slane %v520, 1
      %v526 = vrot.slane %v516, 1
      %v527 = vsel %vm524, %v525, %v526
      %v528 = vrot.slane %v521, 1
      %v529 = vsel %vm524, %v526, %v528
      %530 = vrot.lane.b32.xlu0 %v527, 8
      %v531 = vpop.permute.xlu0 %530
      %532 = vrot.lane.b32.xlu0 %v529, 8
      %v533 = vpop.permute.xlu0 %532
      %vm536 = vcmask 1045504
      %v537 = vrot.slane %v520, 2
      %v538 = vrot.slane %v516, 2
      %v539 = vsel %vm536, %v537, %v538
      %v540 = vrot.slane %v521, 2
      %v541 = vsel %vm536, %v538, %v540
      %542 = vrot.lane.b32.xlu0 %v539, 16
      %v543 = vpop.permute.xlu0 %542
      %544 = vrot.lane.b32.xlu0 %v541, 16
      %v545 = vpop.permute.xlu0 %544
      %vm548 = vcmask 1044480
      %v549 = vrot.slane %v520, 3
      %v550 = vrot.slane %v516, 3
      %v551 = vsel %vm548, %v549, %v550
      %v552 = vrot.slane %v521, 3
      %v553 = vsel %vm548, %v550, %v552
      %554 = vrot.lane.b32.xlu0 %v551, 24
      %v555 = vpop.permute.xlu0 %554
      %556 = vrot.lane.b32.xlu0 %v553, 24
      %v557 = vpop.permute.xlu0 %556
      %vm560 = vcmask 1043456
      %v561 = vrot.slane %v520, 4
      %v562 = vrot.slane %v516, 4
      %v563 = vsel %vm560, %v561, %v562
      %v564 = vrot.slane %v521, 4
      %v565 = vsel %vm560, %v562, %v564
      %566 = vrot.lane.b32.xlu0 %v563, 32
      %v567 = vpop.permute.xlu0 %566
      %568 = vrot.lane.b32.xlu0 %v565, 32
      %v569 = vpop.permute.xlu0 %568
      %v572 = vrot.slane %v520, 5
      %v573 = vrot.slane %v516, 5
      %v574 = vsel %vm513, %v572, %v573
      %v575 = vrot.slane %v521, 5
      %v576 = vsel %vm513, %v573, %v575
      %577 = vrot.lane.b32.xlu0 %v574, 40
      %v578 = vpop.permute.xlu0 %577
      %579 = vrot.lane.b32.xlu0 %v576, 40
      %v580 = vpop.permute.xlu0 %579
      %vm583 = vcmask 1041408
      %v584 = vrot.slane %v520, 6
      %v585 = vrot.slane %v516, 6
      %v586 = vsel %vm583, %v584, %v585
      %v587 = vrot.slane %v521, 6
      %v588 = vsel %vm583, %v585, %v587
      %589 = vrot.lane.b32.xlu0 %v586, 48
      %v590 = vpop.permute.xlu0 %589
      %591 = vrot.lane.b32.xlu0 %v588, 48
      %v592 = vpop.permute.xlu0 %591
      %vm595 = vcmask 64512
      %v596 = vsel %vm595, %v520, %v531
      %v597 = vsel %vm595, %v516, %v533
      %vm598 = vcmask 130048
      %v599 = vsel %vm598, %v596, %v543
      %v600 = vsel %vm598, %v597, %v545
      %vm601 = vcmask 195584
      %v602 = vsel %vm601, %v599, %v555
      %v603 = vsel %vm601, %v600, %v557
      %vm604 = vcmask 261120
      %v605 = vsel %vm604, %v602, %v567
      %v606 = vsel %vm604, %v603, %v569
      %vm607 = vcmask 326656
      %v608 = vsel %vm607, %v605, %v578
      %v609 = vsel %vm607, %v606, %v580
      %vm610 = vcmask 392192
      %v611 = vsel %vm610, %v608, %v590
      %v612 = vsel %vm610, %v609, %v592
      %s613 = scalar_lea.vmem %s0, 16
      %v614 = vld [vmem:[%s613] sm:$0xff]
      %v615 = vld [vmem:[%s613 + $0x8] sm:$0xff]
      %v618 = vrot.slane %v614, 5
      %v619 = vrot.slane %v615, 5
      %v620 = vsel %vm513, %v618, %v619
      %v624 = vsel %vm513, 0.0, %v618
      %v625 = vsel %vm513, %v619, 0.0
      %v628 = vrot.slane %v624, 1
      %v629 = vrot.slane %v620, 1
      %v630 = vsel %vm524, %v628, %v629
      %v631 = vrot.slane %v625, 1
      %v632 = vsel %vm524, %v629, %v631
      %633 = vrot.lane.b32.xlu0 %v630, 8
      %v634 = vpop.permute.xlu0 %633
      %635 = vrot.lane.b32.xlu0 %v632, 8
      %v636 = vpop.permute.xlu0 %635
      %v639 = vrot.slane %v624, 2
      %v640 = vrot.slane %v620, 2
      %v641 = vsel %vm536, %v639, %v640
      %v642 = vrot.slane %v625, 2
      %v643 = vsel %vm536, %v640, %v642
      %644 = vrot.lane.b32.xlu0 %v641, 16
      %v645 = vpop.permute.xlu0 %644
      %646 = vrot.lane.b32.xlu0 %v643, 16
      %v647 = vpop.permute.xlu0 %646
      %v650 = vrot.slane %v624, 3
      %v651 = vrot.slane %v620, 3
      %v652 = vsel %vm548, %v650, %v651
      %v653 = vrot.slane %v625, 3
      %v654 = vsel %vm548, %v651, %v653
      %655 = vrot.lane.b32.xlu0 %v652, 24
      %v656 = vpop.permute.xlu0 %655
      %657 = vrot.lane.b32.xlu0 %v654, 24
      %v658 = vpop.permute.xlu0 %657
      %v661 = vrot.slane %v624, 4
      %v662 = vrot.slane %v620, 4
      %v663 = vsel %vm560, %v661, %v662
      %v664 = vrot.slane %v625, 4
      %v665 = vsel %vm560, %v662, %v664
      %666 = vrot.lane.b32.xlu0 %v663, 32
      %v667 = vpop.permute.xlu0 %666
      %668 = vrot.lane.b32.xlu0 %v665, 32
      %v669 = vpop.permute.xlu0 %668
      %v672 = vrot.slane %v624, 5
      %v673 = vrot.slane %v620, 5
      %v674 = vsel %vm513, %v672, %v673
      %v675 = vrot.slane %v625, 5
      %v676 = vsel %vm513, %v673, %v675
      %677 = vrot.lane.b32.xlu0 %v674, 40
      %v678 = vpop.permute.xlu0 %677
      %679 = vrot.lane.b32.xlu0 %v676, 40
      %v680 = vpop.permute.xlu0 %679
      %v683 = vrot.slane %v624, 6
      %v684 = vrot.slane %v620, 6
      %v685 = vsel %vm583, %v683, %v684
      %v686 = vrot.slane %v625, 6
      %v687 = vsel %vm583, %v684, %v686
      %688 = vrot.lane.b32.xlu0 %v685, 48
      %v689 = vpop.permute.xlu0 %688
      %690 = vrot.lane.b32.xlu0 %v687, 48
      %v691 = vpop.permute.xlu0 %690
      %v694 = vsel %vm595, %v624, %v634
      %v695 = vsel %vm595, %v620, %v636
      %v696 = vsel %vm598, %v694, %v645
      %v697 = vsel %vm598, %v695, %v647
      %v698 = vsel %vm601, %v696, %v656
      %v699 = vsel %vm601, %v697, %v658
      %v700 = vsel %vm604, %v698, %v667
      %v701 = vsel %vm604, %v699, %v669
      %v702 = vsel %vm607, %v700, %v678
      %v703 = vsel %vm607, %v701, %v680
      %v704 = vsel %vm610, %v702, %v689
      %v705 = vsel %vm610, %v703, %v691
      %v706 = vld [vmem:[%s1] sm:$0xff]
      %v707 = vld [vmem:[%s1 + $0x8] sm:$0xff]
      %v708 = vld [vmem:[%s1 + $0x10] sm:$0xff]
      %v709 = vld [vmem:[%s1 + $0x18] sm:$0xff]
      %v710 = vld [vmem:[%s1 + $0x20] sm:$0xff]
      %v711 = vld [vmem:[%s1 + $0x28] sm:$0xff]
      %v712 = vld [vmem:[%s1 + $0x30] sm:$0xff]
      %v713 = vld [vmem:[%s2] sm:$0x1]
      %v715 = vperm.slane %v713, 0
      %vm717 = vcmask 457728
      %v719 = vsel %vm717, %v611, 0
      %v722 = vsel %vm717, %v612, 0
      %v725 = vsel %vm717, %v704, 0
      %v728 = vsel %vm717, %v705, 0
      %730 = vmatpush.msra.mxu0 0.0
      %731 = vmatpush.msra.mxu0 0.0
      %732 = vmatpush.msra.mxu0 0.0
      %733 = vmatpush.msra.mxu0 0.0
      %734 = vmatpush.msra.mxu0 0.0
      %735 = vmatpush.msra.mxu0 0.0
      %736 = vmatpush.msra.mxu0 0.0
      %737 = vmatpush.msra.mxu0 0.0
      %738 = vmatpush.msra.mxu0 0.0
      %739 = vmatpush.msra.mxu0 %v712
      %740 = vmatpush.msra.mxu0 %v711
      %741 = vmatpush.msra.mxu0 %v710
      %742 = vmatpush.msra.mxu0 %v709
      %743 = vmatpush.msra.mxu0 %v708
      %744 = vmatpush.msra.mxu0 %v707
      %745 = vmatpush.msra.mxu0 %v706
      %746 = vmatmul.f32.gmra.mxu0 %v719
      %v747 = vpop.f32.mrf.mxu0
      %v748 = vadd.f32 %v715, %v747
      %749 = vmatmul.f32.gmra.mxu0 %v722
      %v750 = vpop.f32.mrf.mxu0
      %v751 = vadd.f32 %v715, %v750
      %752 = vmatmul.f32.gmra.mxu0 %v725
      %v753 = vpop.f32.mrf.mxu0
      %v754 = vadd.f32 %v715, %v753
      %755 = vmatmul.f32.gmra.mxu0 %v728
      %v756 = vpop.f32.mrf.mxu0
      %v757 = vadd.f32 %v715, %v756
      %758 = vdwg.mxu0
      %v759 = vmax.f32 %v748, 0.0
      %v760 = vmax.f32 %v751, 0.0
      %v761 = vmax.f32 %v754, 0.0
      %v762 = vmax.f32 %v757, 0.0
      %v763 = vadd.f32 %v759, 0.0
      %v764 = vadd.f32 %v760, 0.0
      %v765 = vadd.f32 %v761, 0.0
      %v766 = vadd.f32 %v762, 0.0
      %s767 = scalar_lea.vmem %s0, 32
      %v768 = vld [vmem:[%s767] sm:$0xff]
      %v769 = vld [vmem:[%s767 + $0x8] sm:$0xff]
      %v772 = vrot.slane %v768, 5
      %v773 = vrot.slane %v769, 5
      %v774 = vsel %vm513, %v772, %v773
      %v778 = vsel %vm513, 0.0, %v772
      %v779 = vsel %vm513, %v773, 0.0
      %v782 = vrot.slane %v778, 1
      %v783 = vrot.slane %v774, 1
      %v784 = vsel %vm524, %v782, %v783
      %v785 = vrot.slane %v779, 1
      %v786 = vsel %vm524, %v783, %v785
      %787 = vrot.lane.b32.xlu0 %v784, 8
      %v788 = vpop.permute.xlu0 %787
      %789 = vrot.lane.b32.xlu0 %v786, 8
      %v790 = vpop.permute.xlu0 %789
      %v793 = vrot.slane %v778, 2
      %v794 = vrot.slane %v774, 2
      %v795 = vsel %vm536, %v793, %v794
      %v796 = vrot.slane %v779, 2
      %v797 = vsel %vm536, %v794, %v796
      %798 = vrot.lane.b32.xlu0 %v795, 16
      %v799 = vpop.permute.xlu0 %798
      %800 = vrot.lane.b32.xlu0 %v797, 16
      %v801 = vpop.permute.xlu0 %800
      %v804 = vrot.slane %v778, 3
      %v805 = vrot.slane %v774, 3
      %v806 = vsel %vm548, %v804, %v805
      %v807 = vrot.slane %v779, 3
      %v808 = vsel %vm548, %v805, %v807
      %809 = vrot.lane.b32.xlu0 %v806, 24
      %v810 = vpop.permute.xlu0 %809
      %811 = vrot.lane.b32.xlu0 %v808, 24
      %v812 = vpop.permute.xlu0 %811
      %v815 = vrot.slane %v778, 4
      %v816 = vrot.slane %v774, 4
      %v817 = vsel %vm560, %v815, %v816
      %v818 = vrot.slane %v779, 4
      %v819 = vsel %vm560, %v816, %v818
      %820 = vrot.lane.b32.xlu0 %v817, 32
      %v821 = vpop.permute.xlu0 %820
      %822 = vrot.lane.b32.xlu0 %v819, 32
      %v823 = vpop.permute.xlu0 %822
      %v826 = vrot.slane %v778, 5
      %v827 = vrot.slane %v774, 5
      %v828 = vsel %vm513, %v826, %v827
      %v829 = vrot.slane %v779, 5
      %v830 = vsel %vm513, %v827, %v829
      %831 = vrot.lane.b32.xlu0 %v828, 40
      %v832 = vpop.permute.xlu0 %831
      %833 = vrot.lane.b32.xlu0 %v830, 40
      %v834 = vpop.permute.xlu0 %833
      %v837 = vrot.slane %v778, 6
      %v838 = vrot.slane %v774, 6
      %v839 = vsel %vm583, %v837, %v838
      %v840 = vrot.slane %v779, 6
      %v841 = vsel %vm583, %v838, %v840
      %842 = vrot.lane.b32.xlu0 %v839, 48
      %v843 = vpop.permute.xlu0 %842
      %844 = vrot.lane.b32.xlu0 %v841, 48
      %v845 = vpop.permute.xlu0 %844
      %v848 = vsel %vm595, %v778, %v788
      %v849 = vsel %vm595, %v774, %v790
      %v850 = vsel %vm598, %v848, %v799
      %v851 = vsel %vm598, %v849, %v801
      %v852 = vsel %vm601, %v850, %v810
      %v853 = vsel %vm601, %v851, %v812
      %v854 = vsel %vm604, %v852, %v821
      %v855 = vsel %vm604, %v853, %v823
      %v856 = vsel %vm607, %v854, %v832
      %v857 = vsel %vm607, %v855, %v834
      %v858 = vsel %vm610, %v856, %v843
      %v859 = vsel %vm610, %v857, %v845
      %s860 = scalar_lea.vmem %s0, 48
      %v861 = vld [vmem:[%s860] sm:$0xff]
      %v862 = vld [vmem:[%s860 + $0x8] sm:$0xff]
      %v865 = vrot.slane %v861, 5
      %v866 = vrot.slane %v862, 5
      %v867 = vsel %vm513, %v865, %v866
      %v871 = vsel %vm513, 0.0, %v865
      %v872 = vsel %vm513, %v866, 0.0
      %v875 = vrot.slane %v871, 1
      %v876 = vrot.slane %v867, 1
      %v877 = vsel %vm524, %v875, %v876
      %v878 = vrot.slane %v872, 1
      %v879 = vsel %vm524, %v876, %v878
      %880 = vrot.lane.b32.xlu0 %v877, 8
      %v881 = vpop.permute.xlu0 %880
      %882 = vrot.lane.b32.xlu0 %v879, 8
      %v883 = vpop.permute.xlu0 %882
      %v886 = vrot.slane %v871, 2
      %v887 = vrot.slane %v867, 2
      %v888 = vsel %vm536, %v886, %v887
      %v889 = vrot.slane %v872, 2
      %v890 = vsel %vm536, %v887, %v889
      %891 = vrot.lane.b32.xlu0 %v888, 16
      %v892 = vpop.permute.xlu0 %891
      %893 = vrot.lane.b32.xlu0 %v890, 16
      %v894 = vpop.permute.xlu0 %893
      %v897 = vrot.slane %v871, 3
      %v898 = vrot.slane %v867, 3
      %v899 = vsel %vm548, %v897, %v898
      %v900 = vrot.slane %v872, 3
      %v901 = vsel %vm548, %v898, %v900
      %902 = vrot.lane.b32.xlu0 %v899, 24
      %v903 = vpop.permute.xlu0 %902
      %904 = vrot.lane.b32.xlu0 %v901, 24
      %v905 = vpop.permute.xlu0 %904
      %v908 = vrot.slane %v871, 4
      %v909 = vrot.slane %v867, 4
      %v910 = vsel %vm560, %v908, %v909
      %v911 = vrot.slane %v872, 4
      %v912 = vsel %vm560, %v909, %v911
      %913 = vrot.lane.b32.xlu0 %v910, 32
      %v914 = vpop.permute.xlu0 %913
      %915 = vrot.lane.b32.xlu0 %v912, 32
      %v916 = vpop.permute.xlu0 %915
      %v919 = vrot.slane %v871, 5
      %v920 = vrot.slane %v867, 5
      %v921 = vsel %vm513, %v919, %v920
      %v922 = vrot.slane %v872, 5
      %v923 = vsel %vm513, %v920, %v922
      %924 = vrot.lane.b32.xlu0 %v921, 40
      %v925 = vpop.permute.xlu0 %924
      %926 = vrot.lane.b32.xlu0 %v923, 40
      %v927 = vpop.permute.xlu0 %926
      %v930 = vrot.slane %v871, 6
      %v931 = vrot.slane %v867, 6
      %v932 = vsel %vm583, %v930, %v931
      %v933 = vrot.slane %v872, 6
      %v934 = vsel %vm583, %v931, %v933
      %935 = vrot.lane.b32.xlu0 %v932, 48
      %v936 = vpop.permute.xlu0 %935
      %937 = vrot.lane.b32.xlu0 %v934, 48
      %v938 = vpop.permute.xlu0 %937
      %v941 = vsel %vm595, %v871, %v881
      %v942 = vsel %vm595, %v867, %v883
      %v943 = vsel %vm598, %v941, %v892
      %v944 = vsel %vm598, %v942, %v894
      %v945 = vsel %vm601, %v943, %v903
      %v946 = vsel %vm601, %v944, %v905
      %v947 = vsel %vm604, %v945, %v914
      %v948 = vsel %vm604, %v946, %v916
      %v949 = vsel %vm607, %v947, %v925
      %v950 = vsel %vm607, %v948, %v927
      %v951 = vsel %vm610, %v949, %v936
      %v952 = vsel %vm610, %v950, %v938
      %s953 = scalar_lea.vmem %s1, 56
      %v954 = vld [vmem:[%s953] sm:$0xff]
      %v955 = vld [vmem:[%s953 + $0x8] sm:$0xff]
      %v956 = vld [vmem:[%s953 + $0x10] sm:$0xff]
      %v957 = vld [vmem:[%s953 + $0x18] sm:$0xff]
      %v958 = vld [vmem:[%s953 + $0x20] sm:$0xff]
      %v959 = vld [vmem:[%s953 + $0x28] sm:$0xff]
      %v960 = vld [vmem:[%s953 + $0x30] sm:$0xff]
      %s961 = scalar_lea.vmem %s2, 1
      %v962 = vld [vmem:[%s961] sm:$0x1]
      %v964 = vperm.slane %v962, 0
      %v967 = vsel %vm717, %v858, 0
      %v970 = vsel %vm717, %v859, 0
      %v973 = vsel %vm717, %v951, 0
      %v976 = vsel %vm717, %v952, 0
      %978 = vmatpush.msra.mxu0 0.0
      %979 = vmatpush.msra.mxu0 0.0
      %980 = vmatpush.msra.mxu0 0.0
      %981 = vmatpush.msra.mxu0 0.0
      %982 = vmatpush.msra.mxu0 0.0
      %983 = vmatpush.msra.mxu0 0.0
      %984 = vmatpush.msra.mxu0 0.0
      %985 = vmatpush.msra.mxu0 0.0
      %986 = vmatpush.msra.mxu0 0.0
      %987 = vmatpush.msra.mxu0 %v960
      %988 = vmatpush.msra.mxu0 %v959
      %989 = vmatpush.msra.mxu0 %v958
      %990 = vmatpush.msra.mxu0 %v957
      %991 = vmatpush.msra.mxu0 %v956
      %992 = vmatpush.msra.mxu0 %v955
      %993 = vmatpush.msra.mxu0 %v954
      %994 = vmatmul.f32.gmra.mxu0 %v967
      %v995 = vpop.f32.mrf.mxu0
      %v996 = vadd.f32 %v964, %v995
      %997 = vmatmul.f32.gmra.mxu0 %v970
      %v998 = vpop.f32.mrf.mxu0
      %v999 = vadd.f32 %v964, %v998
      %1000 = vmatmul.f32.gmra.mxu0 %v973
      %v1001 = vpop.f32.mrf.mxu0
      %v1002 = vadd.f32 %v964, %v1001
      %1003 = vmatmul.f32.gmra.mxu0 %v976
      %v1004 = vpop.f32.mrf.mxu0
      %v1005 = vadd.f32 %v964, %v1004
      %1006 = vdwg.mxu0
      %v1007 = vmax.f32 %v996, 0.0
      %v1008 = vmax.f32 %v999, 0.0
      %v1009 = vmax.f32 %v1002, 0.0
      %v1010 = vmax.f32 %v1005, 0.0
      %v1011 = vadd.f32 %v763, %v1007
      %v1012 = vadd.f32 %v764, %v1008
      %v1013 = vadd.f32 %v765, %v1009
      %v1014 = vadd.f32 %v766, %v1010
      %s1015 = scalar_lea.vmem %s0, 64
      %v1016 = vld [vmem:[%s1015] sm:$0xff]
      %v1017 = vld [vmem:[%s1015 + $0x8] sm:$0xff]
      %v1020 = vrot.slane %v1016, 5
      %v1021 = vrot.slane %v1017, 5
      %v1022 = vsel %vm513, %v1020, %v1021
      %v1026 = vsel %vm513, 0.0, %v1020
      %v1027 = vsel %vm513, %v1021, 0.0
      %v1030 = vrot.slane %v1026, 1
      %v1031 = vrot.slane %v1022, 1
      %v1032 = vsel %vm524, %v1030, %v1031
      %v1033 = vrot.slane %v1027, 1
      %v1034 = vsel %vm524, %v1031, %v1033
      %1035 = vrot.lane.b32.xlu0 %v1032, 8
      %v1036 = vpop.permute.xlu0 %1035
      %1037 = vrot.lane.b32.xlu0 %v1034, 8
      %v1038 = vpop.permute.xlu0 %1037
      %v1041 = vrot.slane %v1026, 2
      %v1042 = vrot.slane %v1022, 2
      %v1043 = vsel %vm536, %v1041, %v1042
      %v1044 = vrot.slane %v1027, 2
      %v1045 = vsel %vm536, %v1042, %v1044
      %1046 = vrot.lane.b32.xlu0 %v1043, 16
      %v1047 = vpop.permute.xlu0 %1046
      %1048 = vrot.lane.b32.xlu0 %v1045, 16
      %v1049 = vpop.permute.xlu0 %1048
      %v1052 = vrot.slane %v1026, 3
      %v1053 = vrot.slane %v1022, 3
      %v1054 = vsel %vm548, %v1052, %v1053
      %v1055 = vrot.slane %v1027, 3
      %v1056 = vsel %vm548, %v1053, %v1055
      %1057 = vrot.lane.b32.xlu0 %v1054, 24
      %v1058 = vpop.permute.xlu0 %1057
      %1059 = vrot.lane.b32.xlu0 %v1056, 24
      %v1060 = vpop.permute.xlu0 %1059
      %v1063 = vrot.slane %v1026, 4
      %v1064 = vrot.slane %v1022, 4
      %v1065 = vsel %vm560, %v1063, %v1064
      %v1066 = vrot.slane %v1027, 4
      %v1067 = vsel %vm560, %v1064, %v1066
      %1068 = vrot.lane.b32.xlu0 %v1065, 32
      %v1069 = vpop.permute.xlu0 %1068
      %1070 = vrot.lane.b32.xlu0 %v1067, 32
      %v1071 = vpop.permute.xlu0 %1070
      %v1074 = vrot.slane %v1026, 5
      %v1075 = vrot.slane %v1022, 5
      %v1076 = vsel %vm513, %v1074, %v1075
      %v1077 = vrot.slane %v1027, 5
      %v1078 = vsel %vm513, %v1075, %v1077
      %1079 = vrot.lane.b32.xlu0 %v1076, 40
      %v1080 = vpop.permute.xlu0 %1079
      %1081 = vrot.lane.b32.xlu0 %v1078, 40
      %v1082 = vpop.permute.xlu0 %1081
      %v1085 = vrot.slane %v1026, 6
      %v1086 = vrot.slane %v1022, 6
      %v1087 = vsel %vm583, %v1085, %v1086
      %v1088 = vrot.slane %v1027, 6
      %v1089 = vsel %vm583, %v1086, %v1088
      %1090 = vrot.lane.b32.xlu0 %v1087, 48
      %v1091 = vpop.permute.xlu0 %1090
      %1092 = vrot.lane.b32.xlu0 %v1089, 48
      %v1093 = vpop.permute.xlu0 %1092
      %v1096 = vsel %vm595, %v1026, %v1036
      %v1097 = vsel %vm595, %v1022, %v1038
      %v1098 = vsel %vm598, %v1096, %v1047
      %v1099 = vsel %vm598, %v1097, %v1049
      %v1100 = vsel %vm601, %v1098, %v1058
      %v1101 = vsel %vm601, %v1099, %v1060
      %v1102 = vsel %vm604, %v1100, %v1069
      %v1103 = vsel %vm604, %v1101, %v1071
      %v1104 = vsel %vm607, %v1102, %v1080
      %v1105 = vsel %vm607, %v1103, %v1082
      %v1106 = vsel %vm610, %v1104, %v1091
      %v1107 = vsel %vm610, %v1105, %v1093
      %s1108 = scalar_lea.vmem %s0, 80
      %v1109 = vld [vmem:[%s1108] sm:$0xff]
      %v1110 = vld [vmem:[%s1108 + $0x8] sm:$0xff]
      %v1113 = vrot.slane %v1109, 5
      %v1114 = vrot.slane %v1110, 5
      %v1115 = vsel %vm513, %v1113, %v1114
      %v1119 = vsel %vm513, 0.0, %v1113
      %v1120 = vsel %vm513, %v1114, 0.0
      %v1123 = vrot.slane %v1119, 1
      %v1124 = vrot.slane %v1115, 1
      %v1125 = vsel %vm524, %v1123, %v1124
      %v1126 = vrot.slane %v1120, 1
      %v1127 = vsel %vm524, %v1124, %v1126
      %1128 = vrot.lane.b32.xlu0 %v1125, 8
      %v1129 = vpop.permute.xlu0 %1128
      %1130 = vrot.lane.b32.xlu0 %v1127, 8
      %v1131 = vpop.permute.xlu0 %1130
      %v1134 = vrot.slane %v1119, 2
      %v1135 = vrot.slane %v1115, 2
      %v1136 = vsel %vm536, %v1134, %v1135
      %v1137 = vrot.slane %v1120, 2
      %v1138 = vsel %vm536, %v1135, %v1137
      %1139 = vrot.lane.b32.xlu0 %v1136, 16
      %v1140 = vpop.permute.xlu0 %1139
      %1141 = vrot.lane.b32.xlu0 %v1138, 16
      %v1142 = vpop.permute.xlu0 %1141
      %v1145 = vrot.slane %v1119, 3
      %v1146 = vrot.slane %v1115, 3
      %v1147 = vsel %vm548, %v1145, %v1146
      %v1148 = vrot.slane %v1120, 3
      %v1149 = vsel %vm548, %v1146, %v1148
      %1150 = vrot.lane.b32.xlu0 %v1147, 24
      %v1151 = vpop.permute.xlu0 %1150
      %1152 = vrot.lane.b32.xlu0 %v1149, 24
      %v1153 = vpop.permute.xlu0 %1152
      %v1156 = vrot.slane %v1119, 4
      %v1157 = vrot.slane %v1115, 4
      %v1158 = vsel %vm560, %v1156, %v1157
      %v1159 = vrot.slane %v1120, 4
      %v1160 = vsel %vm560, %v1157, %v1159
      %1161 = vrot.lane.b32.xlu0 %v1158, 32
      %v1162 = vpop.permute.xlu0 %1161
      %1163 = vrot.lane.b32.xlu0 %v1160, 32
      %v1164 = vpop.permute.xlu0 %1163
      %v1167 = vrot.slane %v1119, 5
      %v1168 = vrot.slane %v1115, 5
      %v1169 = vsel %vm513, %v1167, %v1168
      %v1170 = vrot.slane %v1120, 5
      %v1171 = vsel %vm513, %v1168, %v1170
      %1172 = vrot.lane.b32.xlu0 %v1169, 40
      %v1173 = vpop.permute.xlu0 %1172
      %1174 = vrot.lane.b32.xlu0 %v1171, 40
      %v1175 = vpop.permute.xlu0 %1174
      %v1178 = vrot.slane %v1119, 6
      %v1179 = vrot.slane %v1115, 6
      %v1180 = vsel %vm583, %v1178, %v1179
      %v1181 = vrot.slane %v1120, 6
      %v1182 = vsel %vm583, %v1179, %v1181
      %1183 = vrot.lane.b32.xlu0 %v1180, 48
      %v1184 = vpop.permute.xlu0 %1183
      %1185 = vrot.lane.b32.xlu0 %v1182, 48
      %v1186 = vpop.permute.xlu0 %1185
      %v1189 = vsel %vm595, %v1119, %v1129
      %v1190 = vsel %vm595, %v1115, %v1131
      %v1191 = vsel %vm598, %v1189, %v1140
      %v1192 = vsel %vm598, %v1190, %v1142
      %v1193 = vsel %vm601, %v1191, %v1151
      %v1194 = vsel %vm601, %v1192, %v1153
      %v1195 = vsel %vm604, %v1193, %v1162
      %v1196 = vsel %vm604, %v1194, %v1164
      %v1197 = vsel %vm607, %v1195, %v1173
      %v1198 = vsel %vm607, %v1196, %v1175
      %v1199 = vsel %vm610, %v1197, %v1184
      %v1200 = vsel %vm610, %v1198, %v1186
      %s1201 = scalar_lea.vmem %s1, 112
      %v1202 = vld [vmem:[%s1201] sm:$0xff]
      %v1203 = vld [vmem:[%s1201 + $0x8] sm:$0xff]
      %v1204 = vld [vmem:[%s1201 + $0x10] sm:$0xff]
      %v1205 = vld [vmem:[%s1201 + $0x18] sm:$0xff]
      %v1206 = vld [vmem:[%s1201 + $0x20] sm:$0xff]
      %v1207 = vld [vmem:[%s1201 + $0x28] sm:$0xff]
      %v1208 = vld [vmem:[%s1201 + $0x30] sm:$0xff]
      %s1209 = scalar_lea.vmem %s2, 2
      %v1210 = vld [vmem:[%s1209] sm:$0x1]
      %v1212 = vperm.slane %v1210, 0
      %v1215 = vsel %vm717, %v1106, 0
      %v1218 = vsel %vm717, %v1107, 0
      %v1221 = vsel %vm717, %v1199, 0
      %v1224 = vsel %vm717, %v1200, 0
      %1226 = vmatpush.msra.mxu0 0.0
      %1227 = vmatpush.msra.mxu0 0.0
      %1228 = vmatpush.msra.mxu0 0.0
      %1229 = vmatpush.msra.mxu0 0.0
      %1230 = vmatpush.msra.mxu0 0.0
      %1231 = vmatpush.msra.mxu0 0.0
      %1232 = vmatpush.msra.mxu0 0.0
      %1233 = vmatpush.msra.mxu0 0.0
      %1234 = vmatpush.msra.mxu0 0.0
      %1235 = vmatpush.msra.mxu0 %v1208
      %1236 = vmatpush.msra.mxu0 %v1207
      %1237 = vmatpush.msra.mxu0 %v1206
      %1238 = vmatpush.msra.mxu0 %v1205
      %1239 = vmatpush.msra.mxu0 %v1204
      %1240 = vmatpush.msra.mxu0 %v1203
      %1241 = vmatpush.msra.mxu0 %v1202
      %1242 = vmatmul.f32.gmra.mxu0 %v1215
      %v1243 = vpop.f32.mrf.mxu0
      %v1244 = vadd.f32 %v1212, %v1243
      %1245 = vmatmul.f32.gmra.mxu0 %v1218
      %v1246 = vpop.f32.mrf.mxu0
      %v1247 = vadd.f32 %v1212, %v1246
      %1248 = vmatmul.f32.gmra.mxu0 %v1221
      %v1249 = vpop.f32.mrf.mxu0
      %v1250 = vadd.f32 %v1212, %v1249
      %1251 = vmatmul.f32.gmra.mxu0 %v1224
      %v1252 = vpop.f32.mrf.mxu0
      %v1253 = vadd.f32 %v1212, %v1252
      %1254 = vdwg.mxu0
      %v1255 = vmax.f32 %v1244, 0.0
      %v1256 = vmax.f32 %v1247, 0.0
      %v1257 = vmax.f32 %v1250, 0.0
      %v1258 = vmax.f32 %v1253, 0.0
      %v1259 = vadd.f32 %v1011, %v1255
      %v1260 = vadd.f32 %v1012, %v1256
      %v1261 = vadd.f32 %v1013, %v1257
      %v1262 = vadd.f32 %v1014, %v1258
      %v1265 = vrot.slane %v1259, 1
      %v1266 = vrot.slane %v1260, 1
      %v1267 = vsel %vm524, %v1265, %v1266
      %1268 = vrot.lane.b32.xlu0 %v1267, 32
      %v1269 = vpop.permute.xlu0 %1268
      %1270 = vrot.lane.b32.xlu0 %v1266, 32
      %v1271 = vpop.permute.xlu0 %1270
      %v1274 = vrot.slane %v1259, 2
      %v1275 = vrot.slane %v1260, 2
      %v1276 = vsel %vm536, %v1274, %v1275
      %1277 = vrot.lane.b32.xlu0 %v1276, 64
      %v1278 = vpop.permute.xlu0 %1277
      %1279 = vrot.lane.b32.xlu0 %v1275, 64
      %v1280 = vpop.permute.xlu0 %1279
      %v1283 = vrot.slane %v1259, 3
      %v1284 = vrot.slane %v1260, 3
      %v1285 = vsel %vm548, %v1283, %v1284
      %1286 = vrot.lane.b32.xlu0 %v1285, 96
      %v1287 = vpop.permute.xlu0 %1286
      %1288 = vrot.lane.b32.xlu0 %v1284, 96
      %v1289 = vpop.permute.xlu0 %1288
      %v1292 = vrot.slane %v1259, 4
      %v1293 = vrot.slane %v1260, 4
      %v1294 = vsel %vm560, %v1292, %v1293
      %v1297 = vrot.slane %v1259, 5
      %v1298 = vrot.slane %v1260, 5
      %v1299 = vsel %vm513, %v1297, %v1298
      %1300 = vrot.lane.b32.xlu0 %v1299, 32
      %v1301 = vpop.permute.xlu0 %1300
      %1302 = vrot.lane.b32.xlu0 %v1298, 32
      %v1303 = vpop.permute.xlu0 %1302
      %v1306 = vrot.slane %v1259, 6
      %v1307 = vrot.slane %v1260, 6
      %v1308 = vsel %vm583, %v1306, %v1307
      %1309 = vrot.lane.b32.xlu0 %v1308, 64
      %v1310 = vpop.permute.xlu0 %1309
      %1311 = vrot.lane.b32.xlu0 %v1307, 64
      %v1312 = vpop.permute.xlu0 %1311
      %v1315 = vsel %vm604, %v1259, %v1269
      %v1316 = vsel %vm604, %v1260, %v1271
      %vm1317 = vcmask 523264
      %v1318 = vsel %vm1317, %v1315, %v1278
      %v1319 = vsel %vm1317, %v1316, %v1280
      %vm1320 = vcmask 785408
      %v1321 = vsel %vm1320, %v1318, %v1287
      %v1322 = vsel %vm1320, %v1319, %v1289
      %v1323 = vsel %vm604, %v1294, %v1301
      %v1324 = vsel %vm604, %v1293, %v1303
      %v1325 = vsel %vm1317, %v1323, %v1310
      %v1326 = vsel %vm1317, %v1324, %v1312
      %v1329 = vrot.slane %v1261, 1
      %v1330 = vrot.slane %v1262, 1
      %v1331 = vsel %vm524, %v1329, %v1330
      %1332 = vrot.lane.b32.xlu0 %v1331, 32
      %v1333 = vpop.permute.xlu0 %1332
      %1334 = vrot.lane.b32.xlu0 %v1330, 32
      %v1335 = vpop.permute.xlu0 %1334
      %v1338 = vrot.slane %v1261, 2
      %v1339 = vrot.slane %v1262, 2
      %v1340 = vsel %vm536, %v1338, %v1339
      %1341 = vrot.lane.b32.xlu0 %v1340, 64
      %v1342 = vpop.permute.xlu0 %1341
      %1343 = vrot.lane.b32.xlu0 %v1339, 64
      %v1344 = vpop.permute.xlu0 %1343
      %v1347 = vrot.slane %v1261, 3
      %v1348 = vrot.slane %v1262, 3
      %v1349 = vsel %vm548, %v1347, %v1348
      %1350 = vrot.lane.b32.xlu0 %v1349, 96
      %v1351 = vpop.permute.xlu0 %1350
      %1352 = vrot.lane.b32.xlu0 %v1348, 96
      %v1353 = vpop.permute.xlu0 %1352
      %v1356 = vrot.slane %v1261, 4
      %v1357 = vrot.slane %v1262, 4
      %v1358 = vsel %vm560, %v1356, %v1357
      %v1361 = vrot.slane %v1261, 5
      %v1362 = vrot.slane %v1262, 5
      %v1363 = vsel %vm513, %v1361, %v1362
      %1364 = vrot.lane.b32.xlu0 %v1363, 32
      %v1365 = vpop.permute.xlu0 %1364
      %1366 = vrot.lane.b32.xlu0 %v1362, 32
      %v1367 = vpop.permute.xlu0 %1366
      %v1370 = vrot.slane %v1261, 6
      %v1371 = vrot.slane %v1262, 6
      %v1372 = vsel %vm583, %v1370, %v1371
      %1373 = vrot.lane.b32.xlu0 %v1372, 64
      %v1374 = vpop.permute.xlu0 %1373
      %1375 = vrot.lane.b32.xlu0 %v1371, 64
      %v1376 = vpop.permute.xlu0 %1375
      %v1379 = vsel %vm604, %v1261, %v1333
      %v1380 = vsel %vm604, %v1262, %v1335
      %v1381 = vsel %vm1317, %v1379, %v1342
      %v1382 = vsel %vm1317, %v1380, %v1344
      %v1383 = vsel %vm1320, %v1381, %v1351
      %v1384 = vsel %vm1320, %v1382, %v1353
      %v1385 = vsel %vm604, %v1358, %v1365
      %v1386 = vsel %vm604, %v1357, %v1367
      %v1387 = vsel %vm1317, %v1385, %v1374
      %v1388 = vsel %vm1317, %v1386, %v1376
      %v1393 = vrot.slane %v1383, 6
      %v1394 = vrot.slane %v1387, 6
      %v1395 = vrot.slane %v1384, 6
      %v1396 = vsel %vm583, %v1393, %v1395
      %v1397 = vrot.slane %v1388, 6
      %v1398 = vsel %vm583, %v1394, %v1397
      %v1402 = vsel %vm583, %v1322, %v1393
      %v1403 = vsel %vm583, %v1326, %v1394
      %v1404 = vld [vmem:[%s474] sm:$0xff]
      %v1405 = vld [vmem:[%s474 + $0x8] sm:$0xff]
      %v1406 = vld [vmem:[%s474 + $0x10] sm:$0xff]
      %v1407 = vld [vmem:[%s474 + $0x18] sm:$0xff]
      %v1408 = vld [vmem:[%s474 + $0x20] sm:$0xff]
      %v1409 = vld [vmem:[%s474 + $0x28] sm:$0xff]
      %v1410 = vld [vmem:[%s474 + $0x30] sm:$0xff]
      %v1411 = vld [vmem:[%s474 + $0x38] sm:$0xff]
      %v1412 = vld [vmem:[%s474 + $0x40] sm:$0xff]
      %v1413 = vld [vmem:[%s474 + $0x48] sm:$0xff]
      %v1414 = vld [vmem:[%s474 + $0x50] sm:$0xff]
      %v1415 = vld [vmem:[%s474 + $0x58] sm:$0xff]
      %v1416 = vld [vmem:[%s474 + $0x60] sm:$0xff]
      %v1417 = vld [vmem:[%s474 + $0x68] sm:$0xff]
      %v1418 = vld [vmem:[%s474 + $0x70] sm:$0xff]
      %v1419 = vld [vmem:[%s474 + $0x78] sm:$0xff]
      %v1420 = vld [vmem:[%s474 + $0x80] sm:$0xff]
      %v1421 = vld [vmem:[%s474 + $0x88] sm:$0xff]
      %v1422 = vld [vmem:[%s474 + $0x90] sm:$0xff]
      %v1423 = vld [vmem:[%s474 + $0x98] sm:$0xff]
      %v1424 = vld [vmem:[%s474 + $0xa0] sm:$0xff]
      %v1425 = vld [vmem:[%s474 + $0xa8] sm:$0xff]
      %v1426 = vld [vmem:[%s474 + $0xb0] sm:$0xff]
      %v1427 = vld [vmem:[%s474 + $0xb8] sm:$0xff]
      %v1428 = vld [vmem:[%s474 + $0xc0] sm:$0xff]
      %v1429 = vld [vmem:[%s474 + $0xc8] sm:$0xff]
      %v1430 = vld [vmem:[%s474 + $0xd0] sm:$0xff]
      %v1431 = vld [vmem:[%s474 + $0xd8] sm:$0xff]
      %v1432 = vld [vmem:[%s477] sm:$0x1]
      %v1434 = vperm.slane %v1432, 0
      %v1437 = vsel %vm1320, %v1325, 0
      %v1440 = vsel %vm1320, %v1403, 0
      %v1442 = vsel %vm1320, %v1398, 0
      %1444 = vmatpush.msra.mxu0 %v1419
      %1445 = vmatpush.msra.mxu0 %v1418
      %1446 = vmatpush.msra.mxu0 %v1417
      %1447 = vmatpush.msra.mxu0 %v1416
      %1448 = vmatpush.msra.mxu0 %v1415
      %1449 = vmatpush.msra.mxu0 %v1414
      %1450 = vmatpush.msra.mxu0 %v1413
      %1451 = vmatpush.msra.mxu0 %v1412
      %1452 = vmatpush.msra.mxu0 %v1411
      %1453 = vmatpush.msra.mxu0 %v1410
      %1454 = vmatpush.msra.mxu0 %v1409
      %1455 = vmatpush.msra.mxu0 %v1408
      %1456 = vmatpush.msra.mxu0 %v1407
      %1457 = vmatpush.msra.mxu0 %v1406
      %1458 = vmatpush.msra.mxu0 %v1405
      %1459 = vmatpush.msra.mxu0 %v1404
      %1460 = vmatmul.f32.gmra.mxu0 %v1321
      %v1461 = vpop.f32.mrf.mxu0
      %v1462 = vadd.f32 %v1434, %v1461
      %1463 = vmatmul.f32.gmra.mxu0 %v1402
      %v1464 = vpop.f32.mrf.mxu0
      %v1465 = vadd.f32 %v1434, %v1464
      %1466 = vmatmul.f32.gmra.mxu0 %v1396
      %v1467 = vpop.f32.mrf.mxu0
      %v1468 = vadd.f32 %v1434, %v1467
      %1469 = vdwg.mxu0
      %1470 = vmatpush.msra.mxu0 0.0
      %1471 = vmatpush.msra.mxu0 0.0
      %1472 = vmatpush.msra.mxu0 0.0
      %1473 = vmatpush.msra.mxu0 0.0
      %1474 = vmatpush.msra.mxu0 %v1431
      %1475 = vmatpush.msra.mxu0 %v1430
      %1476 = vmatpush.msra.mxu0 %v1429
      %1477 = vmatpush.msra.mxu0 %v1428
      %1478 = vmatpush.msra.mxu0 %v1427
      %1479 = vmatpush.msra.mxu0 %v1426
      %1480 = vmatpush.msra.mxu0 %v1425
      %1481 = vmatpush.msra.mxu0 %v1424
      %1482 = vmatpush.msra.mxu0 %v1423
      %1483 = vmatpush.msra.mxu0 %v1422
      %1484 = vmatpush.msra.mxu0 %v1421
      %1485 = vmatpush.msra.mxu0 %v1420
      %1486 = vmatmul.f32.gmra.mxu0 %v1437
      %v1487 = vpop.f32.mrf.mxu0
      %v1488 = vadd.f32 %v1462, %v1487
      %1489 = vmatmul.f32.gmra.mxu0 %v1440
      %v1490 = vpop.f32.mrf.mxu0
      %v1491 = vadd.f32 %v1465, %v1490
      %1492 = vmatmul.f32.gmra.mxu0 %v1442
      %v1493 = vpop.f32.mrf.mxu0
      %v1494 = vadd.f32 %v1468, %v1493
      %1495 = vdwg.mxu0
      loop: start=0, step=1, limit=20
      $region65: #{predict_forward.2} parent=63 // loop_pre_header
        _
      $region66: #{predict_forward.2} parent=63 // loop_header
        %s1497 = sphi 0, %s1501
        %p1498 = scmp.ge.s32.totalorder %s1497, 20
        %v1502 = vphi %v1488, %v4066
        %v1503 = vphi %v1491, %v4067
        %v1504 = vphi %v1494, %v4068
      $region67: #{predict_forward.2} parent=63 // loop_header_branch
        %1500 = sbr.rel (%p1498) target = $region71
      $region68: #{predict_forward.2} parent=63 // loop_body
        %s1505 = smul.u32 %s1497, 864
        %s1506 = scalar_lea.vmem %s482, %s1505
        %v1507 = vld [vmem:[%s1506] sm:$0xff]
        %v1508 = vld [vmem:[%s1506 + $0x8] sm:$0xff]
        %v1509 = vld [vmem:[%s1506 + $0x10] sm:$0xff]
        %v1510 = vld [vmem:[%s1506 + $0x18] sm:$0xff]
        %v1511 = vld [vmem:[%s1506 + $0x20] sm:$0xff]
        %v1512 = vld [vmem:[%s1506 + $0x28] sm:$0xff]
        %v1513 = vld [vmem:[%s1506 + $0x30] sm:$0xff]
        %v1514 = vld [vmem:[%s1506 + $0x38] sm:$0xff]
        %v1515 = vld [vmem:[%s1506 + $0x40] sm:$0xff]
        %v1516 = vld [vmem:[%s1506 + $0x48] sm:$0xff]
        %v1517 = vld [vmem:[%s1506 + $0x50] sm:$0xff]
        %v1518 = vld [vmem:[%s1506 + $0x58] sm:$0xff]
        %v1519 = vld [vmem:[%s1506 + $0x60] sm:$0xff]
        %v1520 = vld [vmem:[%s1506 + $0x68] sm:$0xff]
        %v1521 = vld [vmem:[%s1506 + $0x70] sm:$0xff]
        %v1522 = vld [vmem:[%s1506 + $0x78] sm:$0xff]
        %v1523 = vld [vmem:[%s1506 + $0x80] sm:$0xff]
        %v1524 = vld [vmem:[%s1506 + $0x88] sm:$0xff]
        %v1525 = vld [vmem:[%s1506 + $0x90] sm:$0xff]
        %v1526 = vld [vmem:[%s1506 + $0x98] sm:$0xff]
        %v1527 = vld [vmem:[%s1506 + $0xa0] sm:$0xff]
        %v1528 = vld [vmem:[%s1506 + $0xa8] sm:$0xff]
        %v1529 = vld [vmem:[%s1506 + $0xb0] sm:$0xff]
        %v1530 = vld [vmem:[%s1506 + $0xb8] sm:$0xff]
        %v1531 = vld [vmem:[%s1506 + $0xc0] sm:$0xff]
        %v1532 = vld [vmem:[%s1506 + $0xc8] sm:$0xff]
        %v1533 = vld [vmem:[%s1506 + $0xd0] sm:$0xff]
        %v1534 = vld [vmem:[%s1506 + $0xd8] sm:$0xff]
        %v1535 = vld [vmem:[%s1506 + $0xe0] sm:$0xff]
        %v1536 = vld [vmem:[%s1506 + $0xe8] sm:$0xff]
        %v1537 = vld [vmem:[%s1506 + $0xf0] sm:$0xff]
        %v1538 = vld [vmem:[%s1506 + $0xf8] sm:$0xff]
        %v1539 = vld [vmem:[%s1506 + $0x100] sm:$0xff]
        %v1540 = vld [vmem:[%s1506 + $0x108] sm:$0xff]
        %v1541 = vld [vmem:[%s1506 + $0x110] sm:$0xff]
        %v1542 = vld [vmem:[%s1506 + $0x118] sm:$0xff]
        %v1543 = vld [vmem:[%s1506 + $0x120] sm:$0xff]
        %v1544 = vld [vmem:[%s1506 + $0x128] sm:$0xff]
        %v1545 = vld [vmem:[%s1506 + $0x130] sm:$0xff]
        %v1546 = vld [vmem:[%s1506 + $0x138] sm:$0xff]
        %v1547 = vld [vmem:[%s1506 + $0x140] sm:$0xff]
        %v1548 = vld [vmem:[%s1506 + $0x148] sm:$0xff]
        %v1549 = vld [vmem:[%s1506 + $0x150] sm:$0xff]
        %v1550 = vld [vmem:[%s1506 + $0x158] sm:$0xff]
        %v1551 = vld [vmem:[%s1506 + $0x160] sm:$0xff]
        %v1552 = vld [vmem:[%s1506 + $0x168] sm:$0xff]
        %v1553 = vld [vmem:[%s1506 + $0x170] sm:$0xff]
        %v1554 = vld [vmem:[%s1506 + $0x178] sm:$0xff]
        %v1555 = vld [vmem:[%s1506 + $0x180] sm:$0xff]
        %v1556 = vld [vmem:[%s1506 + $0x188] sm:$0xff]
        %v1557 = vld [vmem:[%s1506 + $0x190] sm:$0xff]
        %v1558 = vld [vmem:[%s1506 + $0x198] sm:$0xff]
        %v1559 = vld [vmem:[%s1506 + $0x1a0] sm:$0xff]
        %v1560 = vld [vmem:[%s1506 + $0x1a8] sm:$0xff]
        %v1561 = vld [vmem:[%s1506 + $0x1b0] sm:$0xff]
        %v1562 = vld [vmem:[%s1506 + $0x1b8] sm:$0xff]
        %v1563 = vld [vmem:[%s1506 + $0x1c0] sm:$0xff]
        %v1564 = vld [vmem:[%s1506 + $0x1c8] sm:$0xff]
        %v1565 = vld [vmem:[%s1506 + $0x1d0] sm:$0xff]
        %v1566 = vld [vmem:[%s1506 + $0x1d8] sm:$0xff]
        %v1567 = vld [vmem:[%s1506 + $0x1e0] sm:$0xff]
        %v1568 = vld [vmem:[%s1506 + $0x1e8] sm:$0xff]
        %v1569 = vld [vmem:[%s1506 + $0x1f0] sm:$0xff]
        %v1570 = vld [vmem:[%s1506 + $0x1f8] sm:$0xff]
        %v1571 = vld [vmem:[%s1506 + $0x200] sm:$0xff]
        %v1572 = vld [vmem:[%s1506 + $0x208] sm:$0xff]
        %v1573 = vld [vmem:[%s1506 + $0x210] sm:$0xff]
        %v1574 = vld [vmem:[%s1506 + $0x218] sm:$0xff]
        %v1575 = vld [vmem:[%s1506 + $0x220] sm:$0xff]
        %v1576 = vld [vmem:[%s1506 + $0x228] sm:$0xff]
        %v1577 = vld [vmem:[%s1506 + $0x230] sm:$0xff]
        %v1578 = vld [vmem:[%s1506 + $0x238] sm:$0xff]
        %v1579 = vld [vmem:[%s1506 + $0x240] sm:$0xff]
        %v1580 = vld [vmem:[%s1506 + $0x248] sm:$0xff]
        %v1581 = vld [vmem:[%s1506 + $0x250] sm:$0xff]
        %v1582 = vld [vmem:[%s1506 + $0x258] sm:$0xff]
        %v1583 = vld [vmem:[%s1506 + $0x260] sm:$0xff]
        %v1584 = vld [vmem:[%s1506 + $0x268] sm:$0xff]
        %v1585 = vld [vmem:[%s1506 + $0x270] sm:$0xff]
        %v1586 = vld [vmem:[%s1506 + $0x278] sm:$0xff]
        %v1587 = vld [vmem:[%s1506 + $0x280] sm:$0xff]
        %v1588 = vld [vmem:[%s1506 + $0x288] sm:$0xff]
        %v1589 = vld [vmem:[%s1506 + $0x290] sm:$0xff]
        %v1590 = vld [vmem:[%s1506 + $0x298] sm:$0xff]
        %v1591 = vld [vmem:[%s1506 + $0x2a0] sm:$0xff]
        %v1592 = vld [vmem:[%s1506 + $0x2a8] sm:$0xff]
        %v1593 = vld [vmem:[%s1506 + $0x2b0] sm:$0xff]
        %v1594 = vld [vmem:[%s1506 + $0x2b8] sm:$0xff]
        %v1595 = vld [vmem:[%s1506 + $0x2c0] sm:$0xff]
        %v1596 = vld [vmem:[%s1506 + $0x2c8] sm:$0xff]
        %v1597 = vld [vmem:[%s1506 + $0x2d0] sm:$0xff]
        %v1598 = vld [vmem:[%s1506 + $0x2d8] sm:$0xff]
        %v1599 = vld [vmem:[%s1506 + $0x2e0] sm:$0xff]
        %v1600 = vld [vmem:[%s1506 + $0x2e8] sm:$0xff]
        %v1601 = vld [vmem:[%s1506 + $0x2f0] sm:$0xff]
        %v1602 = vld [vmem:[%s1506 + $0x2f8] sm:$0xff]
        %v1603 = vld [vmem:[%s1506 + $0x300] sm:$0xff]
        %v1604 = vld [vmem:[%s1506 + $0x308] sm:$0xff]
        %v1605 = vld [vmem:[%s1506 + $0x310] sm:$0xff]
        %v1606 = vld [vmem:[%s1506 + $0x318] sm:$0xff]
        %v1607 = vld [vmem:[%s1506 + $0x320] sm:$0xff]
        %v1608 = vld [vmem:[%s1506 + $0x328] sm:$0xff]
        %v1609 = vld [vmem:[%s1506 + $0x330] sm:$0xff]
        %v1610 = vld [vmem:[%s1506 + $0x338] sm:$0xff]
        %v1611 = vld [vmem:[%s1506 + $0x340] sm:$0xff]
        %v1612 = vld [vmem:[%s1506 + $0x348] sm:$0xff]
        %v1613 = vld [vmem:[%s1506 + $0x350] sm:$0xff]
        %v1614 = vld [vmem:[%s1506 + $0x358] sm:$0xff]
        %s1615 = scalar_lea.vmem %s486, %s1497
        %v1616 = vld [vmem:[%s1615] sm:$0x1]
        %s1617 = scalar_lea.vmem %s491, %s1505
        %v1618 = vld [vmem:[%s1617] sm:$0xff]
        %v1619 = vld [vmem:[%s1617 + $0x8] sm:$0xff]
        %v1620 = vld [vmem:[%s1617 + $0x10] sm:$0xff]
        %v1621 = vld [vmem:[%s1617 + $0x18] sm:$0xff]
        %v1622 = vld [vmem:[%s1617 + $0x20] sm:$0xff]
        %v1623 = vld [vmem:[%s1617 + $0x28] sm:$0xff]
        %v1624 = vld [vmem:[%s1617 + $0x30] sm:$0xff]
        %v1625 = vld [vmem:[%s1617 + $0x38] sm:$0xff]
        %v1626 = vld [vmem:[%s1617 + $0x40] sm:$0xff]
        %v1627 = vld [vmem:[%s1617 + $0x48] sm:$0xff]
        %v1628 = vld [vmem:[%s1617 + $0x50] sm:$0xff]
        %v1629 = vld [vmem:[%s1617 + $0x58] sm:$0xff]
        %v1630 = vld [vmem:[%s1617 + $0x60] sm:$0xff]
        %v1631 = vld [vmem:[%s1617 + $0x68] sm:$0xff]
        %v1632 = vld [vmem:[%s1617 + $0x70] sm:$0xff]
        %v1633 = vld [vmem:[%s1617 + $0x78] sm:$0xff]
        %v1634 = vld [vmem:[%s1617 + $0x80] sm:$0xff]
        %v1635 = vld [vmem:[%s1617 + $0x88] sm:$0xff]
        %v1636 = vld [vmem:[%s1617 + $0x90] sm:$0xff]
        %v1637 = vld [vmem:[%s1617 + $0x98] sm:$0xff]
        %v1638 = vld [vmem:[%s1617 + $0xa0] sm:$0xff]
        %v1639 = vld [vmem:[%s1617 + $0xa8] sm:$0xff]
        %v1640 = vld [vmem:[%s1617 + $0xb0] sm:$0xff]
        %v1641 = vld [vmem:[%s1617 + $0xb8] sm:$0xff]
        %v1642 = vld [vmem:[%s1617 + $0xc0] sm:$0xff]
        %v1643 = vld [vmem:[%s1617 + $0xc8] sm:$0xff]
        %v1644 = vld [vmem:[%s1617 + $0xd0] sm:$0xff]
        %v1645 = vld [vmem:[%s1617 + $0xd8] sm:$0xff]
        %v1646 = vld [vmem:[%s1617 + $0xe0] sm:$0xff]
        %v1647 = vld [vmem:[%s1617 + $0xe8] sm:$0xff]
        %v1648 = vld [vmem:[%s1617 + $0xf0] sm:$0xff]
        %v1649 = vld [vmem:[%s1617 + $0xf8] sm:$0xff]
        %v1650 = vld [vmem:[%s1617 + $0x100] sm:$0xff]
        %v1651 = vld [vmem:[%s1617 + $0x108] sm:$0xff]
        %v1652 = vld [vmem:[%s1617 + $0x110] sm:$0xff]
        %v1653 = vld [vmem:[%s1617 + $0x118] sm:$0xff]
        %v1654 = vld [vmem:[%s1617 + $0x120] sm:$0xff]
        %v1655 = vld [vmem:[%s1617 + $0x128] sm:$0xff]
        %v1656 = vld [vmem:[%s1617 + $0x130] sm:$0xff]
        %v1657 = vld [vmem:[%s1617 + $0x138] sm:$0xff]
        %v1658 = vld [vmem:[%s1617 + $0x140] sm:$0xff]
        %v1659 = vld [vmem:[%s1617 + $0x148] sm:$0xff]
        %v1660 = vld [vmem:[%s1617 + $0x150] sm:$0xff]
        %v1661 = vld [vmem:[%s1617 + $0x158] sm:$0xff]
        %v1662 = vld [vmem:[%s1617 + $0x160] sm:$0xff]
        %v1663 = vld [vmem:[%s1617 + $0x168] sm:$0xff]
        %v1664 = vld [vmem:[%s1617 + $0x170] sm:$0xff]
        %v1665 = vld [vmem:[%s1617 + $0x178] sm:$0xff]
        %v1666 = vld [vmem:[%s1617 + $0x180] sm:$0xff]
        %v1667 = vld [vmem:[%s1617 + $0x188] sm:$0xff]
        %v1668 = vld [vmem:[%s1617 + $0x190] sm:$0xff]
        %v1669 = vld [vmem:[%s1617 + $0x198] sm:$0xff]
        %v1670 = vld [vmem:[%s1617 + $0x1a0] sm:$0xff]
        %v1671 = vld [vmem:[%s1617 + $0x1a8] sm:$0xff]
        %v1672 = vld [vmem:[%s1617 + $0x1b0] sm:$0xff]
        %v1673 = vld [vmem:[%s1617 + $0x1b8] sm:$0xff]
        %v1674 = vld [vmem:[%s1617 + $0x1c0] sm:$0xff]
        %v1675 = vld [vmem:[%s1617 + $0x1c8] sm:$0xff]
        %v1676 = vld [vmem:[%s1617 + $0x1d0] sm:$0xff]
        %v1677 = vld [vmem:[%s1617 + $0x1d8] sm:$0xff]
        %v1678 = vld [vmem:[%s1617 + $0x1e0] sm:$0xff]
        %v1679 = vld [vmem:[%s1617 + $0x1e8] sm:$0xff]
        %v1680 = vld [vmem:[%s1617 + $0x1f0] sm:$0xff]
        %v1681 = vld [vmem:[%s1617 + $0x1f8] sm:$0xff]
        %v1682 = vld [vmem:[%s1617 + $0x200] sm:$0xff]
        %v1683 = vld [vmem:[%s1617 + $0x208] sm:$0xff]
        %v1684 = vld [vmem:[%s1617 + $0x210] sm:$0xff]
        %v1685 = vld [vmem:[%s1617 + $0x218] sm:$0xff]
        %v1686 = vld [vmem:[%s1617 + $0x220] sm:$0xff]
        %v1687 = vld [vmem:[%s1617 + $0x228] sm:$0xff]
        %v1688 = vld [vmem:[%s1617 + $0x230] sm:$0xff]
        %v1689 = vld [vmem:[%s1617 + $0x238] sm:$0xff]
        %v1690 = vld [vmem:[%s1617 + $0x240] sm:$0xff]
        %v1691 = vld [vmem:[%s1617 + $0x248] sm:$0xff]
        %v1692 = vld [vmem:[%s1617 + $0x250] sm:$0xff]
        %v1693 = vld [vmem:[%s1617 + $0x258] sm:$0xff]
        %v1694 = vld [vmem:[%s1617 + $0x260] sm:$0xff]
        %v1695 = vld [vmem:[%s1617 + $0x268] sm:$0xff]
        %v1696 = vld [vmem:[%s1617 + $0x270] sm:$0xff]
        %v1697 = vld [vmem:[%s1617 + $0x278] sm:$0xff]
        %v1698 = vld [vmem:[%s1617 + $0x280] sm:$0xff]
        %v1699 = vld [vmem:[%s1617 + $0x288] sm:$0xff]
        %v1700 = vld [vmem:[%s1617 + $0x290] sm:$0xff]
        %v1701 = vld [vmem:[%s1617 + $0x298] sm:$0xff]
        %v1702 = vld [vmem:[%s1617 + $0x2a0] sm:$0xff]
        %v1703 = vld [vmem:[%s1617 + $0x2a8] sm:$0xff]
        %v1704 = vld [vmem:[%s1617 + $0x2b0] sm:$0xff]
        %v1705 = vld [vmem:[%s1617 + $0x2b8] sm:$0xff]
        %v1706 = vld [vmem:[%s1617 + $0x2c0] sm:$0xff]
        %v1707 = vld [vmem:[%s1617 + $0x2c8] sm:$0xff]
        %v1708 = vld [vmem:[%s1617 + $0x2d0] sm:$0xff]
        %v1709 = vld [vmem:[%s1617 + $0x2d8] sm:$0xff]
        %v1710 = vld [vmem:[%s1617 + $0x2e0] sm:$0xff]
        %v1711 = vld [vmem:[%s1617 + $0x2e8] sm:$0xff]
        %v1712 = vld [vmem:[%s1617 + $0x2f0] sm:$0xff]
        %v1713 = vld [vmem:[%s1617 + $0x2f8] sm:$0xff]
        %v1714 = vld [vmem:[%s1617 + $0x300] sm:$0xff]
        %v1715 = vld [vmem:[%s1617 + $0x308] sm:$0xff]
        %v1716 = vld [vmem:[%s1617 + $0x310] sm:$0xff]
        %v1717 = vld [vmem:[%s1617 + $0x318] sm:$0xff]
        %v1718 = vld [vmem:[%s1617 + $0x320] sm:$0xff]
        %v1719 = vld [vmem:[%s1617 + $0x328] sm:$0xff]
        %v1720 = vld [vmem:[%s1617 + $0x330] sm:$0xff]
        %v1721 = vld [vmem:[%s1617 + $0x338] sm:$0xff]
        %v1722 = vld [vmem:[%s1617 + $0x340] sm:$0xff]
        %v1723 = vld [vmem:[%s1617 + $0x348] sm:$0xff]
        %v1724 = vld [vmem:[%s1617 + $0x350] sm:$0xff]
        %v1725 = vld [vmem:[%s1617 + $0x358] sm:$0xff]
        %s1726 = scalar_lea.vmem %s495, %s1497
        %v1727 = vld [vmem:[%s1726] sm:$0x1]
        %s1728 = scalar_lea.vmem %s499, %s1497
        %v1729 = vld [vmem:[%s1728] sm:$0x1]
        %s1730 = scalar_lea.vmem %s503, %s1497
        %v1731 = vld [vmem:[%s1730] sm:$0x1]
        %v1733 = vperm.slane %v1729, 0
        %v1735 = vmul.f32 %v1502, %v1733
        %v1736 = vmul.f32 %v1503, %v1733
        %v1737 = vmul.f32 %v1504, %v1733
        %v1739 = vperm.slane %v1731, 0
        %v1741 = vadd.f32 %v1735, %v1739
        %v1742 = vadd.f32 %v1736, %v1739
        %v1743 = vadd.f32 %v1737, %v1739
        %v1744 = vmax.f32 %v1741, 0.0
        %v1745 = vmax.f32 %v1742, 0.0
        %v1746 = vmax.f32 %v1743, 0.0
        %v1749 = vrot.slane %v1744, 3
        %v1750 = vrot.slane %v1745, 3
        %v1751 = vsel %vm548, %v1749, %v1750
        %v1754 = vsel %vm548, 0.0, %v1749
        %v1755 = vsel %vm524, %v1751, 0.0
        %v1758 = vrot.slane 0.0, 1
        %v1759 = vrot.slane %v1754, 1
        %v1760 = vsel %vm524, %v1758, %v1759
        %1761 = vrot.lane.b32.xlu0 %v1760, 32
        %v1762 = vpop.permute.xlu0 %1761
        %1763 = vrot.lane.b32.xlu0 %v1759, 32
        %v1764 = vpop.permute.xlu0 %1763
        %v1767 = vrot.slane 0.0, 2
        %v1768 = vrot.slane %v1754, 2
        %v1769 = vsel %vm536, %v1767, %v1768
        %1770 = vrot.lane.b32.xlu0 %v1769, 64
        %v1771 = vpop.permute.xlu0 %1770
        %1772 = vrot.lane.b32.xlu0 %v1768, 64
        %v1773 = vpop.permute.xlu0 %1772
        %v1776 = vrot.slane 0.0, 3
        %v1777 = vrot.slane %v1754, 3
        %v1778 = vsel %vm548, %v1776, %v1777
        %1779 = vrot.lane.b32.xlu0 %v1778, 96
        %v1780 = vpop.permute.xlu0 %1779
        %1781 = vrot.lane.b32.xlu0 %v1777, 96
        %v1782 = vpop.permute.xlu0 %1781
        %v1785 = vrot.slane 0.0, 4
        %v1786 = vrot.slane %v1754, 4
        %v1787 = vsel %vm560, %v1785, %v1786
        %v1790 = vrot.slane 0.0, 5
        %v1791 = vrot.slane %v1754, 5
        %v1792 = vsel %vm513, %v1790, %v1791
        %1793 = vrot.lane.b32.xlu0 %v1792, 32
        %v1794 = vpop.permute.xlu0 %1793
        %1795 = vrot.lane.b32.xlu0 %v1791, 32
        %v1796 = vpop.permute.xlu0 %1795
        %v1799 = vrot.slane 0.0, 6
        %v1800 = vrot.slane %v1754, 6
        %v1801 = vsel %vm583, %v1799, %v1800
        %1802 = vrot.lane.b32.xlu0 %v1801, 64
        %v1803 = vpop.permute.xlu0 %1802
        %1804 = vrot.lane.b32.xlu0 %v1800, 64
        %v1805 = vpop.permute.xlu0 %1804
        %vm1809 = vcmask 1040384
        %v1810 = vrot.slane 0.0, 7
        %v1811 = vrot.slane %v1754, 7
        %v1812 = vsel %vm1809, %v1810, %v1811
        %v1813 = vrot.slane %v1755, 7
        %v1814 = vsel %vm1809, %v1811, %v1813
        %1815 = vrot.lane.b32.xlu0 %v1812, 96
        %v1816 = vpop.permute.xlu0 %1815
        %1817 = vrot.lane.b32.xlu0 %v1814, 96
        %v1818 = vpop.permute.xlu0 %1817
        %v1821 = vrot.slane %v1755, 1
        %v1822 = vsel %vm524, %v1759, %v1821
        %1823 = vrot.lane.b32.xlu0 %v1822, 32
        %v1824 = vpop.permute.xlu0 %1823
        %1825 = vrot.lane.b32.xlu0 %v1821, 32
        %v1826 = vpop.permute.xlu0 %1825
        %v1829 = vrot.slane %v1755, 2
        %v1830 = vsel %vm536, %v1768, %v1829
        %1831 = vrot.lane.b32.xlu0 %v1830, 64
        %v1832 = vpop.permute.xlu0 %1831
        %1833 = vrot.lane.b32.xlu0 %v1829, 64
        %v1834 = vpop.permute.xlu0 %1833
        %v1837 = vrot.slane %v1755, 3
        %v1838 = vsel %vm548, %v1777, %v1837
        %1839 = vrot.lane.b32.xlu0 %v1838, 96
        %v1840 = vpop.permute.xlu0 %1839
        %1841 = vrot.lane.b32.xlu0 %v1837, 96
        %v1842 = vpop.permute.xlu0 %1841
        %v1845 = vrot.slane %v1755, 4
        %v1846 = vsel %vm560, %v1786, %v1845
        %v1849 = vrot.slane %v1755, 5
        %v1850 = vsel %vm513, %v1791, %v1849
        %1851 = vrot.lane.b32.xlu0 %v1850, 32
        %v1852 = vpop.permute.xlu0 %1851
        %1853 = vrot.lane.b32.xlu0 %v1849, 32
        %v1854 = vpop.permute.xlu0 %1853
        %v1857 = vrot.slane %v1755, 6
        %v1858 = vsel %vm583, %v1800, %v1857
        %1859 = vrot.lane.b32.xlu0 %v1858, 64
        %v1860 = vpop.permute.xlu0 %1859
        %1861 = vrot.lane.b32.xlu0 %v1857, 64
        %v1862 = vpop.permute.xlu0 %1861
        %v1865 = vsel %vm1809, %v1813, %v1810
        %1866 = vrot.lane.b32.xlu0 %v1865, 96
        %v1867 = vpop.permute.xlu0 %1866
        %v1869 = vsel %vm604, 0.0, %v1762
        %v1870 = vsel %vm604, %v1754, %v1764
        %v1871 = vsel %vm1317, %v1869, %v1771
        %v1872 = vsel %vm1317, %v1870, %v1773
        %v1873 = vsel %vm1320, %v1871, %v1780
        %v1874 = vsel %vm1320, %v1872, %v1782
        %v1875 = vsel %vm604, %v1787, %v1794
        %v1876 = vsel %vm604, %v1786, %v1796
        %v1877 = vsel %vm1317, %v1875, %v1803
        %v1878 = vsel %vm1317, %v1876, %v1805
        %v1879 = vsel %vm1320, %v1877, %v1816
        %v1880 = vsel %vm1320, %v1878, %v1818
        %v1881 = vsel %vm604, %v1754, %v1824
        %v1882 = vsel %vm604, %v1755, %v1826
        %v1883 = vsel %vm1317, %v1881, %v1832
        %v1884 = vsel %vm1317, %v1882, %v1834
        %v1885 = vsel %vm1320, %v1883, %v1840
        %v1886 = vsel %vm1320, %v1884, %v1842
        %v1887 = vsel %vm604, %v1846, %v1852
        %v1888 = vsel %vm604, %v1845, %v1854
        %v1889 = vsel %vm1317, %v1887, %v1860
        %v1890 = vsel %vm1317, %v1888, %v1862
        %v1891 = vsel %vm1320, %v1889, %v1818
        %v1892 = vsel %vm1320, %v1890, %v1867
        %v1893 = vsel %vm524, %v1821, %v1758
        %1894 = vrot.lane.b32.xlu0 %v1893, 32
        %v1895 = vpop.permute.xlu0 %1894
        %1896 = vrot.lane.b32.xlu0 %v1758, 32
        %v1897 = vpop.permute.xlu0 %1896
        %v1900 = vsel %vm536, %v1829, %v1767
        %1901 = vrot.lane.b32.xlu0 %v1900, 64
        %v1902 = vpop.permute.xlu0 %1901
        %1903 = vrot.lane.b32.xlu0 %v1767, 64
        %v1904 = vpop.permute.xlu0 %1903
        %v1907 = vsel %vm548, %v1837, %v1776
        %1908 = vrot.lane.b32.xlu0 %v1907, 96
        %v1909 = vpop.permute.xlu0 %1908
        %1910 = vrot.lane.b32.xlu0 %v1776, 96
        %v1911 = vpop.permute.xlu0 %1910
        %v1914 = vsel %vm560, %v1845, %v1785
        %v1917 = vsel %vm513, %v1849, %v1790
        %1918 = vrot.lane.b32.xlu0 %v1917, 32
        %v1919 = vpop.permute.xlu0 %1918
        %1920 = vrot.lane.b32.xlu0 %v1790, 32
        %v1921 = vpop.permute.xlu0 %1920
        %v1924 = vsel %vm583, %v1857, %v1799
        %1925 = vrot.lane.b32.xlu0 %v1924, 64
        %v1926 = vpop.permute.xlu0 %1925
        %1927 = vrot.lane.b32.xlu0 %v1799, 64
        %v1928 = vpop.permute.xlu0 %1927
        %v1931 = vsel %vm1809, %v1810, %v1810
        %1932 = vrot.lane.b32.xlu0 %v1931, 96
        %v1933 = vpop.permute.xlu0 %1932
        %v1935 = vsel %vm524, %v1758, %v1758
        %1936 = vrot.lane.b32.xlu0 %v1935, 32
        %v1937 = vpop.permute.xlu0 %1936
        %v1939 = vsel %vm536, %v1767, %v1767
        %1940 = vrot.lane.b32.xlu0 %v1939, 64
        %v1941 = vpop.permute.xlu0 %1940
        %v1943 = vsel %vm604, %v1755, %v1895
        %v1944 = vsel %vm604, 0.0, %v1897
        %v1945 = vsel %vm1317, %v1943, %v1902
        %v1946 = vsel %vm1317, %v1944, %v1904
        %v1947 = vsel %vm1320, %v1945, %v1909
        %v1948 = vsel %vm1320, %v1946, %v1911
        %v1949 = vsel %vm604, %v1914, %v1919
        %v1950 = vsel %vm604, %v1785, %v1921
        %v1951 = vsel %vm1317, %v1949, %v1926
        %v1952 = vsel %vm1317, %v1950, %v1928
        %v1953 = vsel %vm1320, %v1951, %v1867
        %v1954 = vsel %vm1320, %v1952, %v1933
        %v1955 = vsel %vm604, 0.0, %v1937
        %v1956 = vsel %vm1317, %v1955, %v1941
        %v1958 = vrot.slane %v1745, 5
        %v1959 = vrot.slane %v1746, 5
        %v1960 = vsel %vm513, %v1958, %v1959
        %v1963 = vsel %vm548, 0.0, %v1958
        %v1964 = vsel %vm524, %v1960, 0.0
        %v1966 = vrot.slane %v1963, 1
        %v1967 = vsel %vm524, %v1758, %v1966
        %1968 = vrot.lane.b32.xlu0 %v1967, 32
        %v1969 = vpop.permute.xlu0 %1968
        %1970 = vrot.lane.b32.xlu0 %v1966, 32
        %v1971 = vpop.permute.xlu0 %1970
        %v1974 = vrot.slane %v1963, 2
        %v1975 = vsel %vm536, %v1767, %v1974
        %1976 = vrot.lane.b32.xlu0 %v1975, 64
        %v1977 = vpop.permute.xlu0 %1976
        %1978 = vrot.lane.b32.xlu0 %v1974, 64
        %v1979 = vpop.permute.xlu0 %1978
        %v1982 = vrot.slane %v1963, 3
        %v1983 = vsel %vm548, %v1776, %v1982
        %1984 = vrot.lane.b32.xlu0 %v1983, 96
        %v1985 = vpop.permute.xlu0 %1984
        %1986 = vrot.lane.b32.xlu0 %v1982, 96
        %v1987 = vpop.permute.xlu0 %1986
        %v1990 = vrot.slane %v1963, 4
        %v1991 = vsel %vm560, %v1785, %v1990
        %v1994 = vrot.slane %v1963, 5
        %v1995 = vsel %vm513, %v1790, %v1994
        %1996 = vrot.lane.b32.xlu0 %v1995, 32
        %v1997 = vpop.permute.xlu0 %1996
        %1998 = vrot.lane.b32.xlu0 %v1994, 32
        %v1999 = vpop.permute.xlu0 %1998
        %v2002 = vrot.slane %v1963, 6
        %v2003 = vsel %vm583, %v1799, %v2002
        %2004 = vrot.lane.b32.xlu0 %v2003, 64
        %v2005 = vpop.permute.xlu0 %2004
        %2006 = vrot.lane.b32.xlu0 %v2002, 64
        %v2007 = vpop.permute.xlu0 %2006
        %v2011 = vrot.slane %v1963, 7
        %v2012 = vsel %vm1809, %v1810, %v2011
        %v2013 = vrot.slane %v1964, 7
        %v2014 = vsel %vm1809, %v2011, %v2013
        %2015 = vrot.lane.b32.xlu0 %v2012, 96
        %v2016 = vpop.permute.xlu0 %2015
        %2017 = vrot.lane.b32.xlu0 %v2014, 96
        %v2018 = vpop.permute.xlu0 %2017
        %v2021 = vrot.slane %v1964, 1
        %v2022 = vsel %vm524, %v1966, %v2021
        %2023 = vrot.lane.b32.xlu0 %v2022, 32
        %v2024 = vpop.permute.xlu0 %2023
        %2025 = vrot.lane.b32.xlu0 %v2021, 32
        %v2026 = vpop.permute.xlu0 %2025
        %v2029 = vrot.slane %v1964, 2
        %v2030 = vsel %vm536, %v1974, %v2029
        %2031 = vrot.lane.b32.xlu0 %v2030, 64
        %v2032 = vpop.permute.xlu0 %2031
        %2033 = vrot.lane.b32.xlu0 %v2029, 64
        %v2034 = vpop.permute.xlu0 %2033
        %v2037 = vrot.slane %v1964, 3
        %v2038 = vsel %vm548, %v1982, %v2037
        %2039 = vrot.lane.b32.xlu0 %v2038, 96
        %v2040 = vpop.permute.xlu0 %2039
        %2041 = vrot.lane.b32.xlu0 %v2037, 96
        %v2042 = vpop.permute.xlu0 %2041
        %v2045 = vrot.slane %v1964, 4
        %v2046 = vsel %vm560, %v1990, %v2045
        %v2049 = vrot.slane %v1964, 5
        %v2050 = vsel %vm513, %v1994, %v2049
        %2051 = vrot.lane.b32.xlu0 %v2050, 32
        %v2052 = vpop.permute.xlu0 %2051
        %2053 = vrot.lane.b32.xlu0 %v2049, 32
        %v2054 = vpop.permute.xlu0 %2053
        %v2057 = vrot.slane %v1964, 6
        %v2058 = vsel %vm583, %v2002, %v2057
        %2059 = vrot.lane.b32.xlu0 %v2058, 64
        %v2060 = vpop.permute.xlu0 %2059
        %2061 = vrot.lane.b32.xlu0 %v2057, 64
        %v2062 = vpop.permute.xlu0 %2061
        %v2065 = vsel %vm1809, %v2013, %v1810
        %2066 = vrot.lane.b32.xlu0 %v2065, 96
        %v2067 = vpop.permute.xlu0 %2066
        %v2069 = vsel %vm604, 0.0, %v1969
        %v2070 = vsel %vm604, %v1963, %v1971
        %v2071 = vsel %vm1317, %v2069, %v1977
        %v2072 = vsel %vm1317, %v2070, %v1979
        %v2073 = vsel %vm1320, %v2071, %v1985
        %v2074 = vsel %vm1320, %v2072, %v1987
        %v2075 = vsel %vm604, %v1991, %v1997
        %v2076 = vsel %vm604, %v1990, %v1999
        %v2077 = vsel %vm1317, %v2075, %v2005
        %v2078 = vsel %vm1317, %v2076, %v2007
        %v2079 = vsel %vm1320, %v2077, %v2016
        %v2080 = vsel %vm1320, %v2078, %v2018
        %v2081 = vsel %vm604, %v1963, %v2024
        %v2082 = vsel %vm604, %v1964, %v2026
        %v2083 = vsel %vm1317, %v2081, %v2032
        %v2084 = vsel %vm1317, %v2082, %v2034
        %v2085 = vsel %vm1320, %v2083, %v2040
        %v2086 = vsel %vm1320, %v2084, %v2042
        %v2087 = vsel %vm604, %v2046, %v2052
        %v2088 = vsel %vm604, %v2045, %v2054
        %v2089 = vsel %vm1317, %v2087, %v2060
        %v2090 = vsel %vm1317, %v2088, %v2062
        %v2091 = vsel %vm1320, %v2089, %v2018
        %v2092 = vsel %vm1320, %v2090, %v2067
        %v2093 = vsel %vm524, %v2021, %v1758
        %2094 = vrot.lane.b32.xlu0 %v2093, 32
        %v2095 = vpop.permute.xlu0 %2094
        %v2097 = vsel %vm536, %v2029, %v1767
        %2098 = vrot.lane.b32.xlu0 %v2097, 64
        %v2099 = vpop.permute.xlu0 %2098
        %v2101 = vsel %vm548, %v2037, %v1776
        %2102 = vrot.lane.b32.xlu0 %v2101, 96
        %v2103 = vpop.permute.xlu0 %2102
        %v2105 = vsel %vm560, %v2045, %v1785
        %v2107 = vsel %vm513, %v2049, %v1790
        %2108 = vrot.lane.b32.xlu0 %v2107, 32
        %v2109 = vpop.permute.xlu0 %2108
        %v2111 = vsel %vm583, %v2057, %v1799
        %2112 = vrot.lane.b32.xlu0 %v2111, 64
        %v2113 = vpop.permute.xlu0 %2112
        %v2115 = vsel %vm604, %v1964, %v2095
        %v2116 = vsel %vm1317, %v2115, %v2099
        %v2117 = vsel %vm1320, %v2116, %v2103
        %v2118 = vsel %vm604, %v2105, %v2109
        %v2119 = vsel %vm1317, %v2118, %v2113
        %v2120 = vsel %vm1320, %v2119, %v2067
        %v2135 = vrot.slane %v2073, 6
        %v2136 = vrot.slane %v2079, 6
        %v2137 = vrot.slane %v2085, 6
        %v2138 = vrot.slane %v2091, 6
        %v2139 = vrot.slane %v2117, 6
        %v2140 = vrot.slane %v2120, 6
        %v2141 = vrot.slane %v1956, 6
        %v2142 = vrot.slane %v2074, 6
        %v2143 = vsel %vm583, %v2135, %v2142
        %v2144 = vrot.slane %v2080, 6
        %v2145 = vsel %vm583, %v2136, %v2144
        %v2146 = vrot.slane %v2086, 6
        %v2147 = vsel %vm583, %v2137, %v2146
        %v2148 = vrot.slane %v2092, 6
        %v2149 = vsel %vm583, %v2138, %v2148
        %v2150 = vrot.slane %v1948, 6
        %v2151 = vsel %vm583, %v2139, %v2150
        %v2152 = vrot.slane %v1954, 6
        %v2153 = vsel %vm583, %v2140, %v2152
        %v2154 = vrot.slane %v1946, 6
        %v2155 = vsel %vm583, %v2141, %v2154
        %v2169 = vsel %vm583, %v1874, %v2135
        %v2170 = vsel %vm583, %v1880, %v2136
        %v2171 = vsel %vm583, %v1886, %v2137
        %v2172 = vsel %vm583, %v1892, %v2138
        %v2173 = vsel %vm583, %v1948, %v2139
        %v2174 = vsel %vm583, %v1954, %v2140
        %v2175 = vsel %vm583, %v1946, %v2141
        %v2177 = vperm.slane %v1616, 0
        %v2179 = vsel %vm1320, %v1956, 0
        %v2182 = vsel %vm1320, %v2175, 0
        %v2184 = vsel %vm1320, %v2155, 0
        %2186 = vmatpush.msra.mxu0 %v1522
        %2187 = vmatpush.msra.mxu0 %v1521
        %2188 = vmatpush.msra.mxu0 %v1520
        %2189 = vmatpush.msra.mxu0 %v1519
        %2190 = vmatpush.msra.mxu0 %v1518
        %2191 = vmatpush.msra.mxu0 %v1517
        %2192 = vmatpush.msra.mxu0 %v1516
        %2193 = vmatpush.msra.mxu0 %v1515
        %2194 = vmatpush.msra.mxu0 %v1514
        %2195 = vmatpush.msra.mxu0 %v1513
        %2196 = vmatpush.msra.mxu0 %v1512
        %2197 = vmatpush.msra.mxu0 %v1511
        %2198 = vmatpush.msra.mxu0 %v1510
        %2199 = vmatpush.msra.mxu0 %v1509
        %2200 = vmatpush.msra.mxu0 %v1508
        %2201 = vmatpush.msra.mxu0 %v1507
        %2202 = vmatmul.f32.gmra.mxu0 %v1873
        %v2203 = vpop.f32.mrf.mxu0
        %v2204 = vadd.f32 %v2177, %v2203
        %2205 = vmatmul.f32.gmra.mxu0 %v2169
        %v2206 = vpop.f32.mrf.mxu0
        %v2207 = vadd.f32 %v2177, %v2206
        %2208 = vmatmul.f32.gmra.mxu0 %v2143
        %v2209 = vpop.f32.mrf.mxu0
        %v2210 = vadd.f32 %v2177, %v2209
        %2211 = vdwg.mxu0
        %2212 = vmatpush.msra.mxu0 %v1538
        %2213 = vmatpush.msra.mxu0 %v1537
        %2214 = vmatpush.msra.mxu0 %v1536
        %2215 = vmatpush.msra.mxu0 %v1535
        %2216 = vmatpush.msra.mxu0 %v1534
        %2217 = vmatpush.msra.mxu0 %v1533
        %2218 = vmatpush.msra.mxu0 %v1532
        %2219 = vmatpush.msra.mxu0 %v1531
        %2220 = vmatpush.msra.mxu0 %v1530
        %2221 = vmatpush.msra.mxu0 %v1529
        %2222 = vmatpush.msra.mxu0 %v1528
        %2223 = vmatpush.msra.mxu0 %v1527
        %2224 = vmatpush.msra.mxu0 %v1526
        %2225 = vmatpush.msra.mxu0 %v1525
        %2226 = vmatpush.msra.mxu0 %v1524
        %2227 = vmatpush.msra.mxu0 %v1523
        %2228 = vmatmul.f32.gmra.mxu0 %v1879
        %v2229 = vpop.f32.mrf.mxu0
        %v2230 = vadd.f32 %v2204, %v2229
        %2231 = vmatmul.f32.gmra.mxu0 %v2170
        %v2232 = vpop.f32.mrf.mxu0
        %v2233 = vadd.f32 %v2207, %v2232
        %2234 = vmatmul.f32.gmra.mxu0 %v2145
        %v2235 = vpop.f32.mrf.mxu0
        %v2236 = vadd.f32 %v2210, %v2235
        %2237 = vdwg.mxu0
        %2238 = vmatpush.msra.mxu0 %v1554
        %2239 = vmatpush.msra.mxu0 %v1553
        %2240 = vmatpush.msra.mxu0 %v1552
        %2241 = vmatpush.msra.mxu0 %v1551
        %2242 = vmatpush.msra.mxu0 %v1550
        %2243 = vmatpush.msra.mxu0 %v1549
        %2244 = vmatpush.msra.mxu0 %v1548
        %2245 = vmatpush.msra.mxu0 %v1547
        %2246 = vmatpush.msra.mxu0 %v1546
        %2247 = vmatpush.msra.mxu0 %v1545
        %2248 = vmatpush.msra.mxu0 %v1544
        %2249 = vmatpush.msra.mxu0 %v1543
        %2250 = vmatpush.msra.mxu0 %v1542
        %2251 = vmatpush.msra.mxu0 %v1541
        %2252 = vmatpush.msra.mxu0 %v1540
        %2253 = vmatpush.msra.mxu0 %v1539
        %2254 = vmatmul.f32.gmra.mxu0 %v1885
        %v2255 = vpop.f32.mrf.mxu0
        %v2256 = vadd.f32 %v2230, %v2255
        %2257 = vmatmul.f32.gmra.mxu0 %v2171
        %v2258 = vpop.f32.mrf.mxu0
        %v2259 = vadd.f32 %v2233, %v2258
        %2260 = vmatmul.f32.gmra.mxu0 %v2147
        %v2261 = vpop.f32.mrf.mxu0
        %v2262 = vadd.f32 %v2236, %v2261
        %2263 = vdwg.mxu0
        %2264 = vmatpush.msra.mxu0 %v1570
        %2265 = vmatpush.msra.mxu0 %v1569
        %2266 = vmatpush.msra.mxu0 %v1568
        %2267 = vmatpush.msra.mxu0 %v1567
        %2268 = vmatpush.msra.mxu0 %v1566
        %2269 = vmatpush.msra.mxu0 %v1565
        %2270 = vmatpush.msra.mxu0 %v1564
        %2271 = vmatpush.msra.mxu0 %v1563
        %2272 = vmatpush.msra.mxu0 %v1562
        %2273 = vmatpush.msra.mxu0 %v1561
        %2274 = vmatpush.msra.mxu0 %v1560
        %2275 = vmatpush.msra.mxu0 %v1559
        %2276 = vmatpush.msra.mxu0 %v1558
        %2277 = vmatpush.msra.mxu0 %v1557
        %2278 = vmatpush.msra.mxu0 %v1556
        %2279 = vmatpush.msra.mxu0 %v1555
        %2280 = vmatmul.f32.gmra.mxu0 %v1891
        %v2281 = vpop.f32.mrf.mxu0
        %v2282 = vadd.f32 %v2256, %v2281
        %2283 = vmatmul.f32.gmra.mxu0 %v2172
        %v2284 = vpop.f32.mrf.mxu0
        %v2285 = vadd.f32 %v2259, %v2284
        %2286 = vmatmul.f32.gmra.mxu0 %v2149
        %v2287 = vpop.f32.mrf.mxu0
        %v2288 = vadd.f32 %v2262, %v2287
        %2289 = vdwg.mxu0
        %2290 = vmatpush.msra.mxu0 %v1586
        %2291 = vmatpush.msra.mxu0 %v1585
        %2292 = vmatpush.msra.mxu0 %v1584
        %2293 = vmatpush.msra.mxu0 %v1583
        %2294 = vmatpush.msra.mxu0 %v1582
        %2295 = vmatpush.msra.mxu0 %v1581
        %2296 = vmatpush.msra.mxu0 %v1580
        %2297 = vmatpush.msra.mxu0 %v1579
        %2298 = vmatpush.msra.mxu0 %v1578
        %2299 = vmatpush.msra.mxu0 %v1577
        %2300 = vmatpush.msra.mxu0 %v1576
        %2301 = vmatpush.msra.mxu0 %v1575
        %2302 = vmatpush.msra.mxu0 %v1574
        %2303 = vmatpush.msra.mxu0 %v1573
        %2304 = vmatpush.msra.mxu0 %v1572
        %2305 = vmatpush.msra.mxu0 %v1571
        %2306 = vmatmul.f32.gmra.mxu0 %v1947
        %v2307 = vpop.f32.mrf.mxu0
        %v2308 = vadd.f32 %v2282, %v2307
        %2309 = vmatmul.f32.gmra.mxu0 %v2173
        %v2310 = vpop.f32.mrf.mxu0
        %v2311 = vadd.f32 %v2285, %v2310
        %2312 = vmatmul.f32.gmra.mxu0 %v2151
        %v2313 = vpop.f32.mrf.mxu0
        %v2314 = vadd.f32 %v2288, %v2313
        %2315 = vdwg.mxu0
        %2316 = vmatpush.msra.mxu0 %v1602
        %2317 = vmatpush.msra.mxu0 %v1601
        %2318 = vmatpush.msra.mxu0 %v1600
        %2319 = vmatpush.msra.mxu0 %v1599
        %2320 = vmatpush.msra.mxu0 %v1598
        %2321 = vmatpush.msra.mxu0 %v1597
        %2322 = vmatpush.msra.mxu0 %v1596
        %2323 = vmatpush.msra.mxu0 %v1595
        %2324 = vmatpush.msra.mxu0 %v1594
        %2325 = vmatpush.msra.mxu0 %v1593
        %2326 = vmatpush.msra.mxu0 %v1592
        %2327 = vmatpush.msra.mxu0 %v1591
        %2328 = vmatpush.msra.mxu0 %v1590
        %2329 = vmatpush.msra.mxu0 %v1589
        %2330 = vmatpush.msra.mxu0 %v1588
        %2331 = vmatpush.msra.mxu0 %v1587
        %2332 = vmatmul.f32.gmra.mxu0 %v1953
        %v2333 = vpop.f32.mrf.mxu0
        %v2334 = vadd.f32 %v2308, %v2333
        %2335 = vmatmul.f32.gmra.mxu0 %v2174
        %v2336 = vpop.f32.mrf.mxu0
        %v2337 = vadd.f32 %v2311, %v2336
        %2338 = vmatmul.f32.gmra.mxu0 %v2153
        %v2339 = vpop.f32.mrf.mxu0
        %v2340 = vadd.f32 %v2314, %v2339
        %2341 = vdwg.mxu0
        %2342 = vmatpush.msra.mxu0 0.0
        %2343 = vmatpush.msra.mxu0 0.0
        %2344 = vmatpush.msra.mxu0 0.0
        %2345 = vmatpush.msra.mxu0 0.0
        %2346 = vmatpush.msra.mxu0 %v1614
        %2347 = vmatpush.msra.mxu0 %v1613
        %2348 = vmatpush.msra.mxu0 %v1612
        %2349 = vmatpush.msra.mxu0 %v1611
        %2350 = vmatpush.msra.mxu0 %v1610
        %2351 = vmatpush.msra.mxu0 %v1609
        %2352 = vmatpush.msra.mxu0 %v1608
        %2353 = vmatpush.msra.mxu0 %v1607
        %2354 = vmatpush.msra.mxu0 %v1606
        %2355 = vmatpush.msra.mxu0 %v1605
        %2356 = vmatpush.msra.mxu0 %v1604
        %2357 = vmatpush.msra.mxu0 %v1603
        %2358 = vmatmul.f32.gmra.mxu0 %v2179
        %v2359 = vpop.f32.mrf.mxu0
        %v2360 = vadd.f32 %v2334, %v2359
        %2361 = vmatmul.f32.gmra.mxu0 %v2182
        %v2362 = vpop.f32.mrf.mxu0
        %v2363 = vadd.f32 %v2337, %v2362
        %2364 = vmatmul.f32.gmra.mxu0 %v2184
        %v2365 = vpop.f32.mrf.mxu0
        %v2366 = vadd.f32 %v2340, %v2365
        %2367 = vdwg.mxu0
        %v2368 = vmul.f32 %v2360, %v1733
        %v2369 = vmul.f32 %v2363, %v1733
        %v2370 = vmul.f32 %v2366, %v1733
        %v2371 = vadd.f32 %v2368, %v1739
        %v2372 = vadd.f32 %v2369, %v1739
        %v2373 = vadd.f32 %v2370, %v1739
        %v2374 = vmax.f32 %v2371, 0.0
        %v2375 = vmax.f32 %v2372, 0.0
        %v2376 = vmax.f32 %v2373, 0.0
        %v2379 = vrot.slane %v2374, 3
        %v2380 = vrot.slane %v2375, 3
        %v2381 = vsel %vm548, %v2379, %v2380
        %v2384 = vsel %vm548, 0.0, %v2379
        %v2385 = vsel %vm524, %v2381, 0.0
        %v2387 = vrot.slane %v2384, 1
        %v2388 = vsel %vm524, %v1758, %v2387
        %2389 = vrot.lane.b32.xlu0 %v2388, 32
        %v2390 = vpop.permute.xlu0 %2389
        %2391 = vrot.lane.b32.xlu0 %v2387, 32
        %v2392 = vpop.permute.xlu0 %2391
        %v2395 = vrot.slane %v2384, 2
        %v2396 = vsel %vm536, %v1767, %v2395
        %2397 = vrot.lane.b32.xlu0 %v2396, 64
        %v2398 = vpop.permute.xlu0 %2397
        %2399 = vrot.lane.b32.xlu0 %v2395, 64
        %v2400 = vpop.permute.xlu0 %2399
        %v2403 = vrot.slane %v2384, 3
        %v2404 = vsel %vm548, %v1776, %v2403
        %2405 = vrot.lane.b32.xlu0 %v2404, 96
        %v2406 = vpop.permute.xlu0 %2405
        %2407 = vrot.lane.b32.xlu0 %v2403, 96
        %v2408 = vpop.permute.xlu0 %2407
        %v2411 = vrot.slane %v2384, 4
        %v2412 = vsel %vm560, %v1785, %v2411
        %v2415 = vrot.slane %v2384, 5
        %v2416 = vsel %vm513, %v1790, %v2415
        %2417 = vrot.lane.b32.xlu0 %v2416, 32
        %v2418 = vpop.permute.xlu0 %2417
        %2419 = vrot.lane.b32.xlu0 %v2415, 32
        %v2420 = vpop.permute.xlu0 %2419
        %v2423 = vrot.slane %v2384, 6
        %v2424 = vsel %vm583, %v1799, %v2423
        %2425 = vrot.lane.b32.xlu0 %v2424, 64
        %v2426 = vpop.permute.xlu0 %2425
        %2427 = vrot.lane.b32.xlu0 %v2423, 64
        %v2428 = vpop.permute.xlu0 %2427
        %v2432 = vrot.slane %v2384, 7
        %v2433 = vsel %vm1809, %v1810, %v2432
        %v2434 = vrot.slane %v2385, 7
        %v2435 = vsel %vm1809, %v2432, %v2434
        %2436 = vrot.lane.b32.xlu0 %v2433, 96
        %v2437 = vpop.permute.xlu0 %2436
        %2438 = vrot.lane.b32.xlu0 %v2435, 96
        %v2439 = vpop.permute.xlu0 %2438
        %v2442 = vrot.slane %v2385, 1
        %v2443 = vsel %vm524, %v2387, %v2442
        %2444 = vrot.lane.b32.xlu0 %v2443, 32
        %v2445 = vpop.permute.xlu0 %2444
        %2446 = vrot.lane.b32.xlu0 %v2442, 32
        %v2447 = vpop.permute.xlu0 %2446
        %v2450 = vrot.slane %v2385, 2
        %v2451 = vsel %vm536, %v2395, %v2450
        %2452 = vrot.lane.b32.xlu0 %v2451, 64
        %v2453 = vpop.permute.xlu0 %2452
        %2454 = vrot.lane.b32.xlu0 %v2450, 64
        %v2455 = vpop.permute.xlu0 %2454
        %v2458 = vrot.slane %v2385, 3
        %v2459 = vsel %vm548, %v2403, %v2458
        %2460 = vrot.lane.b32.xlu0 %v2459, 96
        %v2461 = vpop.permute.xlu0 %2460
        %2462 = vrot.lane.b32.xlu0 %v2458, 96
        %v2463 = vpop.permute.xlu0 %2462
        %v2466 = vrot.slane %v2385, 4
        %v2467 = vsel %vm560, %v2411, %v2466
        %v2470 = vrot.slane %v2385, 5
        %v2471 = vsel %vm513, %v2415, %v2470
        %2472 = vrot.lane.b32.xlu0 %v2471, 32
        %v2473 = vpop.permute.xlu0 %2472
        %2474 = vrot.lane.b32.xlu0 %v2470, 32
        %v2475 = vpop.permute.xlu0 %2474
        %v2478 = vrot.slane %v2385, 6
        %v2479 = vsel %vm583, %v2423, %v2478
        %2480 = vrot.lane.b32.xlu0 %v2479, 64
        %v2481 = vpop.permute.xlu0 %2480
        %2482 = vrot.lane.b32.xlu0 %v2478, 64
        %v2483 = vpop.permute.xlu0 %2482
        %v2486 = vsel %vm1809, %v2434, %v1810
        %2487 = vrot.lane.b32.xlu0 %v2486, 96
        %v2488 = vpop.permute.xlu0 %2487
        %v2490 = vsel %vm604, 0.0, %v2390
        %v2491 = vsel %vm604, %v2384, %v2392
        %v2492 = vsel %vm1317, %v2490, %v2398
        %v2493 = vsel %vm1317, %v2491, %v2400
        %v2494 = vsel %vm1320, %v2492, %v2406
        %v2495 = vsel %vm1320, %v2493, %v2408
        %v2496 = vsel %vm604, %v2412, %v2418
        %v2497 = vsel %vm604, %v2411, %v2420
        %v2498 = vsel %vm1317, %v2496, %v2426
        %v2499 = vsel %vm1317, %v2497, %v2428
        %v2500 = vsel %vm1320, %v2498, %v2437
        %v2501 = vsel %vm1320, %v2499, %v2439
        %v2502 = vsel %vm604, %v2384, %v2445
        %v2503 = vsel %vm604, %v2385, %v2447
        %v2504 = vsel %vm1317, %v2502, %v2453
        %v2505 = vsel %vm1317, %v2503, %v2455
        %v2506 = vsel %vm1320, %v2504, %v2461
        %v2507 = vsel %vm1320, %v2505, %v2463
        %v2508 = vsel %vm604, %v2467, %v2473
        %v2509 = vsel %vm604, %v2466, %v2475
        %v2510 = vsel %vm1317, %v2508, %v2481
        %v2511 = vsel %vm1317, %v2509, %v2483
        %v2512 = vsel %vm1320, %v2510, %v2439
        %v2513 = vsel %vm1320, %v2511, %v2488
        %v2514 = vsel %vm524, %v2442, %v1758
        %2515 = vrot.lane.b32.xlu0 %v2514, 32
        %v2516 = vpop.permute.xlu0 %2515
        %v2518 = vsel %vm536, %v2450, %v1767
        %2519 = vrot.lane.b32.xlu0 %v2518, 64
        %v2520 = vpop.permute.xlu0 %2519
        %v2522 = vsel %vm548, %v2458, %v1776
        %2523 = vrot.lane.b32.xlu0 %v2522, 96
        %v2524 = vpop.permute.xlu0 %2523
        %v2526 = vsel %vm560, %v2466, %v1785
        %v2528 = vsel %vm513, %v2470, %v1790
        %2529 = vrot.lane.b32.xlu0 %v2528, 32
        %v2530 = vpop.permute.xlu0 %2529
        %v2532 = vsel %vm583, %v2478, %v1799
        %2533 = vrot.lane.b32.xlu0 %v2532, 64
        %v2534 = vpop.permute.xlu0 %2533
        %v2536 = vsel %vm604, %v2385, %v2516
        %v2537 = vsel %vm1317, %v2536, %v2520
        %v2538 = vsel %vm1320, %v2537, %v2524
        %v2539 = vsel %vm604, %v2526, %v2530
        %v2540 = vsel %vm1317, %v2539, %v2534
        %v2541 = vsel %vm1320, %v2540, %v2488
        %v2543 = vrot.slane %v2375, 5
        %v2544 = vrot.slane %v2376, 5
        %v2545 = vsel %vm513, %v2543, %v2544
        %v2548 = vsel %vm548, 0.0, %v2543
        %v2549 = vsel %vm524, %v2545, 0.0
        %v2551 = vrot.slane %v2548, 1
        %v2552 = vsel %vm524, %v1758, %v2551
        %2553 = vrot.lane.b32.xlu0 %v2552, 32
        %v2554 = vpop.permute.xlu0 %2553
        %2555 = vrot.lane.b32.xlu0 %v2551, 32
        %v2556 = vpop.permute.xlu0 %2555
        %v2559 = vrot.slane %v2548, 2
        %v2560 = vsel %vm536, %v1767, %v2559
        %2561 = vrot.lane.b32.xlu0 %v2560, 64
        %v2562 = vpop.permute.xlu0 %2561
        %2563 = vrot.lane.b32.xlu0 %v2559, 64
        %v2564 = vpop.permute.xlu0 %2563
        %v2567 = vrot.slane %v2548, 3
        %v2568 = vsel %vm548, %v1776, %v2567
        %2569 = vrot.lane.b32.xlu0 %v2568, 96
        %v2570 = vpop.permute.xlu0 %2569
        %2571 = vrot.lane.b32.xlu0 %v2567, 96
        %v2572 = vpop.permute.xlu0 %2571
        %v2575 = vrot.slane %v2548, 4
        %v2576 = vsel %vm560, %v1785, %v2575
        %v2579 = vrot.slane %v2548, 5
        %v2580 = vsel %vm513, %v1790, %v2579
        %2581 = vrot.lane.b32.xlu0 %v2580, 32
        %v2582 = vpop.permute.xlu0 %2581
        %2583 = vrot.lane.b32.xlu0 %v2579, 32
        %v2584 = vpop.permute.xlu0 %2583
        %v2587 = vrot.slane %v2548, 6
        %v2588 = vsel %vm583, %v1799, %v2587
        %2589 = vrot.lane.b32.xlu0 %v2588, 64
        %v2590 = vpop.permute.xlu0 %2589
        %2591 = vrot.lane.b32.xlu0 %v2587, 64
        %v2592 = vpop.permute.xlu0 %2591
        %v2596 = vrot.slane %v2548, 7
        %v2597 = vsel %vm1809, %v1810, %v2596
        %v2598 = vrot.slane %v2549, 7
        %v2599 = vsel %vm1809, %v2596, %v2598
        %2600 = vrot.lane.b32.xlu0 %v2597, 96
        %v2601 = vpop.permute.xlu0 %2600
        %2602 = vrot.lane.b32.xlu0 %v2599, 96
        %v2603 = vpop.permute.xlu0 %2602
        %v2606 = vrot.slane %v2549, 1
        %v2607 = vsel %vm524, %v2551, %v2606
        %2608 = vrot.lane.b32.xlu0 %v2607, 32
        %v2609 = vpop.permute.xlu0 %2608
        %2610 = vrot.lane.b32.xlu0 %v2606, 32
        %v2611 = vpop.permute.xlu0 %2610
        %v2614 = vrot.slane %v2549, 2
        %v2615 = vsel %vm536, %v2559, %v2614
        %2616 = vrot.lane.b32.xlu0 %v2615, 64
        %v2617 = vpop.permute.xlu0 %2616
        %2618 = vrot.lane.b32.xlu0 %v2614, 64
        %v2619 = vpop.permute.xlu0 %2618
        %v2622 = vrot.slane %v2549, 3
        %v2623 = vsel %vm548, %v2567, %v2622
        %2624 = vrot.lane.b32.xlu0 %v2623, 96
        %v2625 = vpop.permute.xlu0 %2624
        %2626 = vrot.lane.b32.xlu0 %v2622, 96
        %v2627 = vpop.permute.xlu0 %2626
        %v2630 = vrot.slane %v2549, 4
        %v2631 = vsel %vm560, %v2575, %v2630
        %v2634 = vrot.slane %v2549, 5
        %v2635 = vsel %vm513, %v2579, %v2634
        %2636 = vrot.lane.b32.xlu0 %v2635, 32
        %v2637 = vpop.permute.xlu0 %2636
        %2638 = vrot.lane.b32.xlu0 %v2634, 32
        %v2639 = vpop.permute.xlu0 %2638
        %v2642 = vrot.slane %v2549, 6
        %v2643 = vsel %vm583, %v2587, %v2642
        %2644 = vrot.lane.b32.xlu0 %v2643, 64
        %v2645 = vpop.permute.xlu0 %2644
        %2646 = vrot.lane.b32.xlu0 %v2642, 64
        %v2647 = vpop.permute.xlu0 %2646
        %v2650 = vsel %vm1809, %v2598, %v1810
        %2651 = vrot.lane.b32.xlu0 %v2650, 96
        %v2652 = vpop.permute.xlu0 %2651
        %v2654 = vsel %vm604, 0.0, %v2554
        %v2655 = vsel %vm604, %v2548, %v2556
        %v2656 = vsel %vm1317, %v2654, %v2562
        %v2657 = vsel %vm1317, %v2655, %v2564
        %v2658 = vsel %vm1320, %v2656, %v2570
        %v2659 = vsel %vm1320, %v2657, %v2572
        %v2660 = vsel %vm604, %v2576, %v2582
        %v2661 = vsel %vm604, %v2575, %v2584
        %v2662 = vsel %vm1317, %v2660, %v2590
        %v2663 = vsel %vm1317, %v2661, %v2592
        %v2664 = vsel %vm1320, %v2662, %v2601
        %v2665 = vsel %vm1320, %v2663, %v2603
        %v2666 = vsel %vm604, %v2548, %v2609
        %v2667 = vsel %vm604, %v2549, %v2611
        %v2668 = vsel %vm1317, %v2666, %v2617
        %v2669 = vsel %vm1317, %v2667, %v2619
        %v2670 = vsel %vm1320, %v2668, %v2625
        %v2671 = vsel %vm1320, %v2669, %v2627
        %v2672 = vsel %vm604, %v2631, %v2637
        %v2673 = vsel %vm604, %v2630, %v2639
        %v2674 = vsel %vm1317, %v2672, %v2645
        %v2675 = vsel %vm1317, %v2673, %v2647
        %v2676 = vsel %vm1320, %v2674, %v2603
        %v2677 = vsel %vm1320, %v2675, %v2652
        %v2678 = vsel %vm524, %v2606, %v1758
        %2679 = vrot.lane.b32.xlu0 %v2678, 32
        %v2680 = vpop.permute.xlu0 %2679
        %v2682 = vsel %vm536, %v2614, %v1767
        %2683 = vrot.lane.b32.xlu0 %v2682, 64
        %v2684 = vpop.permute.xlu0 %2683
        %v2686 = vsel %vm548, %v2622, %v1776
        %2687 = vrot.lane.b32.xlu0 %v2686, 96
        %v2688 = vpop.permute.xlu0 %2687
        %v2690 = vsel %vm560, %v2630, %v1785
        %v2692 = vsel %vm513, %v2634, %v1790
        %2693 = vrot.lane.b32.xlu0 %v2692, 32
        %v2694 = vpop.permute.xlu0 %2693
        %v2696 = vsel %vm583, %v2642, %v1799
        %2697 = vrot.lane.b32.xlu0 %v2696, 64
        %v2698 = vpop.permute.xlu0 %2697
        %v2700 = vsel %vm604, %v2549, %v2680
        %v2701 = vsel %vm1317, %v2700, %v2684
        %v2702 = vsel %vm1320, %v2701, %v2688
        %v2703 = vsel %vm604, %v2690, %v2694
        %v2704 = vsel %vm1317, %v2703, %v2698
        %v2705 = vsel %vm1320, %v2704, %v2652
        %v2716 = vrot.slane %v2658, 6
        %v2717 = vrot.slane %v2664, 6
        %v2718 = vrot.slane %v2670, 6
        %v2719 = vrot.slane %v2676, 6
        %v2720 = vrot.slane %v2702, 6
        %v2721 = vrot.slane %v2705, 6
        %v2722 = vrot.slane %v2659, 6
        %v2723 = vsel %vm583, %v2716, %v2722
        %v2724 = vrot.slane %v2665, 6
        %v2725 = vsel %vm583, %v2717, %v2724
        %v2726 = vrot.slane %v2671, 6
        %v2727 = vsel %vm583, %v2718, %v2726
        %v2728 = vrot.slane %v2677, 6
        %v2729 = vsel %vm583, %v2719, %v2728
        %v2730 = vsel %vm583, %v2720, %v2150
        %v2731 = vsel %vm583, %v2721, %v2152
        %v2744 = vsel %vm583, %v2495, %v2716
        %v2745 = vsel %vm583, %v2501, %v2717
        %v2746 = vsel %vm583, %v2507, %v2718
        %v2747 = vsel %vm583, %v2513, %v2719
        %v2748 = vsel %vm583, %v1948, %v2720
        %v2749 = vsel %vm583, %v1954, %v2721
        %v2751 = vperm.slane %v1727, 0
        %2753 = vmatpush.msra.mxu0 %v1633
        %2754 = vmatpush.msra.mxu0 %v1632
        %2755 = vmatpush.msra.mxu0 %v1631
        %2756 = vmatpush.msra.mxu0 %v1630
        %2757 = vmatpush.msra.mxu0 %v1629
        %2758 = vmatpush.msra.mxu0 %v1628
        %2759 = vmatpush.msra.mxu0 %v1627
        %2760 = vmatpush.msra.mxu0 %v1626
        %2761 = vmatpush.msra.mxu0 %v1625
        %2762 = vmatpush.msra.mxu0 %v1624
        %2763 = vmatpush.msra.mxu0 %v1623
        %2764 = vmatpush.msra.mxu0 %v1622
        %2765 = vmatpush.msra.mxu0 %v1621
        %2766 = vmatpush.msra.mxu0 %v1620
        %2767 = vmatpush.msra.mxu0 %v1619
        %2768 = vmatpush.msra.mxu0 %v1618
        %2769 = vmatmul.f32.gmra.mxu0 %v2494
        %v2770 = vpop.f32.mrf.mxu0
        %v2771 = vadd.f32 %v2751, %v2770
        %2772 = vmatmul.f32.gmra.mxu0 %v2744
        %v2773 = vpop.f32.mrf.mxu0
        %v2774 = vadd.f32 %v2751, %v2773
        %2775 = vmatmul.f32.gmra.mxu0 %v2723
        %v2776 = vpop.f32.mrf.mxu0
        %v2777 = vadd.f32 %v2751, %v2776
        %2778 = vdwg.mxu0
        %2779 = vmatpush.msra.mxu0 %v1649
        %2780 = vmatpush.msra.mxu0 %v1648
        %2781 = vmatpush.msra.mxu0 %v1647
        %2782 = vmatpush.msra.mxu0 %v1646
        %2783 = vmatpush.msra.mxu0 %v1645
        %2784 = vmatpush.msra.mxu0 %v1644
        %2785 = vmatpush.msra.mxu0 %v1643
        %2786 = vmatpush.msra.mxu0 %v1642
        %2787 = vmatpush.msra.mxu0 %v1641
        %2788 = vmatpush.msra.mxu0 %v1640
        %2789 = vmatpush.msra.mxu0 %v1639
        %2790 = vmatpush.msra.mxu0 %v1638
        %2791 = vmatpush.msra.mxu0 %v1637
        %2792 = vmatpush.msra.mxu0 %v1636
        %2793 = vmatpush.msra.mxu0 %v1635
        %2794 = vmatpush.msra.mxu0 %v1634
        %2795 = vmatmul.f32.gmra.mxu0 %v2500
        %v2796 = vpop.f32.mrf.mxu0
        %v2797 = vadd.f32 %v2771, %v2796
        %2798 = vmatmul.f32.gmra.mxu0 %v2745
        %v2799 = vpop.f32.mrf.mxu0
        %v2800 = vadd.f32 %v2774, %v2799
        %2801 = vmatmul.f32.gmra.mxu0 %v2725
        %v2802 = vpop.f32.mrf.mxu0
        %v2803 = vadd.f32 %v2777, %v2802
        %2804 = vdwg.mxu0
        %2805 = vmatpush.msra.mxu0 %v1665
        %2806 = vmatpush.msra.mxu0 %v1664
        %2807 = vmatpush.msra.mxu0 %v1663
        %2808 = vmatpush.msra.mxu0 %v1662
        %2809 = vmatpush.msra.mxu0 %v1661
        %2810 = vmatpush.msra.mxu0 %v1660
        %2811 = vmatpush.msra.mxu0 %v1659
        %2812 = vmatpush.msra.mxu0 %v1658
        %2813 = vmatpush.msra.mxu0 %v1657
        %2814 = vmatpush.msra.mxu0 %v1656
        %2815 = vmatpush.msra.mxu0 %v1655
        %2816 = vmatpush.msra.mxu0 %v1654
        %2817 = vmatpush.msra.mxu0 %v1653
        %2818 = vmatpush.msra.mxu0 %v1652
        %2819 = vmatpush.msra.mxu0 %v1651
        %2820 = vmatpush.msra.mxu0 %v1650
        %2821 = vmatmul.f32.gmra.mxu0 %v2506
        %v2822 = vpop.f32.mrf.mxu0
        %v2823 = vadd.f32 %v2797, %v2822
        %2824 = vmatmul.f32.gmra.mxu0 %v2746
        %v2825 = vpop.f32.mrf.mxu0
        %v2826 = vadd.f32 %v2800, %v2825
        %2827 = vmatmul.f32.gmra.mxu0 %v2727
        %v2828 = vpop.f32.mrf.mxu0
        %v2829 = vadd.f32 %v2803, %v2828
        %2830 = vdwg.mxu0
        %2831 = vmatpush.msra.mxu0 %v1681
        %2832 = vmatpush.msra.mxu0 %v1680
        %2833 = vmatpush.msra.mxu0 %v1679
        %2834 = vmatpush.msra.mxu0 %v1678
        %2835 = vmatpush.msra.mxu0 %v1677
        %2836 = vmatpush.msra.mxu0 %v1676
        %2837 = vmatpush.msra.mxu0 %v1675
        %2838 = vmatpush.msra.mxu0 %v1674
        %2839 = vmatpush.msra.mxu0 %v1673
        %2840 = vmatpush.msra.mxu0 %v1672
        %2841 = vmatpush.msra.mxu0 %v1671
        %2842 = vmatpush.msra.mxu0 %v1670
        %2843 = vmatpush.msra.mxu0 %v1669
        %2844 = vmatpush.msra.mxu0 %v1668
        %2845 = vmatpush.msra.mxu0 %v1667
        %2846 = vmatpush.msra.mxu0 %v1666
        %2847 = vmatmul.f32.gmra.mxu0 %v2512
        %v2848 = vpop.f32.mrf.mxu0
        %v2849 = vadd.f32 %v2823, %v2848
        %2850 = vmatmul.f32.gmra.mxu0 %v2747
        %v2851 = vpop.f32.mrf.mxu0
        %v2852 = vadd.f32 %v2826, %v2851
        %2853 = vmatmul.f32.gmra.mxu0 %v2729
        %v2854 = vpop.f32.mrf.mxu0
        %v2855 = vadd.f32 %v2829, %v2854
        %2856 = vdwg.mxu0
        %2857 = vmatpush.msra.mxu0 %v1697
        %2858 = vmatpush.msra.mxu0 %v1696
        %2859 = vmatpush.msra.mxu0 %v1695
        %2860 = vmatpush.msra.mxu0 %v1694
        %2861 = vmatpush.msra.mxu0 %v1693
        %2862 = vmatpush.msra.mxu0 %v1692
        %2863 = vmatpush.msra.mxu0 %v1691
        %2864 = vmatpush.msra.mxu0 %v1690
        %2865 = vmatpush.msra.mxu0 %v1689
        %2866 = vmatpush.msra.mxu0 %v1688
        %2867 = vmatpush.msra.mxu0 %v1687
        %2868 = vmatpush.msra.mxu0 %v1686
        %2869 = vmatpush.msra.mxu0 %v1685
        %2870 = vmatpush.msra.mxu0 %v1684
        %2871 = vmatpush.msra.mxu0 %v1683
        %2872 = vmatpush.msra.mxu0 %v1682
        %2873 = vmatmul.f32.gmra.mxu0 %v2538
        %v2874 = vpop.f32.mrf.mxu0
        %v2875 = vadd.f32 %v2849, %v2874
        %2876 = vmatmul.f32.gmra.mxu0 %v2748
        %v2877 = vpop.f32.mrf.mxu0
        %v2878 = vadd.f32 %v2852, %v2877
        %2879 = vmatmul.f32.gmra.mxu0 %v2730
        %v2880 = vpop.f32.mrf.mxu0
        %v2881 = vadd.f32 %v2855, %v2880
        %2882 = vdwg.mxu0
        %2883 = vmatpush.msra.mxu0 %v1713
        %2884 = vmatpush.msra.mxu0 %v1712
        %2885 = vmatpush.msra.mxu0 %v1711
        %2886 = vmatpush.msra.mxu0 %v1710
        %2887 = vmatpush.msra.mxu0 %v1709
        %2888 = vmatpush.msra.mxu0 %v1708
        %2889 = vmatpush.msra.mxu0 %v1707
        %2890 = vmatpush.msra.mxu0 %v1706
        %2891 = vmatpush.msra.mxu0 %v1705
        %2892 = vmatpush.msra.mxu0 %v1704
        %2893 = vmatpush.msra.mxu0 %v1703
        %2894 = vmatpush.msra.mxu0 %v1702
        %2895 = vmatpush.msra.mxu0 %v1701
        %2896 = vmatpush.msra.mxu0 %v1700
        %2897 = vmatpush.msra.mxu0 %v1699
        %2898 = vmatpush.msra.mxu0 %v1698
        %2899 = vmatmul.f32.gmra.mxu0 %v2541
        %v2900 = vpop.f32.mrf.mxu0
        %v2901 = vadd.f32 %v2875, %v2900
        %2902 = vmatmul.f32.gmra.mxu0 %v2749
        %v2903 = vpop.f32.mrf.mxu0
        %v2904 = vadd.f32 %v2878, %v2903
        %2905 = vmatmul.f32.gmra.mxu0 %v2731
        %v2906 = vpop.f32.mrf.mxu0
        %v2907 = vadd.f32 %v2881, %v2906
        %2908 = vdwg.mxu0
        %2909 = vmatpush.msra.mxu0 0.0
        %2910 = vmatpush.msra.mxu0 0.0
        %2911 = vmatpush.msra.mxu0 0.0
        %2912 = vmatpush.msra.mxu0 0.0
        %2913 = vmatpush.msra.mxu0 %v1725
        %2914 = vmatpush.msra.mxu0 %v1724
        %2915 = vmatpush.msra.mxu0 %v1723
        %2916 = vmatpush.msra.mxu0 %v1722
        %2917 = vmatpush.msra.mxu0 %v1721
        %2918 = vmatpush.msra.mxu0 %v1720
        %2919 = vmatpush.msra.mxu0 %v1719
        %2920 = vmatpush.msra.mxu0 %v1718
        %2921 = vmatpush.msra.mxu0 %v1717
        %2922 = vmatpush.msra.mxu0 %v1716
        %2923 = vmatpush.msra.mxu0 %v1715
        %2924 = vmatpush.msra.mxu0 %v1714
        %2925 = vmatmul.f32.gmra.mxu0 %v2179
        %v2926 = vpop.f32.mrf.mxu0
        %v2927 = vadd.f32 %v2901, %v2926
        %2928 = vmatmul.f32.gmra.mxu0 %v2182
        %v2929 = vpop.f32.mrf.mxu0
        %v2930 = vadd.f32 %v2904, %v2929
        %2931 = vmatmul.f32.gmra.mxu0 %v2184
        %v2932 = vpop.f32.mrf.mxu0
        %v2933 = vadd.f32 %v2907, %v2932
        %2934 = vdwg.mxu0
        %v2935 = vmul.f32 %v2927, %v1733
        %v2936 = vmul.f32 %v2930, %v1733
        %v2937 = vmul.f32 %v2933, %v1733
        %v2938 = vadd.f32 %v2935, %v1739
        %v2939 = vadd.f32 %v2936, %v1739
        %v2940 = vadd.f32 %v2937, %v1739
        %v2941 = vmax.f32 %v2938, 0.0
        %v2942 = vmax.f32 %v2939, 0.0
        %v2943 = vmax.f32 %v2940, 0.0
        %v2946 = vrot.slane %v2941, 3
        %v2947 = vrot.slane %v2942, 3
        %v2948 = vsel %vm548, %v2946, %v2947
        %v2951 = vsel %vm548, 0.0, %v2946
        %v2952 = vsel %vm524, %v2948, 0.0
        %v2954 = vrot.slane %v2951, 1
        %v2955 = vsel %vm524, %v1758, %v2954
        %2956 = vrot.lane.b32.xlu0 %v2955, 32
        %v2957 = vpop.permute.xlu0 %2956
        %2958 = vrot.lane.b32.xlu0 %v2954, 32
        %v2959 = vpop.permute.xlu0 %2958
        %v2962 = vrot.slane %v2951, 2
        %v2963 = vsel %vm536, %v1767, %v2962
        %2964 = vrot.lane.b32.xlu0 %v2963, 64
        %v2965 = vpop.permute.xlu0 %2964
        %2966 = vrot.lane.b32.xlu0 %v2962, 64
        %v2967 = vpop.permute.xlu0 %2966
        %v2970 = vrot.slane %v2951, 3
        %v2971 = vsel %vm548, %v1776, %v2970
        %2972 = vrot.lane.b32.xlu0 %v2971, 96
        %v2973 = vpop.permute.xlu0 %2972
        %2974 = vrot.lane.b32.xlu0 %v2970, 96
        %v2975 = vpop.permute.xlu0 %2974
        %v2978 = vrot.slane %v2951, 4
        %v2979 = vsel %vm560, %v1785, %v2978
        %v2982 = vrot.slane %v2951, 5
        %v2983 = vsel %vm513, %v1790, %v2982
        %2984 = vrot.lane.b32.xlu0 %v2983, 32
        %v2985 = vpop.permute.xlu0 %2984
        %2986 = vrot.lane.b32.xlu0 %v2982, 32
        %v2987 = vpop.permute.xlu0 %2986
        %v2990 = vrot.slane %v2951, 6
        %v2991 = vsel %vm583, %v1799, %v2990
        %2992 = vrot.lane.b32.xlu0 %v2991, 64
        %v2993 = vpop.permute.xlu0 %2992
        %2994 = vrot.lane.b32.xlu0 %v2990, 64
        %v2995 = vpop.permute.xlu0 %2994
        %v2999 = vrot.slane %v2951, 7
        %v3000 = vsel %vm1809, %v1810, %v2999
        %v3001 = vrot.slane %v2952, 7
        %v3002 = vsel %vm1809, %v2999, %v3001
        %3003 = vrot.lane.b32.xlu0 %v3000, 96
        %v3004 = vpop.permute.xlu0 %3003
        %3005 = vrot.lane.b32.xlu0 %v3002, 96
        %v3006 = vpop.permute.xlu0 %3005
        %v3009 = vrot.slane %v2952, 1
        %v3010 = vsel %vm524, %v2954, %v3009
        %3011 = vrot.lane.b32.xlu0 %v3010, 32
        %v3012 = vpop.permute.xlu0 %3011
        %3013 = vrot.lane.b32.xlu0 %v3009, 32
        %v3014 = vpop.permute.xlu0 %3013
        %v3017 = vrot.slane %v2952, 2
        %v3018 = vsel %vm536, %v2962, %v3017
        %3019 = vrot.lane.b32.xlu0 %v3018, 64
        %v3020 = vpop.permute.xlu0 %3019
        %3021 = vrot.lane.b32.xlu0 %v3017, 64
        %v3022 = vpop.permute.xlu0 %3021
        %v3025 = vrot.slane %v2952, 3
        %v3026 = vsel %vm548, %v2970, %v3025
        %3027 = vrot.lane.b32.xlu0 %v3026, 96
        %v3028 = vpop.permute.xlu0 %3027
        %3029 = vrot.lane.b32.xlu0 %v3025, 96
        %v3030 = vpop.permute.xlu0 %3029
        %v3033 = vrot.slane %v2952, 4
        %v3034 = vsel %vm560, %v2978, %v3033
        %v3037 = vrot.slane %v2952, 5
        %v3038 = vsel %vm513, %v2982, %v3037
        %3039 = vrot.lane.b32.xlu0 %v3038, 32
        %v3040 = vpop.permute.xlu0 %3039
        %3041 = vrot.lane.b32.xlu0 %v3037, 32
        %v3042 = vpop.permute.xlu0 %3041
        %v3045 = vrot.slane %v2952, 6
        %v3046 = vsel %vm583, %v2990, %v3045
        %3047 = vrot.lane.b32.xlu0 %v3046, 64
        %v3048 = vpop.permute.xlu0 %3047
        %3049 = vrot.lane.b32.xlu0 %v3045, 64
        %v3050 = vpop.permute.xlu0 %3049
        %v3053 = vsel %vm1809, %v3001, %v1810
        %3054 = vrot.lane.b32.xlu0 %v3053, 96
        %v3055 = vpop.permute.xlu0 %3054
        %v3057 = vsel %vm604, 0.0, %v2957
        %v3058 = vsel %vm604, %v2951, %v2959
        %v3059 = vsel %vm1317, %v3057, %v2965
        %v3060 = vsel %vm1317, %v3058, %v2967
        %v3061 = vsel %vm1320, %v3059, %v2973
        %v3062 = vsel %vm1320, %v3060, %v2975
        %v3063 = vsel %vm604, %v2979, %v2985
        %v3064 = vsel %vm604, %v2978, %v2987
        %v3065 = vsel %vm1317, %v3063, %v2993
        %v3066 = vsel %vm1317, %v3064, %v2995
        %v3067 = vsel %vm1320, %v3065, %v3004
        %v3068 = vsel %vm1320, %v3066, %v3006
        %v3069 = vsel %vm604, %v2951, %v3012
        %v3070 = vsel %vm604, %v2952, %v3014
        %v3071 = vsel %vm1317, %v3069, %v3020
        %v3072 = vsel %vm1317, %v3070, %v3022
        %v3073 = vsel %vm1320, %v3071, %v3028
        %v3074 = vsel %vm1320, %v3072, %v3030
        %v3075 = vsel %vm604, %v3034, %v3040
        %v3076 = vsel %vm604, %v3033, %v3042
        %v3077 = vsel %vm1317, %v3075, %v3048
        %v3078 = vsel %vm1317, %v3076, %v3050
        %v3079 = vsel %vm1320, %v3077, %v3006
        %v3080 = vsel %vm1320, %v3078, %v3055
        %v3081 = vsel %vm524, %v3009, %v1758
        %3082 = vrot.lane.b32.xlu0 %v3081, 32
        %v3083 = vpop.permute.xlu0 %3082
        %v3085 = vsel %vm536, %v3017, %v1767
        %3086 = vrot.lane.b32.xlu0 %v3085, 64
        %v3087 = vpop.permute.xlu0 %3086
        %v3089 = vsel %vm548, %v3025, %v1776
        %3090 = vrot.lane.b32.xlu0 %v3089, 96
        %v3091 = vpop.permute.xlu0 %3090
        %v3093 = vsel %vm560, %v3033, %v1785
        %v3095 = vsel %vm513, %v3037, %v1790
        %3096 = vrot.lane.b32.xlu0 %v3095, 32
        %v3097 = vpop.permute.xlu0 %3096
        %v3099 = vsel %vm583, %v3045, %v1799
        %3100 = vrot.lane.b32.xlu0 %v3099, 64
        %v3101 = vpop.permute.xlu0 %3100
        %v3103 = vsel %vm604, %v2952, %v3083
        %v3104 = vsel %vm1317, %v3103, %v3087
        %v3105 = vsel %vm1320, %v3104, %v3091
        %v3106 = vsel %vm604, %v3093, %v3097
        %v3107 = vsel %vm1317, %v3106, %v3101
        %v3108 = vsel %vm1320, %v3107, %v3055
        %v3110 = vrot.slane %v2942, 5
        %v3111 = vrot.slane %v2943, 5
        %v3112 = vsel %vm513, %v3110, %v3111
        %v3115 = vsel %vm548, 0.0, %v3110
        %v3116 = vsel %vm524, %v3112, 0.0
        %v3118 = vrot.slane %v3115, 1
        %v3119 = vsel %vm524, %v1758, %v3118
        %3120 = vrot.lane.b32.xlu0 %v3119, 32
        %v3121 = vpop.permute.xlu0 %3120
        %3122 = vrot.lane.b32.xlu0 %v3118, 32
        %v3123 = vpop.permute.xlu0 %3122
        %v3126 = vrot.slane %v3115, 2
        %v3127 = vsel %vm536, %v1767, %v3126
        %3128 = vrot.lane.b32.xlu0 %v3127, 64
        %v3129 = vpop.permute.xlu0 %3128
        %3130 = vrot.lane.b32.xlu0 %v3126, 64
        %v3131 = vpop.permute.xlu0 %3130
        %v3134 = vrot.slane %v3115, 3
        %v3135 = vsel %vm548, %v1776, %v3134
        %3136 = vrot.lane.b32.xlu0 %v3135, 96
        %v3137 = vpop.permute.xlu0 %3136
        %3138 = vrot.lane.b32.xlu0 %v3134, 96
        %v3139 = vpop.permute.xlu0 %3138
        %v3142 = vrot.slane %v3115, 4
        %v3143 = vsel %vm560, %v1785, %v3142
        %v3146 = vrot.slane %v3115, 5
        %v3147 = vsel %vm513, %v1790, %v3146
        %3148 = vrot.lane.b32.xlu0 %v3147, 32
        %v3149 = vpop.permute.xlu0 %3148
        %3150 = vrot.lane.b32.xlu0 %v3146, 32
        %v3151 = vpop.permute.xlu0 %3150
        %v3154 = vrot.slane %v3115, 6
        %v3155 = vsel %vm583, %v1799, %v3154
        %3156 = vrot.lane.b32.xlu0 %v3155, 64
        %v3157 = vpop.permute.xlu0 %3156
        %3158 = vrot.lane.b32.xlu0 %v3154, 64
        %v3159 = vpop.permute.xlu0 %3158
        %v3163 = vrot.slane %v3115, 7
        %v3164 = vsel %vm1809, %v1810, %v3163
        %v3165 = vrot.slane %v3116, 7
        %v3166 = vsel %vm1809, %v3163, %v3165
        %3167 = vrot.lane.b32.xlu0 %v3164, 96
        %v3168 = vpop.permute.xlu0 %3167
        %3169 = vrot.lane.b32.xlu0 %v3166, 96
        %v3170 = vpop.permute.xlu0 %3169
        %v3173 = vrot.slane %v3116, 1
        %v3174 = vsel %vm524, %v3118, %v3173
        %3175 = vrot.lane.b32.xlu0 %v3174, 32
        %v3176 = vpop.permute.xlu0 %3175
        %3177 = vrot.lane.b32.xlu0 %v3173, 32
        %v3178 = vpop.permute.xlu0 %3177
        %v3181 = vrot.slane %v3116, 2
        %v3182 = vsel %vm536, %v3126, %v3181
        %3183 = vrot.lane.b32.xlu0 %v3182, 64
        %v3184 = vpop.permute.xlu0 %3183
        %3185 = vrot.lane.b32.xlu0 %v3181, 64
        %v3186 = vpop.permute.xlu0 %3185
        %v3189 = vrot.slane %v3116, 3
        %v3190 = vsel %vm548, %v3134, %v3189
        %3191 = vrot.lane.b32.xlu0 %v3190, 96
        %v3192 = vpop.permute.xlu0 %3191
        %3193 = vrot.lane.b32.xlu0 %v3189, 96
        %v3194 = vpop.permute.xlu0 %3193
        %v3197 = vrot.slane %v3116, 4
        %v3198 = vsel %vm560, %v3142, %v3197
        %v3201 = vrot.slane %v3116, 5
        %v3202 = vsel %vm513, %v3146, %v3201
        %3203 = vrot.lane.b32.xlu0 %v3202, 32
        %v3204 = vpop.permute.xlu0 %3203
        %3205 = vrot.lane.b32.xlu0 %v3201, 32
        %v3206 = vpop.permute.xlu0 %3205
        %v3209 = vrot.slane %v3116, 6
        %v3210 = vsel %vm583, %v3154, %v3209
        %3211 = vrot.lane.b32.xlu0 %v3210, 64
        %v3212 = vpop.permute.xlu0 %3211
        %3213 = vrot.lane.b32.xlu0 %v3209, 64
        %v3214 = vpop.permute.xlu0 %3213
        %v3217 = vsel %vm1809, %v3165, %v1810
        %3218 = vrot.lane.b32.xlu0 %v3217, 96
        %v3219 = vpop.permute.xlu0 %3218
        %v3221 = vsel %vm604, 0.0, %v3121
        %v3222 = vsel %vm604, %v3115, %v3123
        %v3223 = vsel %vm1317, %v3221, %v3129
        %v3224 = vsel %vm1317, %v3222, %v3131
        %v3225 = vsel %vm1320, %v3223, %v3137
        %v3226 = vsel %vm1320, %v3224, %v3139
        %v3227 = vsel %vm604, %v3143, %v3149
        %v3228 = vsel %vm604, %v3142, %v3151
        %v3229 = vsel %vm1317, %v3227, %v3157
        %v3230 = vsel %vm1317, %v3228, %v3159
        %v3231 = vsel %vm1320, %v3229, %v3168
        %v3232 = vsel %vm1320, %v3230, %v3170
        %v3233 = vsel %vm604, %v3115, %v3176
        %v3234 = vsel %vm604, %v3116, %v3178
        %v3235 = vsel %vm1317, %v3233, %v3184
        %v3236 = vsel %vm1317, %v3234, %v3186
        %v3237 = vsel %vm1320, %v3235, %v3192
        %v3238 = vsel %vm1320, %v3236, %v3194
        %v3239 = vsel %vm604, %v3198, %v3204
        %v3240 = vsel %vm604, %v3197, %v3206
        %v3241 = vsel %vm1317, %v3239, %v3212
        %v3242 = vsel %vm1317, %v3240, %v3214
        %v3243 = vsel %vm1320, %v3241, %v3170
        %v3244 = vsel %vm1320, %v3242, %v3219
        %v3245 = vsel %vm524, %v3173, %v1758
        %3246 = vrot.lane.b32.xlu0 %v3245, 32
        %v3247 = vpop.permute.xlu0 %3246
        %v3249 = vsel %vm536, %v3181, %v1767
        %3250 = vrot.lane.b32.xlu0 %v3249, 64
        %v3251 = vpop.permute.xlu0 %3250
        %v3253 = vsel %vm548, %v3189, %v1776
        %3254 = vrot.lane.b32.xlu0 %v3253, 96
        %v3255 = vpop.permute.xlu0 %3254
        %v3257 = vsel %vm560, %v3197, %v1785
        %v3259 = vsel %vm513, %v3201, %v1790
        %3260 = vrot.lane.b32.xlu0 %v3259, 32
        %v3261 = vpop.permute.xlu0 %3260
        %v3263 = vsel %vm583, %v3209, %v1799
        %3264 = vrot.lane.b32.xlu0 %v3263, 64
        %v3265 = vpop.permute.xlu0 %3264
        %v3267 = vsel %vm604, %v3116, %v3247
        %v3268 = vsel %vm1317, %v3267, %v3251
        %v3269 = vsel %vm1320, %v3268, %v3255
        %v3270 = vsel %vm604, %v3257, %v3261
        %v3271 = vsel %vm1317, %v3270, %v3265
        %v3272 = vsel %vm1320, %v3271, %v3219
        %v3283 = vrot.slane %v3225, 6
        %v3284 = vrot.slane %v3231, 6
        %v3285 = vrot.slane %v3237, 6
        %v3286 = vrot.slane %v3243, 6
        %v3287 = vrot.slane %v3269, 6
        %v3288 = vrot.slane %v3272, 6
        %v3289 = vrot.slane %v3226, 6
        %v3290 = vsel %vm583, %v3283, %v3289
        %v3291 = vrot.slane %v3232, 6
        %v3292 = vsel %vm583, %v3284, %v3291
        %v3293 = vrot.slane %v3238, 6
        %v3294 = vsel %vm583, %v3285, %v3293
        %v3295 = vrot.slane %v3244, 6
        %v3296 = vsel %vm583, %v3286, %v3295
        %v3297 = vsel %vm583, %v3287, %v2150
        %v3298 = vsel %vm583, %v3288, %v2152
        %v3311 = vsel %vm583, %v3062, %v3283
        %v3312 = vsel %vm583, %v3068, %v3284
        %v3313 = vsel %vm583, %v3074, %v3285
        %v3314 = vsel %vm583, %v3080, %v3286
        %v3315 = vsel %vm583, %v1948, %v3287
        %v3316 = vsel %vm583, %v1954, %v3288
        %3317 = vmatpush.msra.mxu0 %v1522
        %3318 = vmatpush.msra.mxu0 %v1521
        %3319 = vmatpush.msra.mxu0 %v1520
        %3320 = vmatpush.msra.mxu0 %v1519
        %3321 = vmatpush.msra.mxu0 %v1518
        %3322 = vmatpush.msra.mxu0 %v1517
        %3323 = vmatpush.msra.mxu0 %v1516
        %3324 = vmatpush.msra.mxu0 %v1515
        %3325 = vmatpush.msra.mxu0 %v1514
        %3326 = vmatpush.msra.mxu0 %v1513
        %3327 = vmatpush.msra.mxu0 %v1512
        %3328 = vmatpush.msra.mxu0 %v1511
        %3329 = vmatpush.msra.mxu0 %v1510
        %3330 = vmatpush.msra.mxu0 %v1509
        %3331 = vmatpush.msra.mxu0 %v1508
        %3332 = vmatpush.msra.mxu0 %v1507
        %3333 = vmatmul.f32.gmra.mxu0 %v3061
        %v3334 = vpop.f32.mrf.mxu0
        %v3335 = vadd.f32 %v2177, %v3334
        %3336 = vmatmul.f32.gmra.mxu0 %v3311
        %v3337 = vpop.f32.mrf.mxu0
        %v3338 = vadd.f32 %v2177, %v3337
        %3339 = vmatmul.f32.gmra.mxu0 %v3290
        %v3340 = vpop.f32.mrf.mxu0
        %v3341 = vadd.f32 %v2177, %v3340
        %3342 = vdwg.mxu0
        %3343 = vmatpush.msra.mxu0 %v1538
        %3344 = vmatpush.msra.mxu0 %v1537
        %3345 = vmatpush.msra.mxu0 %v1536
        %3346 = vmatpush.msra.mxu0 %v1535
        %3347 = vmatpush.msra.mxu0 %v1534
        %3348 = vmatpush.msra.mxu0 %v1533
        %3349 = vmatpush.msra.mxu0 %v1532
        %3350 = vmatpush.msra.mxu0 %v1531
        %3351 = vmatpush.msra.mxu0 %v1530
        %3352 = vmatpush.msra.mxu0 %v1529
        %3353 = vmatpush.msra.mxu0 %v1528
        %3354 = vmatpush.msra.mxu0 %v1527
        %3355 = vmatpush.msra.mxu0 %v1526
        %3356 = vmatpush.msra.mxu0 %v1525
        %3357 = vmatpush.msra.mxu0 %v1524
        %3358 = vmatpush.msra.mxu0 %v1523
        %3359 = vmatmul.f32.gmra.mxu0 %v3067
        %v3360 = vpop.f32.mrf.mxu0
        %v3361 = vadd.f32 %v3335, %v3360
        %3362 = vmatmul.f32.gmra.mxu0 %v3312
        %v3363 = vpop.f32.mrf.mxu0
        %v3364 = vadd.f32 %v3338, %v3363
        %3365 = vmatmul.f32.gmra.mxu0 %v3292
        %v3366 = vpop.f32.mrf.mxu0
        %v3367 = vadd.f32 %v3341, %v3366
        %3368 = vdwg.mxu0
        %3369 = vmatpush.msra.mxu0 %v1554
        %3370 = vmatpush.msra.mxu0 %v1553
        %3371 = vmatpush.msra.mxu0 %v1552
        %3372 = vmatpush.msra.mxu0 %v1551
        %3373 = vmatpush.msra.mxu0 %v1550
        %3374 = vmatpush.msra.mxu0 %v1549
        %3375 = vmatpush.msra.mxu0 %v1548
        %3376 = vmatpush.msra.mxu0 %v1547
        %3377 = vmatpush.msra.mxu0 %v1546
        %3378 = vmatpush.msra.mxu0 %v1545
        %3379 = vmatpush.msra.mxu0 %v1544
        %3380 = vmatpush.msra.mxu0 %v1543
        %3381 = vmatpush.msra.mxu0 %v1542
        %3382 = vmatpush.msra.mxu0 %v1541
        %3383 = vmatpush.msra.mxu0 %v1540
        %3384 = vmatpush.msra.mxu0 %v1539
        %3385 = vmatmul.f32.gmra.mxu0 %v3073
        %v3386 = vpop.f32.mrf.mxu0
        %v3387 = vadd.f32 %v3361, %v3386
        %3388 = vmatmul.f32.gmra.mxu0 %v3313
        %v3389 = vpop.f32.mrf.mxu0
        %v3390 = vadd.f32 %v3364, %v3389
        %3391 = vmatmul.f32.gmra.mxu0 %v3294
        %v3392 = vpop.f32.mrf.mxu0
        %v3393 = vadd.f32 %v3367, %v3392
        %3394 = vdwg.mxu0
        %3395 = vmatpush.msra.mxu0 %v1570
        %3396 = vmatpush.msra.mxu0 %v1569
        %3397 = vmatpush.msra.mxu0 %v1568
        %3398 = vmatpush.msra.mxu0 %v1567
        %3399 = vmatpush.msra.mxu0 %v1566
        %3400 = vmatpush.msra.mxu0 %v1565
        %3401 = vmatpush.msra.mxu0 %v1564
        %3402 = vmatpush.msra.mxu0 %v1563
        %3403 = vmatpush.msra.mxu0 %v1562
        %3404 = vmatpush.msra.mxu0 %v1561
        %3405 = vmatpush.msra.mxu0 %v1560
        %3406 = vmatpush.msra.mxu0 %v1559
        %3407 = vmatpush.msra.mxu0 %v1558
        %3408 = vmatpush.msra.mxu0 %v1557
        %3409 = vmatpush.msra.mxu0 %v1556
        %3410 = vmatpush.msra.mxu0 %v1555
        %3411 = vmatmul.f32.gmra.mxu0 %v3079
        %v3412 = vpop.f32.mrf.mxu0
        %v3413 = vadd.f32 %v3387, %v3412
        %3414 = vmatmul.f32.gmra.mxu0 %v3314
        %v3415 = vpop.f32.mrf.mxu0
        %v3416 = vadd.f32 %v3390, %v3415
        %3417 = vmatmul.f32.gmra.mxu0 %v3296
        %v3418 = vpop.f32.mrf.mxu0
        %v3419 = vadd.f32 %v3393, %v3418
        %3420 = vdwg.mxu0
        %3421 = vmatpush.msra.mxu0 %v1586
        %3422 = vmatpush.msra.mxu0 %v1585
        %3423 = vmatpush.msra.mxu0 %v1584
        %3424 = vmatpush.msra.mxu0 %v1583
        %3425 = vmatpush.msra.mxu0 %v1582
        %3426 = vmatpush.msra.mxu0 %v1581
        %3427 = vmatpush.msra.mxu0 %v1580
        %3428 = vmatpush.msra.mxu0 %v1579
        %3429 = vmatpush.msra.mxu0 %v1578
        %3430 = vmatpush.msra.mxu0 %v1577
        %3431 = vmatpush.msra.mxu0 %v1576
        %3432 = vmatpush.msra.mxu0 %v1575
        %3433 = vmatpush.msra.mxu0 %v1574
        %3434 = vmatpush.msra.mxu0 %v1573
        %3435 = vmatpush.msra.mxu0 %v1572
        %3436 = vmatpush.msra.mxu0 %v1571
        %3437 = vmatmul.f32.gmra.mxu0 %v3105
        %v3438 = vpop.f32.mrf.mxu0
        %v3439 = vadd.f32 %v3413, %v3438
        %3440 = vmatmul.f32.gmra.mxu0 %v3315
        %v3441 = vpop.f32.mrf.mxu0
        %v3442 = vadd.f32 %v3416, %v3441
        %3443 = vmatmul.f32.gmra.mxu0 %v3297
        %v3444 = vpop.f32.mrf.mxu0
        %v3445 = vadd.f32 %v3419, %v3444
        %3446 = vdwg.mxu0
        %3447 = vmatpush.msra.mxu0 %v1602
        %3448 = vmatpush.msra.mxu0 %v1601
        %3449 = vmatpush.msra.mxu0 %v1600
        %3450 = vmatpush.msra.mxu0 %v1599
        %3451 = vmatpush.msra.mxu0 %v1598
        %3452 = vmatpush.msra.mxu0 %v1597
        %3453 = vmatpush.msra.mxu0 %v1596
        %3454 = vmatpush.msra.mxu0 %v1595
        %3455 = vmatpush.msra.mxu0 %v1594
        %3456 = vmatpush.msra.mxu0 %v1593
        %3457 = vmatpush.msra.mxu0 %v1592
        %3458 = vmatpush.msra.mxu0 %v1591
        %3459 = vmatpush.msra.mxu0 %v1590
        %3460 = vmatpush.msra.mxu0 %v1589
        %3461 = vmatpush.msra.mxu0 %v1588
        %3462 = vmatpush.msra.mxu0 %v1587
        %3463 = vmatmul.f32.gmra.mxu0 %v3108
        %v3464 = vpop.f32.mrf.mxu0
        %v3465 = vadd.f32 %v3439, %v3464
        %3466 = vmatmul.f32.gmra.mxu0 %v3316
        %v3467 = vpop.f32.mrf.mxu0
        %v3468 = vadd.f32 %v3442, %v3467
        %3469 = vmatmul.f32.gmra.mxu0 %v3298
        %v3470 = vpop.f32.mrf.mxu0
        %v3471 = vadd.f32 %v3445, %v3470
        %3472 = vdwg.mxu0
        %3473 = vmatpush.msra.mxu0 0.0
        %3474 = vmatpush.msra.mxu0 0.0
        %3475 = vmatpush.msra.mxu0 0.0
        %3476 = vmatpush.msra.mxu0 0.0
        %3477 = vmatpush.msra.mxu0 %v1614
        %3478 = vmatpush.msra.mxu0 %v1613
        %3479 = vmatpush.msra.mxu0 %v1612
        %3480 = vmatpush.msra.mxu0 %v1611
        %3481 = vmatpush.msra.mxu0 %v1610
        %3482 = vmatpush.msra.mxu0 %v1609
        %3483 = vmatpush.msra.mxu0 %v1608
        %3484 = vmatpush.msra.mxu0 %v1607
        %3485 = vmatpush.msra.mxu0 %v1606
        %3486 = vmatpush.msra.mxu0 %v1605
        %3487 = vmatpush.msra.mxu0 %v1604
        %3488 = vmatpush.msra.mxu0 %v1603
        %3489 = vmatmul.f32.gmra.mxu0 %v2179
        %v3490 = vpop.f32.mrf.mxu0
        %v3491 = vadd.f32 %v3465, %v3490
        %3492 = vmatmul.f32.gmra.mxu0 %v2182
        %v3493 = vpop.f32.mrf.mxu0
        %v3494 = vadd.f32 %v3468, %v3493
        %3495 = vmatmul.f32.gmra.mxu0 %v2184
        %v3496 = vpop.f32.mrf.mxu0
        %v3497 = vadd.f32 %v3471, %v3496
        %3498 = vdwg.mxu0
        %v3499 = vmul.f32 %v3491, %v1733
        %v3500 = vmul.f32 %v3494, %v1733
        %v3501 = vmul.f32 %v3497, %v1733
        %v3502 = vadd.f32 %v3499, %v1739
        %v3503 = vadd.f32 %v3500, %v1739
        %v3504 = vadd.f32 %v3501, %v1739
        %v3505 = vmax.f32 %v3502, 0.0
        %v3506 = vmax.f32 %v3503, 0.0
        %v3507 = vmax.f32 %v3504, 0.0
        %v3510 = vrot.slane %v3505, 3
        %v3511 = vrot.slane %v3506, 3
        %v3512 = vsel %vm548, %v3510, %v3511
        %v3515 = vsel %vm548, 0.0, %v3510
        %v3516 = vsel %vm524, %v3512, 0.0
        %v3518 = vrot.slane %v3515, 1
        %v3519 = vsel %vm524, %v1758, %v3518
        %3520 = vrot.lane.b32.xlu0 %v3519, 32
        %v3521 = vpop.permute.xlu0 %3520
        %3522 = vrot.lane.b32.xlu0 %v3518, 32
        %v3523 = vpop.permute.xlu0 %3522
        %v3526 = vrot.slane %v3515, 2
        %v3527 = vsel %vm536, %v1767, %v3526
        %3528 = vrot.lane.b32.xlu0 %v3527, 64
        %v3529 = vpop.permute.xlu0 %3528
        %3530 = vrot.lane.b32.xlu0 %v3526, 64
        %v3531 = vpop.permute.xlu0 %3530
        %v3534 = vrot.slane %v3515, 3
        %v3535 = vsel %vm548, %v1776, %v3534
        %3536 = vrot.lane.b32.xlu0 %v3535, 96
        %v3537 = vpop.permute.xlu0 %3536
        %3538 = vrot.lane.b32.xlu0 %v3534, 96
        %v3539 = vpop.permute.xlu0 %3538
        %v3542 = vrot.slane %v3515, 4
        %v3543 = vsel %vm560, %v1785, %v3542
        %v3546 = vrot.slane %v3515, 5
        %v3547 = vsel %vm513, %v1790, %v3546
        %3548 = vrot.lane.b32.xlu0 %v3547, 32
        %v3549 = vpop.permute.xlu0 %3548
        %3550 = vrot.lane.b32.xlu0 %v3546, 32
        %v3551 = vpop.permute.xlu0 %3550
        %v3554 = vrot.slane %v3515, 6
        %v3555 = vsel %vm583, %v1799, %v3554
        %3556 = vrot.lane.b32.xlu0 %v3555, 64
        %v3557 = vpop.permute.xlu0 %3556
        %3558 = vrot.lane.b32.xlu0 %v3554, 64
        %v3559 = vpop.permute.xlu0 %3558
        %v3563 = vrot.slane %v3515, 7
        %v3564 = vsel %vm1809, %v1810, %v3563
        %v3565 = vrot.slane %v3516, 7
        %v3566 = vsel %vm1809, %v3563, %v3565
        %3567 = vrot.lane.b32.xlu0 %v3564, 96
        %v3568 = vpop.permute.xlu0 %3567
        %3569 = vrot.lane.b32.xlu0 %v3566, 96
        %v3570 = vpop.permute.xlu0 %3569
        %v3573 = vrot.slane %v3516, 1
        %v3574 = vsel %vm524, %v3518, %v3573
        %3575 = vrot.lane.b32.xlu0 %v3574, 32
        %v3576 = vpop.permute.xlu0 %3575
        %3577 = vrot.lane.b32.xlu0 %v3573, 32
        %v3578 = vpop.permute.xlu0 %3577
        %v3581 = vrot.slane %v3516, 2
        %v3582 = vsel %vm536, %v3526, %v3581
        %3583 = vrot.lane.b32.xlu0 %v3582, 64
        %v3584 = vpop.permute.xlu0 %3583
        %3585 = vrot.lane.b32.xlu0 %v3581, 64
        %v3586 = vpop.permute.xlu0 %3585
        %v3589 = vrot.slane %v3516, 3
        %v3590 = vsel %vm548, %v3534, %v3589
        %3591 = vrot.lane.b32.xlu0 %v3590, 96
        %v3592 = vpop.permute.xlu0 %3591
        %3593 = vrot.lane.b32.xlu0 %v3589, 96
        %v3594 = vpop.permute.xlu0 %3593
        %v3597 = vrot.slane %v3516, 4
        %v3598 = vsel %vm560, %v3542, %v3597
        %v3601 = vrot.slane %v3516, 5
        %v3602 = vsel %vm513, %v3546, %v3601
        %3603 = vrot.lane.b32.xlu0 %v3602, 32
        %v3604 = vpop.permute.xlu0 %3603
        %3605 = vrot.lane.b32.xlu0 %v3601, 32
        %v3606 = vpop.permute.xlu0 %3605
        %v3609 = vrot.slane %v3516, 6
        %v3610 = vsel %vm583, %v3554, %v3609
        %3611 = vrot.lane.b32.xlu0 %v3610, 64
        %v3612 = vpop.permute.xlu0 %3611
        %3613 = vrot.lane.b32.xlu0 %v3609, 64
        %v3614 = vpop.permute.xlu0 %3613
        %v3617 = vsel %vm1809, %v3565, %v1810
        %3618 = vrot.lane.b32.xlu0 %v3617, 96
        %v3619 = vpop.permute.xlu0 %3618
        %v3621 = vsel %vm604, 0.0, %v3521
        %v3622 = vsel %vm604, %v3515, %v3523
        %v3623 = vsel %vm1317, %v3621, %v3529
        %v3624 = vsel %vm1317, %v3622, %v3531
        %v3625 = vsel %vm1320, %v3623, %v3537
        %v3626 = vsel %vm1320, %v3624, %v3539
        %v3627 = vsel %vm604, %v3543, %v3549
        %v3628 = vsel %vm604, %v3542, %v3551
        %v3629 = vsel %vm1317, %v3627, %v3557
        %v3630 = vsel %vm1317, %v3628, %v3559
        %v3631 = vsel %vm1320, %v3629, %v3568
        %v3632 = vsel %vm1320, %v3630, %v3570
        %v3633 = vsel %vm604, %v3515, %v3576
        %v3634 = vsel %vm604, %v3516, %v3578
        %v3635 = vsel %vm1317, %v3633, %v3584
        %v3636 = vsel %vm1317, %v3634, %v3586
        %v3637 = vsel %vm1320, %v3635, %v3592
        %v3638 = vsel %vm1320, %v3636, %v3594
        %v3639 = vsel %vm604, %v3598, %v3604
        %v3640 = vsel %vm604, %v3597, %v3606
        %v3641 = vsel %vm1317, %v3639, %v3612
        %v3642 = vsel %vm1317, %v3640, %v3614
        %v3643 = vsel %vm1320, %v3641, %v3570
        %v3644 = vsel %vm1320, %v3642, %v3619
        %v3645 = vsel %vm524, %v3573, %v1758
        %3646 = vrot.lane.b32.xlu0 %v3645, 32
        %v3647 = vpop.permute.xlu0 %3646
        %v3649 = vsel %vm536, %v3581, %v1767
        %3650 = vrot.lane.b32.xlu0 %v3649, 64
        %v3651 = vpop.permute.xlu0 %3650
        %v3653 = vsel %vm548, %v3589, %v1776
        %3654 = vrot.lane.b32.xlu0 %v3653, 96
        %v3655 = vpop.permute.xlu0 %3654
        %v3657 = vsel %vm560, %v3597, %v1785
        %v3659 = vsel %vm513, %v3601, %v1790
        %3660 = vrot.lane.b32.xlu0 %v3659, 32
        %v3661 = vpop.permute.xlu0 %3660
        %v3663 = vsel %vm583, %v3609, %v1799
        %3664 = vrot.lane.b32.xlu0 %v3663, 64
        %v3665 = vpop.permute.xlu0 %3664
        %v3667 = vsel %vm604, %v3516, %v3647
        %v3668 = vsel %vm1317, %v3667, %v3651
        %v3669 = vsel %vm1320, %v3668, %v3655
        %v3670 = vsel %vm604, %v3657, %v3661
        %v3671 = vsel %vm1317, %v3670, %v3665
        %v3672 = vsel %vm1320, %v3671, %v3619
        %v3674 = vrot.slane %v3506, 5
        %v3675 = vrot.slane %v3507, 5
        %v3676 = vsel %vm513, %v3674, %v3675
        %v3679 = vsel %vm548, 0.0, %v3674
        %v3680 = vsel %vm524, %v3676, 0.0
        %v3682 = vrot.slane %v3679, 1
        %v3683 = vsel %vm524, %v1758, %v3682
        %3684 = vrot.lane.b32.xlu0 %v3683, 32
        %v3685 = vpop.permute.xlu0 %3684
        %3686 = vrot.lane.b32.xlu0 %v3682, 32
        %v3687 = vpop.permute.xlu0 %3686
        %v3690 = vrot.slane %v3679, 2
        %v3691 = vsel %vm536, %v1767, %v3690
        %3692 = vrot.lane.b32.xlu0 %v3691, 64
        %v3693 = vpop.permute.xlu0 %3692
        %3694 = vrot.lane.b32.xlu0 %v3690, 64
        %v3695 = vpop.permute.xlu0 %3694
        %v3698 = vrot.slane %v3679, 3
        %v3699 = vsel %vm548, %v1776, %v3698
        %3700 = vrot.lane.b32.xlu0 %v3699, 96
        %v3701 = vpop.permute.xlu0 %3700
        %3702 = vrot.lane.b32.xlu0 %v3698, 96
        %v3703 = vpop.permute.xlu0 %3702
        %v3706 = vrot.slane %v3679, 4
        %v3707 = vsel %vm560, %v1785, %v3706
        %v3710 = vrot.slane %v3679, 5
        %v3711 = vsel %vm513, %v1790, %v3710
        %3712 = vrot.lane.b32.xlu0 %v3711, 32
        %v3713 = vpop.permute.xlu0 %3712
        %3714 = vrot.lane.b32.xlu0 %v3710, 32
        %v3715 = vpop.permute.xlu0 %3714
        %v3718 = vrot.slane %v3679, 6
        %v3719 = vsel %vm583, %v1799, %v3718
        %3720 = vrot.lane.b32.xlu0 %v3719, 64
        %v3721 = vpop.permute.xlu0 %3720
        %3722 = vrot.lane.b32.xlu0 %v3718, 64
        %v3723 = vpop.permute.xlu0 %3722
        %v3727 = vrot.slane %v3679, 7
        %v3728 = vsel %vm1809, %v1810, %v3727
        %v3729 = vrot.slane %v3680, 7
        %v3730 = vsel %vm1809, %v3727, %v3729
        %3731 = vrot.lane.b32.xlu0 %v3728, 96
        %v3732 = vpop.permute.xlu0 %3731
        %3733 = vrot.lane.b32.xlu0 %v3730, 96
        %v3734 = vpop.permute.xlu0 %3733
        %v3737 = vrot.slane %v3680, 1
        %v3738 = vsel %vm524, %v3682, %v3737
        %3739 = vrot.lane.b32.xlu0 %v3738, 32
        %v3740 = vpop.permute.xlu0 %3739
        %3741 = vrot.lane.b32.xlu0 %v3737, 32
        %v3742 = vpop.permute.xlu0 %3741
        %v3745 = vrot.slane %v3680, 2
        %v3746 = vsel %vm536, %v3690, %v3745
        %3747 = vrot.lane.b32.xlu0 %v3746, 64
        %v3748 = vpop.permute.xlu0 %3747
        %3749 = vrot.lane.b32.xlu0 %v3745, 64
        %v3750 = vpop.permute.xlu0 %3749
        %v3753 = vrot.slane %v3680, 3
        %v3754 = vsel %vm548, %v3698, %v3753
        %3755 = vrot.lane.b32.xlu0 %v3754, 96
        %v3756 = vpop.permute.xlu0 %3755
        %3757 = vrot.lane.b32.xlu0 %v3753, 96
        %v3758 = vpop.permute.xlu0 %3757
        %v3761 = vrot.slane %v3680, 4
        %v3762 = vsel %vm560, %v3706, %v3761
        %v3765 = vrot.slane %v3680, 5
        %v3766 = vsel %vm513, %v3710, %v3765
        %3767 = vrot.lane.b32.xlu0 %v3766, 32
        %v3768 = vpop.permute.xlu0 %3767
        %3769 = vrot.lane.b32.xlu0 %v3765, 32
        %v3770 = vpop.permute.xlu0 %3769
        %v3773 = vrot.slane %v3680, 6
        %v3774 = vsel %vm583, %v3718, %v3773
        %3775 = vrot.lane.b32.xlu0 %v3774, 64
        %v3776 = vpop.permute.xlu0 %3775
        %3777 = vrot.lane.b32.xlu0 %v3773, 64
        %v3778 = vpop.permute.xlu0 %3777
        %v3781 = vsel %vm1809, %v3729, %v1810
        %3782 = vrot.lane.b32.xlu0 %v3781, 96
        %v3783 = vpop.permute.xlu0 %3782
        %v3785 = vsel %vm604, 0.0, %v3685
        %v3786 = vsel %vm604, %v3679, %v3687
        %v3787 = vsel %vm1317, %v3785, %v3693
        %v3788 = vsel %vm1317, %v3786, %v3695
        %v3789 = vsel %vm1320, %v3787, %v3701
        %v3790 = vsel %vm1320, %v3788, %v3703
        %v3791 = vsel %vm604, %v3707, %v3713
        %v3792 = vsel %vm604, %v3706, %v3715
        %v3793 = vsel %vm1317, %v3791, %v3721
        %v3794 = vsel %vm1317, %v3792, %v3723
        %v3795 = vsel %vm1320, %v3793, %v3732
        %v3796 = vsel %vm1320, %v3794, %v3734
        %v3797 = vsel %vm604, %v3679, %v3740
        %v3798 = vsel %vm604, %v3680, %v3742
        %v3799 = vsel %vm1317, %v3797, %v3748
        %v3800 = vsel %vm1317, %v3798, %v3750
        %v3801 = vsel %vm1320, %v3799, %v3756
        %v3802 = vsel %vm1320, %v3800, %v3758
        %v3803 = vsel %vm604, %v3762, %v3768
        %v3804 = vsel %vm604, %v3761, %v3770
        %v3805 = vsel %vm1317, %v3803, %v3776
        %v3806 = vsel %vm1317, %v3804, %v3778
        %v3807 = vsel %vm1320, %v3805, %v3734
        %v3808 = vsel %vm1320, %v3806, %v3783
        %v3809 = vsel %vm524, %v3737, %v1758
        %3810 = vrot.lane.b32.xlu0 %v3809, 32
        %v3811 = vpop.permute.xlu0 %3810
        %v3813 = vsel %vm536, %v3745, %v1767
        %3814 = vrot.lane.b32.xlu0 %v3813, 64
        %v3815 = vpop.permute.xlu0 %3814
        %v3817 = vsel %vm548, %v3753, %v1776
        %3818 = vrot.lane.b32.xlu0 %v3817, 96
        %v3819 = vpop.permute.xlu0 %3818
        %v3821 = vsel %vm560, %v3761, %v1785
        %v3823 = vsel %vm513, %v3765, %v1790
        %3824 = vrot.lane.b32.xlu0 %v3823, 32
        %v3825 = vpop.permute.xlu0 %3824
        %v3827 = vsel %vm583, %v3773, %v1799
        %3828 = vrot.lane.b32.xlu0 %v3827, 64
        %v3829 = vpop.permute.xlu0 %3828
        %v3831 = vsel %vm604, %v3680, %v3811
        %v3832 = vsel %vm1317, %v3831, %v3815
        %v3833 = vsel %vm1320, %v3832, %v3819
        %v3834 = vsel %vm604, %v3821, %v3825
        %v3835 = vsel %vm1317, %v3834, %v3829
        %v3836 = vsel %vm1320, %v3835, %v3783
        %v3847 = vrot.slane %v3789, 6
        %v3848 = vrot.slane %v3795, 6
        %v3849 = vrot.slane %v3801, 6
        %v3850 = vrot.slane %v3807, 6
        %v3851 = vrot.slane %v3833, 6
        %v3852 = vrot.slane %v3836, 6
        %v3853 = vrot.slane %v3790, 6
        %v3854 = vsel %vm583, %v3847, %v3853
        %v3855 = vrot.slane %v3796, 6
        %v3856 = vsel %vm583, %v3848, %v3855
        %v3857 = vrot.slane %v3802, 6
        %v3858 = vsel %vm583, %v3849, %v3857
        %v3859 = vrot.slane %v3808, 6
        %v3860 = vsel %vm583, %v3850, %v3859
        %v3861 = vsel %vm583, %v3851, %v2150
        %v3862 = vsel %vm583, %v3852, %v2152
        %v3875 = vsel %vm583, %v3626, %v3847
        %v3876 = vsel %vm583, %v3632, %v3848
        %v3877 = vsel %vm583, %v3638, %v3849
        %v3878 = vsel %vm583, %v3644, %v3850
        %v3879 = vsel %vm583, %v1948, %v3851
        %v3880 = vsel %vm583, %v1954, %v3852
        %3881 = vmatpush.msra.mxu0 %v1633
        %3882 = vmatpush.msra.mxu0 %v1632
        %3883 = vmatpush.msra.mxu0 %v1631
        %3884 = vmatpush.msra.mxu0 %v1630
        %3885 = vmatpush.msra.mxu0 %v1629
        %3886 = vmatpush.msra.mxu0 %v1628
        %3887 = vmatpush.msra.mxu0 %v1627
        %3888 = vmatpush.msra.mxu0 %v1626
        %3889 = vmatpush.msra.mxu0 %v1625
        %3890 = vmatpush.msra.mxu0 %v1624
        %3891 = vmatpush.msra.mxu0 %v1623
        %3892 = vmatpush.msra.mxu0 %v1622
        %3893 = vmatpush.msra.mxu0 %v1621
        %3894 = vmatpush.msra.mxu0 %v1620
        %3895 = vmatpush.msra.mxu0 %v1619
        %3896 = vmatpush.msra.mxu0 %v1618
        %3897 = vmatmul.f32.gmra.mxu0 %v3625
        %v3898 = vpop.f32.mrf.mxu0
        %v3899 = vadd.f32 %v2751, %v3898
        %3900 = vmatmul.f32.gmra.mxu0 %v3875
        %v3901 = vpop.f32.mrf.mxu0
        %v3902 = vadd.f32 %v2751, %v3901
        %3903 = vmatmul.f32.gmra.mxu0 %v3854
        %v3904 = vpop.f32.mrf.mxu0
        %v3905 = vadd.f32 %v2751, %v3904
        %3906 = vdwg.mxu0
        %3907 = vmatpush.msra.mxu0 %v1649
        %3908 = vmatpush.msra.mxu0 %v1648
        %3909 = vmatpush.msra.mxu0 %v1647
        %3910 = vmatpush.msra.mxu0 %v1646
        %3911 = vmatpush.msra.mxu0 %v1645
        %3912 = vmatpush.msra.mxu0 %v1644
        %3913 = vmatpush.msra.mxu0 %v1643
        %3914 = vmatpush.msra.mxu0 %v1642
        %3915 = vmatpush.msra.mxu0 %v1641
        %3916 = vmatpush.msra.mxu0 %v1640
        %3917 = vmatpush.msra.mxu0 %v1639
        %3918 = vmatpush.msra.mxu0 %v1638
        %3919 = vmatpush.msra.mxu0 %v1637
        %3920 = vmatpush.msra.mxu0 %v1636
        %3921 = vmatpush.msra.mxu0 %v1635
        %3922 = vmatpush.msra.mxu0 %v1634
        %3923 = vmatmul.f32.gmra.mxu0 %v3631
        %v3924 = vpop.f32.mrf.mxu0
        %v3925 = vadd.f32 %v3899, %v3924
        %3926 = vmatmul.f32.gmra.mxu0 %v3876
        %v3927 = vpop.f32.mrf.mxu0
        %v3928 = vadd.f32 %v3902, %v3927
        %3929 = vmatmul.f32.gmra.mxu0 %v3856
        %v3930 = vpop.f32.mrf.mxu0
        %v3931 = vadd.f32 %v3905, %v3930
        %3932 = vdwg.mxu0
        %3933 = vmatpush.msra.mxu0 %v1665
        %3934 = vmatpush.msra.mxu0 %v1664
        %3935 = vmatpush.msra.mxu0 %v1663
        %3936 = vmatpush.msra.mxu0 %v1662
        %3937 = vmatpush.msra.mxu0 %v1661
        %3938 = vmatpush.msra.mxu0 %v1660
        %3939 = vmatpush.msra.mxu0 %v1659
        %3940 = vmatpush.msra.mxu0 %v1658
        %3941 = vmatpush.msra.mxu0 %v1657
        %3942 = vmatpush.msra.mxu0 %v1656
        %3943 = vmatpush.msra.mxu0 %v1655
        %3944 = vmatpush.msra.mxu0 %v1654
        %3945 = vmatpush.msra.mxu0 %v1653
        %3946 = vmatpush.msra.mxu0 %v1652
        %3947 = vmatpush.msra.mxu0 %v1651
        %3948 = vmatpush.msra.mxu0 %v1650
        %3949 = vmatmul.f32.gmra.mxu0 %v3637
        %v3950 = vpop.f32.mrf.mxu0
        %v3951 = vadd.f32 %v3925, %v3950
        %3952 = vmatmul.f32.gmra.mxu0 %v3877
        %v3953 = vpop.f32.mrf.mxu0
        %v3954 = vadd.f32 %v3928, %v3953
        %3955 = vmatmul.f32.gmra.mxu0 %v3858
        %v3956 = vpop.f32.mrf.mxu0
        %v3957 = vadd.f32 %v3931, %v3956
        %3958 = vdwg.mxu0
        %3959 = vmatpush.msra.mxu0 %v1681
        %3960 = vmatpush.msra.mxu0 %v1680
        %3961 = vmatpush.msra.mxu0 %v1679
        %3962 = vmatpush.msra.mxu0 %v1678
        %3963 = vmatpush.msra.mxu0 %v1677
        %3964 = vmatpush.msra.mxu0 %v1676
        %3965 = vmatpush.msra.mxu0 %v1675
        %3966 = vmatpush.msra.mxu0 %v1674
        %3967 = vmatpush.msra.mxu0 %v1673
        %3968 = vmatpush.msra.mxu0 %v1672
        %3969 = vmatpush.msra.mxu0 %v1671
        %3970 = vmatpush.msra.mxu0 %v1670
        %3971 = vmatpush.msra.mxu0 %v1669
        %3972 = vmatpush.msra.mxu0 %v1668
        %3973 = vmatpush.msra.mxu0 %v1667
        %3974 = vmatpush.msra.mxu0 %v1666
        %3975 = vmatmul.f32.gmra.mxu0 %v3643
        %v3976 = vpop.f32.mrf.mxu0
        %v3977 = vadd.f32 %v3951, %v3976
        %3978 = vmatmul.f32.gmra.mxu0 %v3878
        %v3979 = vpop.f32.mrf.mxu0
        %v3980 = vadd.f32 %v3954, %v3979
        %3981 = vmatmul.f32.gmra.mxu0 %v3860
        %v3982 = vpop.f32.mrf.mxu0
        %v3983 = vadd.f32 %v3957, %v3982
        %3984 = vdwg.mxu0
        %3985 = vmatpush.msra.mxu0 %v1697
        %3986 = vmatpush.msra.mxu0 %v1696
        %3987 = vmatpush.msra.mxu0 %v1695
        %3988 = vmatpush.msra.mxu0 %v1694
        %3989 = vmatpush.msra.mxu0 %v1693
        %3990 = vmatpush.msra.mxu0 %v1692
        %3991 = vmatpush.msra.mxu0 %v1691
        %3992 = vmatpush.msra.mxu0 %v1690
        %3993 = vmatpush.msra.mxu0 %v1689
        %3994 = vmatpush.msra.mxu0 %v1688
        %3995 = vmatpush.msra.mxu0 %v1687
        %3996 = vmatpush.msra.mxu0 %v1686
        %3997 = vmatpush.msra.mxu0 %v1685
        %3998 = vmatpush.msra.mxu0 %v1684
        %3999 = vmatpush.msra.mxu0 %v1683
        %4000 = vmatpush.msra.mxu0 %v1682
        %4001 = vmatmul.f32.gmra.mxu0 %v3669
        %v4002 = vpop.f32.mrf.mxu0
        %v4003 = vadd.f32 %v3977, %v4002
        %4004 = vmatmul.f32.gmra.mxu0 %v3879
        %v4005 = vpop.f32.mrf.mxu0
        %v4006 = vadd.f32 %v3980, %v4005
        %4007 = vmatmul.f32.gmra.mxu0 %v3861
        %v4008 = vpop.f32.mrf.mxu0
        %v4009 = vadd.f32 %v3983, %v4008
        %4010 = vdwg.mxu0
        %4011 = vmatpush.msra.mxu0 %v1713
        %4012 = vmatpush.msra.mxu0 %v1712
        %4013 = vmatpush.msra.mxu0 %v1711
        %4014 = vmatpush.msra.mxu0 %v1710
        %4015 = vmatpush.msra.mxu0 %v1709
        %4016 = vmatpush.msra.mxu0 %v1708
        %4017 = vmatpush.msra.mxu0 %v1707
        %4018 = vmatpush.msra.mxu0 %v1706
        %4019 = vmatpush.msra.mxu0 %v1705
        %4020 = vmatpush.msra.mxu0 %v1704
        %4021 = vmatpush.msra.mxu0 %v1703
        %4022 = vmatpush.msra.mxu0 %v1702
        %4023 = vmatpush.msra.mxu0 %v1701
        %4024 = vmatpush.msra.mxu0 %v1700
        %4025 = vmatpush.msra.mxu0 %v1699
        %4026 = vmatpush.msra.mxu0 %v1698
        %4027 = vmatmul.f32.gmra.mxu0 %v3672
        %v4028 = vpop.f32.mrf.mxu0
        %v4029 = vadd.f32 %v4003, %v4028
        %4030 = vmatmul.f32.gmra.mxu0 %v3880
        %v4031 = vpop.f32.mrf.mxu0
        %v4032 = vadd.f32 %v4006, %v4031
        %4033 = vmatmul.f32.gmra.mxu0 %v3862
        %v4034 = vpop.f32.mrf.mxu0
        %v4035 = vadd.f32 %v4009, %v4034
        %4036 = vdwg.mxu0
        %4037 = vmatpush.msra.mxu0 0.0
        %4038 = vmatpush.msra.mxu0 0.0
        %4039 = vmatpush.msra.mxu0 0.0
        %4040 = vmatpush.msra.mxu0 0.0
        %4041 = vmatpush.msra.mxu0 %v1725
        %4042 = vmatpush.msra.mxu0 %v1724
        %4043 = vmatpush.msra.mxu0 %v1723
        %4044 = vmatpush.msra.mxu0 %v1722
        %4045 = vmatpush.msra.mxu0 %v1721
        %4046 = vmatpush.msra.mxu0 %v1720
        %4047 = vmatpush.msra.mxu0 %v1719
        %4048 = vmatpush.msra.mxu0 %v1718
        %4049 = vmatpush.msra.mxu0 %v1717
        %4050 = vmatpush.msra.mxu0 %v1716
        %4051 = vmatpush.msra.mxu0 %v1715
        %4052 = vmatpush.msra.mxu0 %v1714
        %4053 = vmatmul.f32.gmra.mxu0 %v2179
        %v4054 = vpop.f32.mrf.mxu0
        %v4055 = vadd.f32 %v4029, %v4054
        %4056 = vmatmul.f32.gmra.mxu0 %v2182
        %v4057 = vpop.f32.mrf.mxu0
        %v4058 = vadd.f32 %v4032, %v4057
        %4059 = vmatmul.f32.gmra.mxu0 %v2184
        %v4060 = vpop.f32.mrf.mxu0
        %v4061 = vadd.f32 %v4035, %v4060
        %4062 = vdwg.mxu0
        %v4063 = vmul.f32 %v4055, 0.3
        %v4064 = vmul.f32 %v4058, 0.3
        %v4065 = vmul.f32 %v4061, 0.3
        %v4066 = vadd.f32 %v1502, %v4063
        %v4067 = vadd.f32 %v1503, %v4064
        %v4068 = vadd.f32 %v1504, %v4065
      $region69: #{predict_forward.2} parent=63 // loop_footer
        %s1501 = sadd.s32 1, %s1497
      $region70: #{predict_forward.2} parent=63 // loop_footer_branch
        %1496 = sbr.rel target = $region66
      $region71: #{predict_forward.2} parent=63 // loop_exit
        _
      %v4070 = vrot.slane %v1502, 1
      %4071 = vrot.lane.b32.xlu0 %v4070, 32
      %v4072 = vpop.permute.xlu0 %4071
      %v4074 = vrot.slane %v1502, 2
      %4075 = vrot.lane.b32.xlu0 %v4074, 64
      %v4076 = vpop.permute.xlu0 %4075
      %v4078 = vrot.slane %v1502, 3
      %4079 = vrot.lane.b32.xlu0 %v4078, 96
      %v4080 = vpop.permute.xlu0 %4079
      %v4082 = vrot.slane %v1502, 4
      %v4084 = vrot.slane %v1502, 5
      %4085 = vrot.lane.b32.xlu0 %v4084, 32
      %v4086 = vpop.permute.xlu0 %4085
      %v4088 = vrot.slane %v1502, 6
      %4089 = vrot.lane.b32.xlu0 %v4088, 64
      %v4090 = vpop.permute.xlu0 %4089
      %v4092 = vrot.slane %v1502, 7
      %4093 = vrot.lane.b32.xlu0 %v4092, 96
      %v4094 = vpop.permute.xlu0 %4093
      %v4097 = vrot.slane %v1503, 1
      %4098 = vrot.lane.b32.xlu0 %v4097, 32
      %v4099 = vpop.permute.xlu0 %4098
      %v4101 = vsel %vm604, %v1502, %v4072
      %v4102 = vsel %vm1317, %v4101, %v4076
      %v4103 = vsel %vm1320, %v4102, %v4080
      %v4104 = vsel %vm604, %v4082, %v4086
      %v4105 = vsel %vm1317, %v4104, %v4090
      %v4106 = vsel %vm1320, %v4105, %v4094
      %v4107 = vsel %vm604, %v1503, %v4099
      %v4108 = vrot.slane %v1503, 2
      %4109 = vrot.lane.b32.xlu0 %v4108, 64
      %v4110 = vpop.permute.xlu0 %4109
      %v4112 = vrot.slane %v1503, 3
      %4113 = vrot.lane.b32.xlu0 %v4112, 96
      %v4114 = vpop.permute.xlu0 %4113
      %v4116 = vrot.slane %v1503, 4
      %v4118 = vrot.slane %v1503, 5
      %4119 = vrot.lane.b32.xlu0 %v4118, 32
      %v4120 = vpop.permute.xlu0 %4119
      %v4123 = vrot.slane %v1504, 6
      %4124 = vrot.lane.b32.xlu0 %v4123, 64
      %v4125 = vpop.permute.xlu0 %4124
      %v4127 = vrot.slane %v1504, 7
      %4128 = vrot.lane.b32.xlu0 %v4127, 96
      %v4129 = vpop.permute.xlu0 %4128
      %v4131 = vrot.slane %v1504, 1
      %4132 = vrot.lane.b32.xlu0 %v4131, 32
      %v4133 = vpop.permute.xlu0 %4132
      %v4135 = vsel %vm1317, %v4107, %v4110
      %v4136 = vsel %vm1320, %v4135, %v4114
      %v4137 = vsel %vm604, %v4116, %v4120
      %v4138 = vsel %vm1317, %v4137, %v4125
      %v4139 = vsel %vm1320, %v4138, %v4129
      %v4140 = vsel %vm604, %v1504, %v4133
      %v4144 = vrot.slane %v4136, 1
      %v4145 = vrot.slane %v4139, 1
      %v4146 = vrot.slane %v4140, 1
      %vm4150 = vcmask 1040384
      %v4151 = vsel %vm4150, %v4103, %v4144
      %v4152 = vsel %vm4150, %v4106, %v4145
      %v4153 = vsel %vm4150, %v4107, %v4146
      %v4157 = vrot.slane %v4152, 6
      %v4158 = vrot.slane %v4153, 4
      %v4159 = vsel %vm583, %v4151, %v4157
      %v4160 = vsel %vm560, %v4159, %v4158
      %vm4162 = vcmask 1043458
      %vm4163 = vmor %vm4162, %vm583
      %vm4164 = vcmask 521220
      %vm4165 = vmor %vm4164, %vm4163
      %4166 = vst.msk [vmem:[%s508] sm:$0x3f] %vm4165, %v4160
      %p4167 = scmp.lt.s32.totalorder %s22, 1
      %s4168 = scalar_select %p4167, %s22, 1
      %s4169 = smul.addr %s4168, 3
      %s4170 = smul.addr %s4169, 2
      %s4171 = scalar_lea.vmem %s11, %s4170
      // Predicated region
      $region72: #{predict_forward.2} parent=63 // pred_check
        %p4172 = pneg %p311
      $region73: #{predict_forward.2} parent=63 // pred_check_branch
        %4174 = sbr.rel (%p4172) target = $region75
      $region74: #{predict_forward.2} parent=63 // pred_region
        _
      $region75: #{predict_forward.2} parent=63 // pred_fallthru
        _
    $region64: #{predict_forward.2} parent=5 // pred_fallthru
      _
    %p4175 = scmp.le.s32.totalorder 2, %s17
    // Predicated region
    $region76: #{predict_forward.2} parent=5 // pred_check
      %p4176 = pneg %p4175
    $region77: #{predict_forward.2} parent=5 // pred_check_branch
      %4178 = sbr.rel (%p4176) target = $region79
    $region78: #{predict_forward.2} parent=5 // pred_region
      %s4179 = ssub.s32 %s17, 2
      // Predicated region
      $region80: #{predict_forward.2} parent=78 // pred_check
        %p4180 = pneg %p317
      $region81: #{predict_forward.2} parent=78 // pred_check_branch
        %4182 = sbr.rel (%p4180) target = $region83
      $region82: #{predict_forward.2} parent=78 // pred_region
        %p4183 = scmp.lt.s32.totalorder %s23, 1
        %s4184 = scalar_select %p4183, %s23, 1
        %s4185 = smul.addr %s4184, 3
        %s4186 = smul.addr %s4185, 2
        %s4187 = scalar_lea.vmem %s11, %s4186
      $region83: #{predict_forward.2} parent=78 // pred_fallthru
        _
    $region79: #{predict_forward.2} parent=5 // pred_fallthru
      _
  $region6: #{predict_forward.2} parent=0 // loop_footer
    %s21 = sadd.s32 1, %s17
  $region7: #{predict_forward.2} parent=0 // loop_footer_branch
    %16 = sbr.rel target = $region3
  $region8: #{predict_forward.2} parent=0 // loop_exit
    _

</llo_original>
